<compile_context>
chip_gen: v6e
topology: v6e:2x2x1
jax: 0.10.0
libtpu: 0.0.40
codegen_flags: <defaults>
</compile_context>

<pallas_src>
import jax
import jax.numpy as jnp
from jax import lax
from jax.experimental import pallas as pl
from jax.experimental.pallas import tpu as pltpu

# ----------------------------- model config ---------------------------------
IMG_SIZE = 32
PATCH = 8
IN_CHANS = 3
EMBED = 64
DEPTH = 2
HEADS = 4
HEAD_DIM = EMBED // HEADS
MLP_RATIO = 2.0
HIDDEN = int(EMBED * MLP_RATIO)
WINDOW = 2                       # window attention size
GLOBAL_ATTN_INDEXES = (1,)       # block 1 uses global attention
NECK = 32
NUM_CLASSES = 16
GRID = IMG_SIZE // PATCH         # 4x4 token grid per image
N_TOK = GRID * GRID              # 16 tokens per image
SCALE = HEAD_DIM ** -0.5
BLOCK_EPS = 1e-5                 # nn.LayerNorm default (transformer blocks)
NECK_EPS = 1e-6                  # timm LayerNorm2d default (neck)
NEG_INF = -1e9

LOG_NT = N_TOK.bit_length() - 1      # 4
LOG_GRID = GRID.bit_length() - 1     # 2

TARGET_IMGS_PER_BLOCK = 8            # ~128 token rows per grid step

_N_BLOCK_ARGS = 12                   # refs fed to the kernel per transformer block


# ----------------------------- in-kernel helpers -----------------------------
def _mm(x, w):
    """x @ w on the MXU: bf16 operands, f32 accumulation."""
    return jnp.dot(x.astype(jnp.bfloat16), w.astype(jnp.bfloat16),
                   preferred_element_type=jnp.float32)


def _mm_t(x, y):
    """x @ y.T (contract trailing dims of both): bf16 operands, f32 accum."""
    return lax.dot_general(x.astype(jnp.bfloat16), y.astype(jnp.bfloat16),
                           (((1,), (1,)), ((), ())),
                           preferred_element_type=jnp.float32)


def _layernorm(x, g, b, eps):
    """LayerNorm over the last dim, statistics kept in f32."""
    mean = jnp.mean(x, axis=-1, keepdims=True)
    xc = x - mean
    var = jnp.mean(xc * xc, axis=-1, keepdims=True)
    return xc * lax.rsqrt(var + eps) * g + b


def _erf(x):
    """Abramowitz & Stegun 7.1.26 erf approximation (max abs err ~1.5e-7).

    Built only from mul/add/div/exp/select so it lowers on every TPU gen;
    matches PyTorch's exact-erf nn.GELU to f32-level tolerance.
    """
    a1, a2, a3, a4, a5 = (0.254829592, -0.284496736, 1.421413741,
                          -1.453152027, 1.061405429)
    p = 0.3275911
    s = jnp.where(x < 0.0, -1.0, 1.0)
    ax = jnp.abs(x)
    t = 1.0 / (1.0 + p * ax)
    poly = t * (a1 + t * (a2 + t * (a3 + t * (a4 + t * a5))))
    return s * (1.0 - poly * jnp.exp(-ax * ax))


def _gelu_erf(x):
    return 0.5 * x * (1.0 + _erf(x * 0.7071067811865476))


# ----------------------------- the fused kernel ------------------------------
def _vit_sam_kernel(*refs):
    # ---- unpack refs (inputs ..., output last) ----
    xc_ref, pw_ref, pb_ref, pos_ref = refs[0:4]
    blocks = [refs[4 + i * _N_BLOCK_ARGS: 4 + (i + 1) * _N_BLOCK_ARGS]
              for i in range(DEPTH)]
    off = 4 + DEPTH * _N_BLOCK_ARGS
    (nc1w_ref, nln1g_ref, nln1b_ref, nc2w_ref, nln2g_ref, nln2b_ref,
     headw_ref, headb_ref) = refs[off:off + 8]
    out_ref = refs[off + 8]

    Mb = xc_ref.shape[0]                 # token rows in this grid step
    ipb = Mb // N_TOK                    # images in this grid step (static)

    # ---- attention masks, generated in-kernel (power-of-2 bit tricks only) ----
    # Row index r = img*16 + h*4 + w.  Same image <=> high bits (>=4) equal.
    # Same image AND same 2x2 window <=> all bits equal except h0 (bit 2) and
    # w0 (bit 0), i.e. (r & ~5) == (c & ~5).
    row = lax.broadcasted_iota(jnp.int32, (Mb, Mb), 0)
    col = lax.broadcasted_iota(jnp.int32, (Mb, Mb), 1)
    img_bits = ~(N_TOK - 1)
    win_bits = ~((WINDOW - 1) | ((WINDOW - 1) << LOG_GRID))
    same_img = jnp.bitwise_and(row, img_bits) == jnp.bitwise_and(col, img_bits)
    same_win = jnp.bitwise_and(row, win_bits) == jnp.bitwise_and(col, win_bits)
    mask_global = jnp.where(same_img, 0.0, NEG_INF).astype(jnp.float32)
    mask_window = jnp.where(same_win, 0.0, NEG_INF).astype(jnp.float32)

    # ---- patch embed (stride-PATCH conv as matmul) + absolute pos embed ----
    x = _mm(xc_ref[...], pw_ref[...]) + pb_ref[...]              # (Mb, EMBED)
    pos = pos_ref[...]                                           # (N_TOK, EMBED)
    x = x + jnp.concatenate([pos] * ipb, axis=0)

    # ---- transformer blocks (LayerScale / DropPath / dropout = identity) ----
    for i in range(DEPTH):
        (ln1g, ln1b, qkvw, qkvb, projw, projb,
         ln2g, ln2b, fc1w, fc1b, fc2w, fc2b) = blocks[i]

        if i in GLOBAL_ATTN_INDEXES:
            mask = mask_global if ipb > 1 else None   # no bias needed for 1 img
        else:
            mask = mask_window

        xn = _layernorm(x, ln1g[...], ln1b[...], BLOCK_EPS)
        # fused qkv: one (Mb,64)@(64,192) MXU push; columns = q|k|v, head-major
        qkv = _mm(xn, qkvw[...]) + qkvb[...]                     # (Mb, 3*EMBED)

        heads_out = []
        for h in range(HEADS):
            q = qkv[:, h * HEAD_DIM:(h + 1) * HEAD_DIM]
            k = qkv[:, EMBED + h * HEAD_DIM:EMBED + (h + 1) * HEAD_DIM]
            v = qkv[:, 2 * EMBED + h * HEAD_DIM:2 * EMBED + (h + 1) * HEAD_DIM]

            # masked attention == window / per-image global attention (exact:
            # the 4x4 grid divides WINDOW, so no padding path is needed)
            s = _mm_t(q * SCALE, k)                              # (Mb, Mb) f32
            if mask is not None:
                s = s + mask
            s = s - jnp.max(s, axis=-1, keepdims=True)
            p = jnp.exp(s)
            p = p * pl.reciprocal(jnp.sum(p, axis=-1, keepdims=True), approx=True)
            heads_out.append(_mm(p, v))                          # (Mb, HEAD_DIM)

        attn = jnp.concatenate(heads_out, axis=-1)               # (Mb, EMBED)
        x = x + _mm(attn, projw[...]) + projb[...]               # fused head merge

        xn2 = _layernorm(x, ln2g[...], ln2b[...], BLOCK_EPS)
        hmid = _mm(xn2, fc1w[...]) + fc1b[...]
        hmid = _gelu_erf(hmid)                                   # erf GELU == nn.GELU
        x = x + _mm(hmid, fc2w[...]) + fc2b[...]

    # ---- neck: 1x1 conv -> LN -> 3x3 conv (pad=1) -> LN, all in VMEM ----
    y = _mm(x, nc1w_ref[...])                                    # 1x1 conv, no bias
    y = _layernorm(y, nln1g_ref[...], nln1b_ref[...], NECK_EPS)

    # 3x3 taps via sublane rolls + zero masks; one (Mb, 9*NECK)@(9*NECK, NECK)
    ridx = lax.broadcasted_iota(jnp.int32, (Mb, NECK), 0)
    hi = jnp.bitwise_and(jnp.right_shift(ridx, LOG_GRID), GRID - 1)
    wi = jnp.bitwise_and(ridx, GRID - 1)
    taps = []
    for kh in range(3):
        for kw in range(3):
            dh, dw = kh - 1, kw - 1
            offset = dh * GRID + dw
            shifted = y if offset == 0 else pltpu.roll(y, (-offset) % Mb, axis=0)
            valid = ((hi + dh >= 0) & (hi + dh < GRID) &
                     (wi + dw >= 0) & (wi + dw < GRID))
            taps.append(jnp.where(valid, shifted, 0.0))
    y = _mm(jnp.concatenate(taps, axis=-1), nc2w_ref[...])       # (Mb, NECK)
    y = _layernorm(y, nln2g_ref[...], nln2b_ref[...], NECK_EPS)

    # ---- head: per-image average pool (tiny f32 matmul) + linear classifier ----
    prow = lax.broadcasted_iota(jnp.int32, (ipb, Mb), 0)
    pcol = lax.broadcasted_iota(jnp.int32, (ipb, Mb), 1)
    pool = jnp.where(jnp.right_shift(pcol, LOG_NT) == prow,
                     1.0 / N_TOK, 0.0).astype(jnp.float32)
    pooled = jnp.dot(pool, y, preferred_element_type=jnp.float32)    # (ipb, NECK)
    out_ref[...] = (jnp.dot(pooled, headw_ref[...],
                            preferred_element_type=jnp.float32) + headb_ref[...])


# ----------------------------- host-side packing ------------------------------
def _pack_inputs(x_nchw, params):
    """Trace-time reshapes of the input / parameters into kernel layouts."""
    B, C, H, W = x_nchw.shape
    gh, gw = H // PATCH, W // PATCH
    M = B * N_TOK

    # patch-embed im2col: rows ordered (b, gh, gw), cols ordered (c, ph, pw)
    xc = x_nchw.reshape(B, C, gh, PATCH, gw, PATCH)
    xc = xc.transpose(0, 2, 4, 1, 3, 5).reshape(M, C * PATCH * PATCH)

    patch_w = params["patch_w"].reshape(EMBED, C * PATCH * PATCH).T
    patch_b = params["patch_b"].reshape(1, EMBED)
    pos = params["pos_embed"].reshape(N_TOK, EMBED)       # broadcast in-kernel

    args = [xc, patch_w, patch_b, pos]
    for i in range(DEPTH):
        p = params["blocks"][i]
        args += [
            p["ln1_g"].reshape(1, EMBED), p["ln1_b"].reshape(1, EMBED),
            p["qkv_w"].T,                                  # (EMBED, 3*EMBED), cols q|k|v head-major
            p["qkv_b"].reshape(1, 3 * EMBED),
            p["proj_w"].T,                                 # (EMBED, EMBED) (in, out)
            p["proj_b"].reshape(1, EMBED),
            p["ln2_g"].reshape(1, EMBED), p["ln2_b"].reshape(1, EMBED),
            p["fc1_w"].T, p["fc1_b"].reshape(1, HIDDEN),
            p["fc2_w"].T, p["fc2_b"].reshape(1, EMBED),
        ]

    conv1_w = params["neck_conv1_w"].reshape(NECK, EMBED).T          # (EMBED, NECK)
    conv2_w = params["neck_conv2_w"].transpose(2, 3, 1, 0).reshape(9 * NECK, NECK)
    args += [
        conv1_w,
        params["neck_ln1_g"].reshape(1, NECK), params["neck_ln1_b"].reshape(1, NECK),
        conv2_w,
        params["neck_ln2_g"].reshape(1, NECK), params["neck_ln2_b"].reshape(1, NECK),
        params["head_w"].T,                                # (NECK, NUM_CLASSES)
        params["head_b"].reshape(1, NUM_CLASSES),
    ]
    return args


def _imgs_per_block(batch):
    """Largest divisor of the batch that keeps <= ~128 token rows per step."""
    best = 1
    for d in range(1, min(batch, TARGET_IMGS_PER_BLOCK) + 1):
        if batch % d == 0:
            best = d
    return best


@jax.jit
def forward(x_nchw, params):
    B = x_nchw.shape[0]
    ipb = _imgs_per_block(B)
    mb = ipb * N_TOK
    args = _pack_inputs(x_nchw, params)

    in_specs = [pl.BlockSpec((mb, IN_CHANS * PATCH * PATCH), lambda i: (i, 0))]
    # every parameter stays VMEM-resident across grid steps (constant block index)
    in_specs += [pl.BlockSpec(a.shape, lambda i: (0, 0)) for a in args[1:]]
    out_specs = pl.BlockSpec((ipb, NUM_CLASSES), lambda i: (i, 0))

    return pl.pallas_call(
        _vit_sam_kernel,
        out_shape=jax.ShapeDtypeStruct((B, NUM_CLASSES), jnp.float32),
        grid=(B // ipb,),
        in_specs=in_specs,
        out_specs=out_specs,
        compiler_params=pltpu.CompilerParams(
            dimension_semantics=("parallel",)),
    )(*args)


# ----------------------------- parameters (torch layouts) ---------------------
def init_params(key):
    keys = jax.random.split(key, 64)
    it = iter(keys)

    def rnd(shape, scale=0.02):
        return (scale * jax.random.normal(next(it), shape)).astype(jnp.float32)

    params = {
        "patch_w": rnd((EMBED, IN_CHANS, PATCH, PATCH)),
        "patch_b": rnd((EMBED,)),
        "pos_embed": rnd((1, GRID, GRID, EMBED)),
        "neck_conv1_w": rnd((NECK, EMBED, 1, 1)),
        "neck_ln1_g": jnp.ones((NECK,), jnp.float32),
        "neck_ln1_b": jnp.zeros((NECK,), jnp.float32),
        "neck_conv2_w": rnd((NECK, NECK, 3, 3)),
        "neck_ln2_g": jnp.ones((NECK,), jnp.float32),
        "neck_ln2_b": jnp.zeros((NECK,), jnp.float32),
        "head_w": rnd((NUM_CLASSES, NECK)),
        "head_b": jnp.zeros((NUM_CLASSES,), jnp.float32),
    }
    blocks = []
    for _ in range(DEPTH):
        blocks.append({
            "ln1_g": jnp.ones((EMBED,), jnp.float32),
            "ln1_b": jnp.zeros((EMBED,), jnp.float32),
            "qkv_w": rnd((3 * EMBED, EMBED)),
            "qkv_b": rnd((3 * EMBED,)),
            "proj_w": rnd((EMBED, EMBED)),
            "proj_b": rnd((EMBED,)),
            "ln2_g": jnp.ones((EMBED,), jnp.float32),
            "ln2_b": jnp.zeros((EMBED,), jnp.float32),
            "fc1_w": rnd((HIDDEN, EMBED)),
            "fc1_b": rnd((HIDDEN,)),
            "fc2_w": rnd((EMBED, HIDDEN)),
            "fc2_b": rnd((EMBED,)),
        })
    params["blocks"] = blocks
    return params


# ----------------------------- main -------------------------------------------
if __name__ == "__main__":
    key = jax.random.PRNGKey(0)
    pkey, xkey = jax.random.split(key)
    params = init_params(pkey)
    x = jax.random.normal(xkey, (2, IN_CHANS, IMG_SIZE, IMG_SIZE), jnp.float32)
    out = forward(x, params)
    out = jax.block_until_ready(out)
    assert out.shape == (2, NUM_CLASSES), out.shape
    assert bool(jnp.all(jnp.isfinite(out)))
    print("KERNEL_OK")
</pallas_src>

<mosaic_0001>
module attributes {stable_mosaic.version = 11 : i64} {
  func.func @_vit_sam_kernel(%arg0: i32, %arg1: memref<32x192xf32, #tpu.memory_space<vmem>>, %arg2: memref<192x64xf32, #tpu.memory_space<vmem>>, %arg3: memref<1x64xf32, #tpu.memory_space<vmem>>, %arg4: memref<16x64xf32, #tpu.memory_space<vmem>>, %arg5: memref<1x64xf32, #tpu.memory_space<vmem>>, %arg6: memref<1x64xf32, #tpu.memory_space<vmem>>, %arg7: memref<64x192xf32, #tpu.memory_space<vmem>>, %arg8: memref<1x192xf32, #tpu.memory_space<vmem>>, %arg9: memref<64x64xf32, #tpu.memory_space<vmem>>, %arg10: memref<1x64xf32, #tpu.memory_space<vmem>>, %arg11: memref<1x64xf32, #tpu.memory_space<vmem>>, %arg12: memref<1x64xf32, #tpu.memory_space<vmem>>, %arg13: memref<64x128xf32, #tpu.memory_space<vmem>>, %arg14: memref<1x128xf32, #tpu.memory_space<vmem>>, %arg15: memref<128x64xf32, #tpu.memory_space<vmem>>, %arg16: memref<1x64xf32, #tpu.memory_space<vmem>>, %arg17: memref<1x64xf32, #tpu.memory_space<vmem>>, %arg18: memref<1x64xf32, #tpu.memory_space<vmem>>, %arg19: memref<64x192xf32, #tpu.memory_space<vmem>>, %arg20: memref<1x192xf32, #tpu.memory_space<vmem>>, %arg21: memref<64x64xf32, #tpu.memory_space<vmem>>, %arg22: memref<1x64xf32, #tpu.memory_space<vmem>>, %arg23: memref<1x64xf32, #tpu.memory_space<vmem>>, %arg24: memref<1x64xf32, #tpu.memory_space<vmem>>, %arg25: memref<64x128xf32, #tpu.memory_space<vmem>>, %arg26: memref<1x128xf32, #tpu.memory_space<vmem>>, %arg27: memref<128x64xf32, #tpu.memory_space<vmem>>, %arg28: memref<1x64xf32, #tpu.memory_space<vmem>>, %arg29: memref<64x32xf32, #tpu.memory_space<vmem>>, %arg30: memref<1x32xf32, #tpu.memory_space<vmem>>, %arg31: memref<1x32xf32, #tpu.memory_space<vmem>>, %arg32: memref<288x32xf32, #tpu.memory_space<vmem>>, %arg33: memref<1x32xf32, #tpu.memory_space<vmem>>, %arg34: memref<1x32xf32, #tpu.memory_space<vmem>>, %arg35: memref<32x16xf32, #tpu.memory_space<vmem>>, %arg36: memref<1x16xf32, #tpu.memory_space<vmem>>, %arg37: memref<2x16xf32, #tpu.memory_space<vmem>>) attributes {dimension_semantics = [#tpu.dimension_semantics<parallel>], iteration_bounds = array<i64: 1>, scalar_prefetch = 0 : i64, scratch_operands = 0 : i64, tpu.core_type = #tpu.core_type<tc>, window_params = [{transform_indices = @transform_0, window_bounds = array<i64: 32, 192>}, {pipeline_mode = #tpu.pipeline_mode<synchronous>, transform_indices = @transform_1, window_bounds = array<i64: 192, 64>}, {pipeline_mode = #tpu.pipeline_mode<synchronous>, transform_indices = @transform_2, window_bounds = array<i64: 1, 64>}, {pipeline_mode = #tpu.pipeline_mode<synchronous>, transform_indices = @transform_3, window_bounds = array<i64: 16, 64>}, {pipeline_mode = #tpu.pipeline_mode<synchronous>, transform_indices = @transform_4, window_bounds = array<i64: 1, 64>}, {pipeline_mode = #tpu.pipeline_mode<synchronous>, transform_indices = @transform_5, window_bounds = array<i64: 1, 64>}, {pipeline_mode = #tpu.pipeline_mode<synchronous>, transform_indices = @transform_6, window_bounds = array<i64: 64, 192>}, {pipeline_mode = #tpu.pipeline_mode<synchronous>, transform_indices = @transform_7, window_bounds = array<i64: 1, 192>}, {pipeline_mode = #tpu.pipeline_mode<synchronous>, transform_indices = @transform_8, window_bounds = array<i64: 64, 64>}, {pipeline_mode = #tpu.pipeline_mode<synchronous>, transform_indices = @transform_9, window_bounds = array<i64: 1, 64>}, {pipeline_mode = #tpu.pipeline_mode<synchronous>, transform_indices = @transform_10, window_bounds = array<i64: 1, 64>}, {pipeline_mode = #tpu.pipeline_mode<synchronous>, transform_indices = @transform_11, window_bounds = array<i64: 1, 64>}, {pipeline_mode = #tpu.pipeline_mode<synchronous>, transform_indices = @transform_12, window_bounds = array<i64: 64, 128>}, {pipeline_mode = #tpu.pipeline_mode<synchronous>, transform_indices = @transform_13, window_bounds = array<i64: 1, 128>}, {pipeline_mode = #tpu.pipeline_mode<synchronous>, transform_indices = @transform_14, window_bounds = array<i64: 128, 64>}, {pipeline_mode = #tpu.pipeline_mode<synchronous>, transform_indices = @transform_15, window_bounds = array<i64: 1, 64>}, {pipeline_mode = #tpu.pipeline_mode<synchronous>, transform_indices = @transform_16, window_bounds = array<i64: 1, 64>}, {pipeline_mode = #tpu.pipeline_mode<synchronous>, transform_indices = @transform_17, window_bounds = array<i64: 1, 64>}, {pipeline_mode = #tpu.pipeline_mode<synchronous>, transform_indices = @transform_18, window_bounds = array<i64: 64, 192>}, {pipeline_mode = #tpu.pipeline_mode<synchronous>, transform_indices = @transform_19, window_bounds = array<i64: 1, 192>}, {pipeline_mode = #tpu.pipeline_mode<synchronous>, transform_indices = @transform_20, window_bounds = array<i64: 64, 64>}, {pipeline_mode = #tpu.pipeline_mode<synchronous>, transform_indices = @transform_21, window_bounds = array<i64: 1, 64>}, {pipeline_mode = #tpu.pipeline_mode<synchronous>, transform_indices = @transform_22, window_bounds = array<i64: 1, 64>}, {pipeline_mode = #tpu.pipeline_mode<synchronous>, transform_indices = @transform_23, window_bounds = array<i64: 1, 64>}, {pipeline_mode = #tpu.pipeline_mode<synchronous>, transform_indices = @transform_24, window_bounds = array<i64: 64, 128>}, {pipeline_mode = #tpu.pipeline_mode<synchronous>, transform_indices = @transform_25, window_bounds = array<i64: 1, 128>}, {pipeline_mode = #tpu.pipeline_mode<synchronous>, transform_indices = @transform_26, window_bounds = array<i64: 128, 64>}, {pipeline_mode = #tpu.pipeline_mode<synchronous>, transform_indices = @transform_27, window_bounds = array<i64: 1, 64>}, {pipeline_mode = #tpu.pipeline_mode<synchronous>, transform_indices = @transform_28, window_bounds = array<i64: 64, 32>}, {pipeline_mode = #tpu.pipeline_mode<synchronous>, transform_indices = @transform_29, window_bounds = array<i64: 1, 32>}, {pipeline_mode = #tpu.pipeline_mode<synchronous>, transform_indices = @transform_30, window_bounds = array<i64: 1, 32>}, {pipeline_mode = #tpu.pipeline_mode<synchronous>, transform_indices = @transform_31, window_bounds = array<i64: 288, 32>}, {pipeline_mode = #tpu.pipeline_mode<synchronous>, transform_indices = @transform_32, window_bounds = array<i64: 1, 32>}, {pipeline_mode = #tpu.pipeline_mode<synchronous>, transform_indices = @transform_33, window_bounds = array<i64: 1, 32>}, {pipeline_mode = #tpu.pipeline_mode<synchronous>, transform_indices = @transform_34, window_bounds = array<i64: 32, 16>}, {pipeline_mode = #tpu.pipeline_mode<synchronous>, transform_indices = @transform_35, window_bounds = array<i64: 1, 16>}, {transform_indices = @transform_36, window_bounds = array<i64: 2, 16>}]} {
    %0 = tpu.iota {dimensions = array<i32: 0>} : vector<32x32xi32>
    %1 = tpu.iota {dimensions = array<i32: 1>} : vector<32x32xi32>
    %c-16_i32 = arith.constant -16 : i32
    %2 = vector.broadcast %c-16_i32 : i32 to vector<32x32xi32>
    %3 = arith.andi %0, %2 : vector<32x32xi32>
    %c-16_i32_0 = arith.constant -16 : i32
    %4 = vector.broadcast %c-16_i32_0 : i32 to vector<32x32xi32>
    %5 = arith.andi %1, %4 : vector<32x32xi32>
    %6 = arith.cmpi eq, %3, %5 : vector<32x32xi32>
    %c-6_i32 = arith.constant -6 : i32
    %7 = vector.broadcast %c-6_i32 : i32 to vector<32x32xi32>
    %8 = arith.andi %0, %7 : vector<32x32xi32>
    %c-6_i32_1 = arith.constant -6 : i32
    %9 = vector.broadcast %c-6_i32_1 : i32 to vector<32x32xi32>
    %10 = arith.andi %1, %9 : vector<32x32xi32>
    %11 = arith.cmpi eq, %8, %10 : vector<32x32xi32>
    %cst = arith.constant 0.000000e+00 : f32
    %cst_2 = arith.constant -1.000000e+09 : f32
    %12 = vector.broadcast %cst : f32 to vector<32x32xf32>
    %13 = vector.broadcast %cst_2 : f32 to vector<32x32xf32>
    %14 = arith.select %6, %12, %13 : vector<32x32xi1>, vector<32x32xf32>
    %cst_3 = arith.constant 0.000000e+00 : f32
    %cst_4 = arith.constant -1.000000e+09 : f32
    %15 = vector.broadcast %cst_3 : f32 to vector<32x32xf32>
    %16 = vector.broadcast %cst_4 : f32 to vector<32x32xf32>
    %17 = arith.select %11, %15, %16 : vector<32x32xi1>, vector<32x32xf32>
    %c0 = arith.constant 0 : index
    %c0_5 = arith.constant 0 : index
    %18 = vector.load %arg1[%c0, %c0_5] : memref<32x192xf32, #tpu.memory_space<vmem>>, vector<32x192xf32>
    %c0_6 = arith.constant 0 : index
    %c0_7 = arith.constant 0 : index
    %19 = vector.load %arg2[%c0_6, %c0_7] : memref<192x64xf32, #tpu.memory_space<vmem>>, vector<192x64xf32>
    %20 = arith.truncf %18 : vector<32x192xf32> to vector<32x192xbf16>
    %21 = arith.truncf %19 : vector<192x64xf32> to vector<192x64xbf16>
    %cst_8 = arith.constant dense<0.000000e+00> : vector<32x64xf32>
    %22 = tpu.matmul %20, %21, %cst_8 {dimension_numbers = #tpu.dot_dimension_numbers<[1], [0], [0], [1], [0, 0, 1, 1], [], []>} : vector<32x192xbf16>, vector<192x64xbf16>, vector<32x64xf32> -> vector<32x64xf32>
    %c0_9 = arith.constant 0 : index
    %c0_10 = arith.constant 0 : index
    %23 = vector.load %arg3[%c0_9, %c0_10] : memref<1x64xf32, #tpu.memory_space<vmem>>, vector<1x64xf32>
    %24 = vector.broadcast %23 : vector<1x64xf32> to vector<32x64xf32>
    %25 = arith.addf %22, %24 : vector<32x64xf32>
    %c0_11 = arith.constant 0 : index
    %c0_12 = arith.constant 0 : index
    %26 = vector.load %arg4[%c0_11, %c0_12] : memref<16x64xf32, #tpu.memory_space<vmem>>, vector<16x64xf32>
    %27 = tpu.concatenate %26, %26 in 0 : vector<16x64xf32>, vector<16x64xf32> -> vector<32x64xf32>
    %28 = arith.addf %25, %27 : vector<32x64xf32>
    %c0_13 = arith.constant 0 : index
    %c0_14 = arith.constant 0 : index
    %29 = vector.load %arg5[%c0_13, %c0_14] : memref<1x64xf32, #tpu.memory_space<vmem>>, vector<1x64xf32>
    %c0_15 = arith.constant 0 : index
    %c0_16 = arith.constant 0 : index
    %30 = vector.load %arg6[%c0_15, %c0_16] : memref<1x64xf32, #tpu.memory_space<vmem>>, vector<1x64xf32>
    %cst_17 = arith.constant dense<0.000000e+00> : vector<32xf32>
    %31 = vector.multi_reduction <add>, %28, %cst_17 [1] : vector<32x64xf32> to vector<32xf32>
    %32 = vector.shape_cast %31 : vector<32xf32> to vector<32x1xf32>
    %cst_18 = arith.constant 6.400000e+01 : f32
    %33 = vector.broadcast %cst_18 : f32 to vector<32x1xf32>
    %34 = arith.divf %32, %33 : vector<32x1xf32>
    %35 = vector.broadcast %34 : vector<32x1xf32> to vector<32x64xf32>
    %36 = arith.subf %28, %35 : vector<32x64xf32>
    %37 = arith.mulf %36, %36 : vector<32x64xf32>
    %cst_19 = arith.constant dense<0.000000e+00> : vector<32xf32>
    %38 = vector.multi_reduction <add>, %37, %cst_19 [1] : vector<32x64xf32> to vector<32xf32>
    %39 = vector.shape_cast %38 : vector<32xf32> to vector<32x1xf32>
    %cst_20 = arith.constant 6.400000e+01 : f32
    %40 = vector.broadcast %cst_20 : f32 to vector<32x1xf32>
    %41 = arith.divf %39, %40 : vector<32x1xf32>
    %cst_21 = arith.constant 9.99999974E-6 : f32
    %42 = vector.broadcast %cst_21 : f32 to vector<32x1xf32>
    %43 = arith.addf %41, %42 : vector<32x1xf32>
    %44 = math.rsqrt %43 : vector<32x1xf32>
    %45 = vector.broadcast %44 : vector<32x1xf32> to vector<32x64xf32>
    %46 = arith.mulf %36, %45 : vector<32x64xf32>
    %47 = vector.broadcast %29 : vector<1x64xf32> to vector<32x64xf32>
    %48 = arith.mulf %46, %47 : vector<32x64xf32>
    %49 = vector.broadcast %30 : vector<1x64xf32> to vector<32x64xf32>
    %50 = arith.addf %48, %49 : vector<32x64xf32>
    %c0_22 = arith.constant 0 : index
    %c0_23 = arith.constant 0 : index
    %51 = vector.load %arg7[%c0_22, %c0_23] : memref<64x192xf32, #tpu.memory_space<vmem>>, vector<64x192xf32>
    %52 = arith.truncf %50 : vector<32x64xf32> to vector<32x64xbf16>
    %53 = arith.truncf %51 : vector<64x192xf32> to vector<64x192xbf16>
    %cst_24 = arith.constant dense<0.000000e+00> : vector<32x192xf32>
    %54 = tpu.matmul %52, %53, %cst_24 {dimension_numbers = #tpu.dot_dimension_numbers<[1], [0], [0], [1], [0, 0, 1, 1], [], []>} : vector<32x64xbf16>, vector<64x192xbf16>, vector<32x192xf32> -> vector<32x192xf32>
    %c0_25 = arith.constant 0 : index
    %c0_26 = arith.constant 0 : index
    %55 = vector.load %arg8[%c0_25, %c0_26] : memref<1x192xf32, #tpu.memory_space<vmem>>, vector<1x192xf32>
    %56 = vector.broadcast %55 : vector<1x192xf32> to vector<32x192xf32>
    %57 = arith.addf %54, %56 : vector<32x192xf32>
    %58 = vector.extract_strided_slice %57 {offsets = [0, 0], sizes = [32, 16], strides = [1, 1]} : vector<32x192xf32> to vector<32x16xf32>
    %59 = vector.extract_strided_slice %57 {offsets = [0, 64], sizes = [32, 16], strides = [1, 1]} : vector<32x192xf32> to vector<32x16xf32>
    %60 = vector.extract_strided_slice %57 {offsets = [0, 128], sizes = [32, 16], strides = [1, 1]} : vector<32x192xf32> to vector<32x16xf32>
    %cst_27 = arith.constant 2.500000e-01 : f32
    %61 = vector.broadcast %cst_27 : f32 to vector<32x16xf32>
    %62 = arith.mulf %58, %61 : vector<32x16xf32>
    %63 = arith.truncf %62 : vector<32x16xf32> to vector<32x16xbf16>
    %64 = arith.truncf %59 : vector<32x16xf32> to vector<32x16xbf16>
    %cst_28 = arith.constant dense<0.000000e+00> : vector<32x32xf32>
    %65 = tpu.matmul %63, %64, %cst_28 {dimension_numbers = #tpu.dot_dimension_numbers<[1], [1], [0], [0], [0, 0, 1, 0], [], []>} : vector<32x16xbf16>, vector<32x16xbf16>, vector<32x32xf32> -> vector<32x32xf32>
    %66 = arith.addf %65, %17 : vector<32x32xf32>
    %cst_29 = arith.constant dense<0xFF800000> : vector<32xf32>
    %67 = vector.multi_reduction <maximumf>, %66, %cst_29 [1] : vector<32x32xf32> to vector<32xf32>
    %68 = vector.shape_cast %67 : vector<32xf32> to vector<32x1xf32>
    %69 = vector.broadcast %68 : vector<32x1xf32> to vector<32x32xf32>
    %70 = arith.subf %66, %69 : vector<32x32xf32>
    %71 = math.exp %70 : vector<32x32xf32>
    %cst_30 = arith.constant dense<0.000000e+00> : vector<32xf32>
    %72 = vector.multi_reduction <add>, %71, %cst_30 [1] : vector<32x32xf32> to vector<32xf32>
    %73 = vector.shape_cast %72 : vector<32xf32> to vector<32x1xf32>
    %74 = tpu.reciprocal %73 {approx = true} : vector<32x1xf32> -> vector<32x1xf32>
    %75 = vector.broadcast %74 : vector<32x1xf32> to vector<32x32xf32>
    %76 = arith.mulf %71, %75 : vector<32x32xf32>
    %77 = arith.truncf %76 : vector<32x32xf32> to vector<32x32xbf16>
    %78 = arith.truncf %60 : vector<32x16xf32> to vector<32x16xbf16>
    %cst_31 = arith.constant dense<0.000000e+00> : vector<32x16xf32>
    %79 = tpu.matmul %77, %78, %cst_31 {dimension_numbers = #tpu.dot_dimension_numbers<[1], [0], [0], [1], [0, 0, 1, 1], [], []>} : vector<32x32xbf16>, vector<32x16xbf16>, vector<32x16xf32> -> vector<32x16xf32>
    %80 = vector.extract_strided_slice %57 {offsets = [0, 16], sizes = [32, 16], strides = [1, 1]} : vector<32x192xf32> to vector<32x16xf32>
    %81 = vector.extract_strided_slice %57 {offsets = [0, 80], sizes = [32, 16], strides = [1, 1]} : vector<32x192xf32> to vector<32x16xf32>
    %82 = vector.extract_strided_slice %57 {offsets = [0, 144], sizes = [32, 16], strides = [1, 1]} : vector<32x192xf32> to vector<32x16xf32>
    %cst_32 = arith.constant 2.500000e-01 : f32
    %83 = vector.broadcast %cst_32 : f32 to vector<32x16xf32>
    %84 = arith.mulf %80, %83 : vector<32x16xf32>
    %85 = arith.truncf %84 : vector<32x16xf32> to vector<32x16xbf16>
    %86 = arith.truncf %81 : vector<32x16xf32> to vector<32x16xbf16>
    %cst_33 = arith.constant dense<0.000000e+00> : vector<32x32xf32>
    %87 = tpu.matmul %85, %86, %cst_33 {dimension_numbers = #tpu.dot_dimension_numbers<[1], [1], [0], [0], [0, 0, 1, 0], [], []>} : vector<32x16xbf16>, vector<32x16xbf16>, vector<32x32xf32> -> vector<32x32xf32>
    %88 = arith.addf %87, %17 : vector<32x32xf32>
    %cst_34 = arith.constant dense<0xFF800000> : vector<32xf32>
    %89 = vector.multi_reduction <maximumf>, %88, %cst_34 [1] : vector<32x32xf32> to vector<32xf32>
    %90 = vector.shape_cast %89 : vector<32xf32> to vector<32x1xf32>
    %91 = vector.broadcast %90 : vector<32x1xf32> to vector<32x32xf32>
    %92 = arith.subf %88, %91 : vector<32x32xf32>
    %93 = math.exp %92 : vector<32x32xf32>
    %cst_35 = arith.constant dense<0.000000e+00> : vector<32xf32>
    %94 = vector.multi_reduction <add>, %93, %cst_35 [1] : vector<32x32xf32> to vector<32xf32>
    %95 = vector.shape_cast %94 : vector<32xf32> to vector<32x1xf32>
    %96 = tpu.reciprocal %95 {approx = true} : vector<32x1xf32> -> vector<32x1xf32>
    %97 = vector.broadcast %96 : vector<32x1xf32> to vector<32x32xf32>
    %98 = arith.mulf %93, %97 : vector<32x32xf32>
    %99 = arith.truncf %98 : vector<32x32xf32> to vector<32x32xbf16>
    %100 = arith.truncf %82 : vector<32x16xf32> to vector<32x16xbf16>
    %cst_36 = arith.constant dense<0.000000e+00> : vector<32x16xf32>
    %101 = tpu.matmul %99, %100, %cst_36 {dimension_numbers = #tpu.dot_dimension_numbers<[1], [0], [0], [1], [0, 0, 1, 1], [], []>} : vector<32x32xbf16>, vector<32x16xbf16>, vector<32x16xf32> -> vector<32x16xf32>
    %102 = vector.extract_strided_slice %57 {offsets = [0, 32], sizes = [32, 16], strides = [1, 1]} : vector<32x192xf32> to vector<32x16xf32>
    %103 = vector.extract_strided_slice %57 {offsets = [0, 96], sizes = [32, 16], strides = [1, 1]} : vector<32x192xf32> to vector<32x16xf32>
    %104 = vector.extract_strided_slice %57 {offsets = [0, 160], sizes = [32, 16], strides = [1, 1]} : vector<32x192xf32> to vector<32x16xf32>
    %cst_37 = arith.constant 2.500000e-01 : f32
    %105 = vector.broadcast %cst_37 : f32 to vector<32x16xf32>
    %106 = arith.mulf %102, %105 : vector<32x16xf32>
    %107 = arith.truncf %106 : vector<32x16xf32> to vector<32x16xbf16>
    %108 = arith.truncf %103 : vector<32x16xf32> to vector<32x16xbf16>
    %cst_38 = arith.constant dense<0.000000e+00> : vector<32x32xf32>
    %109 = tpu.matmul %107, %108, %cst_38 {dimension_numbers = #tpu.dot_dimension_numbers<[1], [1], [0], [0], [0, 0, 1, 0], [], []>} : vector<32x16xbf16>, vector<32x16xbf16>, vector<32x32xf32> -> vector<32x32xf32>
    %110 = arith.addf %109, %17 : vector<32x32xf32>
    %cst_39 = arith.constant dense<0xFF800000> : vector<32xf32>
    %111 = vector.multi_reduction <maximumf>, %110, %cst_39 [1] : vector<32x32xf32> to vector<32xf32>
    %112 = vector.shape_cast %111 : vector<32xf32> to vector<32x1xf32>
    %113 = vector.broadcast %112 : vector<32x1xf32> to vector<32x32xf32>
    %114 = arith.subf %110, %113 : vector<32x32xf32>
    %115 = math.exp %114 : vector<32x32xf32>
    %cst_40 = arith.constant dense<0.000000e+00> : vector<32xf32>
    %116 = vector.multi_reduction <add>, %115, %cst_40 [1] : vector<32x32xf32> to vector<32xf32>
    %117 = vector.shape_cast %116 : vector<32xf32> to vector<32x1xf32>
    %118 = tpu.reciprocal %117 {approx = true} : vector<32x1xf32> -> vector<32x1xf32>
    %119 = vector.broadcast %118 : vector<32x1xf32> to vector<32x32xf32>
    %120 = arith.mulf %115, %119 : vector<32x32xf32>
    %121 = arith.truncf %120 : vector<32x32xf32> to vector<32x32xbf16>
    %122 = arith.truncf %104 : vector<32x16xf32> to vector<32x16xbf16>
    %cst_41 = arith.constant dense<0.000000e+00> : vector<32x16xf32>
    %123 = tpu.matmul %121, %122, %cst_41 {dimension_numbers = #tpu.dot_dimension_numbers<[1], [0], [0], [1], [0, 0, 1, 1], [], []>} : vector<32x32xbf16>, vector<32x16xbf16>, vector<32x16xf32> -> vector<32x16xf32>
    %124 = vector.extract_strided_slice %57 {offsets = [0, 48], sizes = [32, 16], strides = [1, 1]} : vector<32x192xf32> to vector<32x16xf32>
    %125 = vector.extract_strided_slice %57 {offsets = [0, 112], sizes = [32, 16], strides = [1, 1]} : vector<32x192xf32> to vector<32x16xf32>
    %126 = vector.extract_strided_slice %57 {offsets = [0, 176], sizes = [32, 16], strides = [1, 1]} : vector<32x192xf32> to vector<32x16xf32>
    %cst_42 = arith.constant 2.500000e-01 : f32
    %127 = vector.broadcast %cst_42 : f32 to vector<32x16xf32>
    %128 = arith.mulf %124, %127 : vector<32x16xf32>
    %129 = arith.truncf %128 : vector<32x16xf32> to vector<32x16xbf16>
    %130 = arith.truncf %125 : vector<32x16xf32> to vector<32x16xbf16>
    %cst_43 = arith.constant dense<0.000000e+00> : vector<32x32xf32>
    %131 = tpu.matmul %129, %130, %cst_43 {dimension_numbers = #tpu.dot_dimension_numbers<[1], [1], [0], [0], [0, 0, 1, 0], [], []>} : vector<32x16xbf16>, vector<32x16xbf16>, vector<32x32xf32> -> vector<32x32xf32>
    %132 = arith.addf %131, %17 : vector<32x32xf32>
    %cst_44 = arith.constant dense<0xFF800000> : vector<32xf32>
    %133 = vector.multi_reduction <maximumf>, %132, %cst_44 [1] : vector<32x32xf32> to vector<32xf32>
    %134 = vector.shape_cast %133 : vector<32xf32> to vector<32x1xf32>
    %135 = vector.broadcast %134 : vector<32x1xf32> to vector<32x32xf32>
    %136 = arith.subf %132, %135 : vector<32x32xf32>
    %137 = math.exp %136 : vector<32x32xf32>
    %cst_45 = arith.constant dense<0.000000e+00> : vector<32xf32>
    %138 = vector.multi_reduction <add>, %137, %cst_45 [1] : vector<32x32xf32> to vector<32xf32>
    %139 = vector.shape_cast %138 : vector<32xf32> to vector<32x1xf32>
    %140 = tpu.reciprocal %139 {approx = true} : vector<32x1xf32> -> vector<32x1xf32>
    %141 = vector.broadcast %140 : vector<32x1xf32> to vector<32x32xf32>
    %142 = arith.mulf %137, %141 : vector<32x32xf32>
    %143 = arith.truncf %142 : vector<32x32xf32> to vector<32x32xbf16>
    %144 = arith.truncf %126 : vector<32x16xf32> to vector<32x16xbf16>
    %cst_46 = arith.constant dense<0.000000e+00> : vector<32x16xf32>
    %145 = tpu.matmul %143, %144, %cst_46 {dimension_numbers = #tpu.dot_dimension_numbers<[1], [0], [0], [1], [0, 0, 1, 1], [], []>} : vector<32x32xbf16>, vector<32x16xbf16>, vector<32x16xf32> -> vector<32x16xf32>
    %146 = tpu.concatenate %79, %101, %123, %145 in 1 : vector<32x16xf32>, vector<32x16xf32>, vector<32x16xf32>, vector<32x16xf32> -> vector<32x64xf32>
    %c0_47 = arith.constant 0 : index
    %c0_48 = arith.constant 0 : index
    %147 = vector.load %arg9[%c0_47, %c0_48] : memref<64x64xf32, #tpu.memory_space<vmem>>, vector<64x64xf32>
    %148 = arith.truncf %146 : vector<32x64xf32> to vector<32x64xbf16>
    %149 = arith.truncf %147 : vector<64x64xf32> to vector<64x64xbf16>
    %cst_49 = arith.constant dense<0.000000e+00> : vector<32x64xf32>
    %150 = tpu.matmul %148, %149, %cst_49 {dimension_numbers = #tpu.dot_dimension_numbers<[1], [0], [0], [1], [0, 0, 1, 1], [], []>} : vector<32x64xbf16>, vector<64x64xbf16>, vector<32x64xf32> -> vector<32x64xf32>
    %151 = arith.addf %28, %150 : vector<32x64xf32>
    %c0_50 = arith.constant 0 : index
    %c0_51 = arith.constant 0 : index
    %152 = vector.load %arg10[%c0_50, %c0_51] : memref<1x64xf32, #tpu.memory_space<vmem>>, vector<1x64xf32>
    %153 = vector.broadcast %152 : vector<1x64xf32> to vector<32x64xf32>
    %154 = arith.addf %151, %153 : vector<32x64xf32>
    %c0_52 = arith.constant 0 : index
    %c0_53 = arith.constant 0 : index
    %155 = vector.load %arg11[%c0_52, %c0_53] : memref<1x64xf32, #tpu.memory_space<vmem>>, vector<1x64xf32>
    %c0_54 = arith.constant 0 : index
    %c0_55 = arith.constant 0 : index
    %156 = vector.load %arg12[%c0_54, %c0_55] : memref<1x64xf32, #tpu.memory_space<vmem>>, vector<1x64xf32>
    %cst_56 = arith.constant dense<0.000000e+00> : vector<32xf32>
    %157 = vector.multi_reduction <add>, %154, %cst_56 [1] : vector<32x64xf32> to vector<32xf32>
    %158 = vector.shape_cast %157 : vector<32xf32> to vector<32x1xf32>
    %cst_57 = arith.constant 6.400000e+01 : f32
    %159 = vector.broadcast %cst_57 : f32 to vector<32x1xf32>
    %160 = arith.divf %158, %159 : vector<32x1xf32>
    %161 = vector.broadcast %160 : vector<32x1xf32> to vector<32x64xf32>
    %162 = arith.subf %154, %161 : vector<32x64xf32>
    %163 = arith.mulf %162, %162 : vector<32x64xf32>
    %cst_58 = arith.constant dense<0.000000e+00> : vector<32xf32>
    %164 = vector.multi_reduction <add>, %163, %cst_58 [1] : vector<32x64xf32> to vector<32xf32>
    %165 = vector.shape_cast %164 : vector<32xf32> to vector<32x1xf32>
    %cst_59 = arith.constant 6.400000e+01 : f32
    %166 = vector.broadcast %cst_59 : f32 to vector<32x1xf32>
    %167 = arith.divf %165, %166 : vector<32x1xf32>
    %cst_60 = arith.constant 9.99999974E-6 : f32
    %168 = vector.broadcast %cst_60 : f32 to vector<32x1xf32>
    %169 = arith.addf %167, %168 : vector<32x1xf32>
    %170 = math.rsqrt %169 : vector<32x1xf32>
    %171 = vector.broadcast %170 : vector<32x1xf32> to vector<32x64xf32>
    %172 = arith.mulf %162, %171 : vector<32x64xf32>
    %173 = vector.broadcast %155 : vector<1x64xf32> to vector<32x64xf32>
    %174 = arith.mulf %172, %173 : vector<32x64xf32>
    %175 = vector.broadcast %156 : vector<1x64xf32> to vector<32x64xf32>
    %176 = arith.addf %174, %175 : vector<32x64xf32>
    %c0_61 = arith.constant 0 : index
    %c0_62 = arith.constant 0 : index
    %177 = vector.load %arg13[%c0_61, %c0_62] : memref<64x128xf32, #tpu.memory_space<vmem>>, vector<64x128xf32>
    %178 = arith.truncf %176 : vector<32x64xf32> to vector<32x64xbf16>
    %179 = arith.truncf %177 : vector<64x128xf32> to vector<64x128xbf16>
    %cst_63 = arith.constant dense<0.000000e+00> : vector<32x128xf32>
    %180 = tpu.matmul %178, %179, %cst_63 {dimension_numbers = #tpu.dot_dimension_numbers<[1], [0], [0], [1], [0, 0, 1, 1], [], []>} : vector<32x64xbf16>, vector<64x128xbf16>, vector<32x128xf32> -> vector<32x128xf32>
    %c0_64 = arith.constant 0 : index
    %c0_65 = arith.constant 0 : index
    %181 = vector.load %arg14[%c0_64, %c0_65] : memref<1x128xf32, #tpu.memory_space<vmem>>, vector<1x128xf32>
    %182 = vector.broadcast %181 : vector<1x128xf32> to vector<32x128xf32>
    %183 = arith.addf %180, %182 : vector<32x128xf32>
    %cst_66 = arith.constant 5.000000e-01 : f32
    %184 = vector.broadcast %cst_66 : f32 to vector<32x128xf32>
    %185 = arith.mulf %184, %183 : vector<32x128xf32>
    %cst_67 = arith.constant 0.707106769 : f32
    %186 = vector.broadcast %cst_67 : f32 to vector<32x128xf32>
    %187 = arith.mulf %183, %186 : vector<32x128xf32>
    %cst_68 = arith.constant 0.000000e+00 : f32
    %188 = vector.broadcast %cst_68 : f32 to vector<32x128xf32>
    %189 = arith.cmpf olt, %187, %188 : vector<32x128xf32>
    %cst_69 = arith.constant -1.000000e+00 : f32
    %cst_70 = arith.constant 1.000000e+00 : f32
    %190 = vector.broadcast %cst_69 : f32 to vector<32x128xf32>
    %191 = vector.broadcast %cst_70 : f32 to vector<32x128xf32>
    %192 = arith.select %189, %190, %191 : vector<32x128xi1>, vector<32x128xf32>
    %193 = math.absf %187 : vector<32x128xf32>
    %cst_71 = arith.constant 0.327591091 : f32
    %194 = vector.broadcast %cst_71 : f32 to vector<32x128xf32>
    %195 = arith.mulf %194, %193 : vector<32x128xf32>
    %cst_72 = arith.constant 1.000000e+00 : f32
    %196 = vector.broadcast %cst_72 : f32 to vector<32x128xf32>
    %197 = arith.addf %196, %195 : vector<32x128xf32>
    %cst_73 = arith.constant 1.000000e+00 : f32
    %198 = vector.broadcast %cst_73 : f32 to vector<32x128xf32>
    %199 = arith.divf %198, %197 : vector<32x128xf32>
    %cst_74 = arith.constant 1.06140542 : f32
    %200 = vector.broadcast %cst_74 : f32 to vector<32x128xf32>
    %201 = arith.mulf %199, %200 : vector<32x128xf32>
    %cst_75 = arith.constant -1.45315206 : f32
    %202 = vector.broadcast %cst_75 : f32 to vector<32x128xf32>
    %203 = arith.addf %202, %201 : vector<32x128xf32>
    %204 = arith.mulf %199, %203 : vector<32x128xf32>
    %cst_76 = arith.constant 1.42141378 : f32
    %205 = vector.broadcast %cst_76 : f32 to vector<32x128xf32>
    %206 = arith.addf %205, %204 : vector<32x128xf32>
    %207 = arith.mulf %199, %206 : vector<32x128xf32>
    %cst_77 = arith.constant -0.284496725 : f32
    %208 = vector.broadcast %cst_77 : f32 to vector<32x128xf32>
    %209 = arith.addf %208, %207 : vector<32x128xf32>
    %210 = arith.mulf %199, %209 : vector<32x128xf32>
    %cst_78 = arith.constant 0.254829586 : f32
    %211 = vector.broadcast %cst_78 : f32 to vector<32x128xf32>
    %212 = arith.addf %211, %210 : vector<32x128xf32>
    %213 = arith.mulf %199, %212 : vector<32x128xf32>
    %cst_79 = arith.constant 0.000000e+00 : f32
    %214 = vector.broadcast %cst_79 : f32 to vector<32x128xf32>
    %215 = arith.subf %214, %193 : vector<32x128xf32>
    %216 = arith.mulf %215, %193 : vector<32x128xf32>
    %217 = math.exp %216 : vector<32x128xf32>
    %218 = arith.mulf %213, %217 : vector<32x128xf32>
    %cst_80 = arith.constant 1.000000e+00 : f32
    %219 = vector.broadcast %cst_80 : f32 to vector<32x128xf32>
    %220 = arith.subf %219, %218 : vector<32x128xf32>
    %221 = arith.mulf %192, %220 : vector<32x128xf32>
    %cst_81 = arith.constant 1.000000e+00 : f32
    %222 = vector.broadcast %cst_81 : f32 to vector<32x128xf32>
    %223 = arith.addf %222, %221 : vector<32x128xf32>
    %224 = arith.mulf %185, %223 : vector<32x128xf32>
    %c0_82 = arith.constant 0 : index
    %c0_83 = arith.constant 0 : index
    %225 = vector.load %arg15[%c0_82, %c0_83] : memref<128x64xf32, #tpu.memory_space<vmem>>, vector<128x64xf32>
    %226 = arith.truncf %224 : vector<32x128xf32> to vector<32x128xbf16>
    %227 = arith.truncf %225 : vector<128x64xf32> to vector<128x64xbf16>
    %cst_84 = arith.constant dense<0.000000e+00> : vector<32x64xf32>
    %228 = tpu.matmul %226, %227, %cst_84 {dimension_numbers = #tpu.dot_dimension_numbers<[1], [0], [0], [1], [0, 0, 1, 1], [], []>} : vector<32x128xbf16>, vector<128x64xbf16>, vector<32x64xf32> -> vector<32x64xf32>
    %229 = arith.addf %154, %228 : vector<32x64xf32>
    %c0_85 = arith.constant 0 : index
    %c0_86 = arith.constant 0 : index
    %230 = vector.load %arg16[%c0_85, %c0_86] : memref<1x64xf32, #tpu.memory_space<vmem>>, vector<1x64xf32>
    %231 = vector.broadcast %230 : vector<1x64xf32> to vector<32x64xf32>
    %232 = arith.addf %229, %231 : vector<32x64xf32>
    %c0_87 = arith.constant 0 : index
    %c0_88 = arith.constant 0 : index
    %233 = vector.load %arg17[%c0_87, %c0_88] : memref<1x64xf32, #tpu.memory_space<vmem>>, vector<1x64xf32>
    %c0_89 = arith.constant 0 : index
    %c0_90 = arith.constant 0 : index
    %234 = vector.load %arg18[%c0_89, %c0_90] : memref<1x64xf32, #tpu.memory_space<vmem>>, vector<1x64xf32>
    %cst_91 = arith.constant dense<0.000000e+00> : vector<32xf32>
    %235 = vector.multi_reduction <add>, %232, %cst_91 [1] : vector<32x64xf32> to vector<32xf32>
    %236 = vector.shape_cast %235 : vector<32xf32> to vector<32x1xf32>
    %cst_92 = arith.constant 6.400000e+01 : f32
    %237 = vector.broadcast %cst_92 : f32 to vector<32x1xf32>
    %238 = arith.divf %236, %237 : vector<32x1xf32>
    %239 = vector.broadcast %238 : vector<32x1xf32> to vector<32x64xf32>
    %240 = arith.subf %232, %239 : vector<32x64xf32>
    %241 = arith.mulf %240, %240 : vector<32x64xf32>
    %cst_93 = arith.constant dense<0.000000e+00> : vector<32xf32>
    %242 = vector.multi_reduction <add>, %241, %cst_93 [1] : vector<32x64xf32> to vector<32xf32>
    %243 = vector.shape_cast %242 : vector<32xf32> to vector<32x1xf32>
    %cst_94 = arith.constant 6.400000e+01 : f32
    %244 = vector.broadcast %cst_94 : f32 to vector<32x1xf32>
    %245 = arith.divf %243, %244 : vector<32x1xf32>
    %cst_95 = arith.constant 9.99999974E-6 : f32
    %246 = vector.broadcast %cst_95 : f32 to vector<32x1xf32>
    %247 = arith.addf %245, %246 : vector<32x1xf32>
    %248 = math.rsqrt %247 : vector<32x1xf32>
    %249 = vector.broadcast %248 : vector<32x1xf32> to vector<32x64xf32>
    %250 = arith.mulf %240, %249 : vector<32x64xf32>
    %251 = vector.broadcast %233 : vector<1x64xf32> to vector<32x64xf32>
    %252 = arith.mulf %250, %251 : vector<32x64xf32>
    %253 = vector.broadcast %234 : vector<1x64xf32> to vector<32x64xf32>
    %254 = arith.addf %252, %253 : vector<32x64xf32>
    %c0_96 = arith.constant 0 : index
    %c0_97 = arith.constant 0 : index
    %255 = vector.load %arg19[%c0_96, %c0_97] : memref<64x192xf32, #tpu.memory_space<vmem>>, vector<64x192xf32>
    %256 = arith.truncf %254 : vector<32x64xf32> to vector<32x64xbf16>
    %257 = arith.truncf %255 : vector<64x192xf32> to vector<64x192xbf16>
    %cst_98 = arith.constant dense<0.000000e+00> : vector<32x192xf32>
    %258 = tpu.matmul %256, %257, %cst_98 {dimension_numbers = #tpu.dot_dimension_numbers<[1], [0], [0], [1], [0, 0, 1, 1], [], []>} : vector<32x64xbf16>, vector<64x192xbf16>, vector<32x192xf32> -> vector<32x192xf32>
    %c0_99 = arith.constant 0 : index
    %c0_100 = arith.constant 0 : index
    %259 = vector.load %arg20[%c0_99, %c0_100] : memref<1x192xf32, #tpu.memory_space<vmem>>, vector<1x192xf32>
    %260 = vector.broadcast %259 : vector<1x192xf32> to vector<32x192xf32>
    %261 = arith.addf %258, %260 : vector<32x192xf32>
    %262 = vector.extract_strided_slice %261 {offsets = [0, 0], sizes = [32, 16], strides = [1, 1]} : vector<32x192xf32> to vector<32x16xf32>
    %263 = vector.extract_strided_slice %261 {offsets = [0, 64], sizes = [32, 16], strides = [1, 1]} : vector<32x192xf32> to vector<32x16xf32>
    %264 = vector.extract_strided_slice %261 {offsets = [0, 128], sizes = [32, 16], strides = [1, 1]} : vector<32x192xf32> to vector<32x16xf32>
    %cst_101 = arith.constant 2.500000e-01 : f32
    %265 = vector.broadcast %cst_101 : f32 to vector<32x16xf32>
    %266 = arith.mulf %262, %265 : vector<32x16xf32>
    %267 = arith.truncf %266 : vector<32x16xf32> to vector<32x16xbf16>
    %268 = arith.truncf %263 : vector<32x16xf32> to vector<32x16xbf16>
    %cst_102 = arith.constant dense<0.000000e+00> : vector<32x32xf32>
    %269 = tpu.matmul %267, %268, %cst_102 {dimension_numbers = #tpu.dot_dimension_numbers<[1], [1], [0], [0], [0, 0, 1, 0], [], []>} : vector<32x16xbf16>, vector<32x16xbf16>, vector<32x32xf32> -> vector<32x32xf32>
    %270 = arith.addf %269, %14 : vector<32x32xf32>
    %cst_103 = arith.constant dense<0xFF800000> : vector<32xf32>
    %271 = vector.multi_reduction <maximumf>, %270, %cst_103 [1] : vector<32x32xf32> to vector<32xf32>
    %272 = vector.shape_cast %271 : vector<32xf32> to vector<32x1xf32>
    %273 = vector.broadcast %272 : vector<32x1xf32> to vector<32x32xf32>
    %274 = arith.subf %270, %273 : vector<32x32xf32>
    %275 = math.exp %274 : vector<32x32xf32>
    %cst_104 = arith.constant dense<0.000000e+00> : vector<32xf32>
    %276 = vector.multi_reduction <add>, %275, %cst_104 [1] : vector<32x32xf32> to vector<32xf32>
    %277 = vector.shape_cast %276 : vector<32xf32> to vector<32x1xf32>
    %278 = tpu.reciprocal %277 {approx = true} : vector<32x1xf32> -> vector<32x1xf32>
    %279 = vector.broadcast %278 : vector<32x1xf32> to vector<32x32xf32>
    %280 = arith.mulf %275, %279 : vector<32x32xf32>
    %281 = arith.truncf %280 : vector<32x32xf32> to vector<32x32xbf16>
    %282 = arith.truncf %264 : vector<32x16xf32> to vector<32x16xbf16>
    %cst_105 = arith.constant dense<0.000000e+00> : vector<32x16xf32>
    %283 = tpu.matmul %281, %282, %cst_105 {dimension_numbers = #tpu.dot_dimension_numbers<[1], [0], [0], [1], [0, 0, 1, 1], [], []>} : vector<32x32xbf16>, vector<32x16xbf16>, vector<32x16xf32> -> vector<32x16xf32>
    %284 = vector.extract_strided_slice %261 {offsets = [0, 16], sizes = [32, 16], strides = [1, 1]} : vector<32x192xf32> to vector<32x16xf32>
    %285 = vector.extract_strided_slice %261 {offsets = [0, 80], sizes = [32, 16], strides = [1, 1]} : vector<32x192xf32> to vector<32x16xf32>
    %286 = vector.extract_strided_slice %261 {offsets = [0, 144], sizes = [32, 16], strides = [1, 1]} : vector<32x192xf32> to vector<32x16xf32>
    %cst_106 = arith.constant 2.500000e-01 : f32
    %287 = vector.broadcast %cst_106 : f32 to vector<32x16xf32>
    %288 = arith.mulf %284, %287 : vector<32x16xf32>
    %289 = arith.truncf %288 : vector<32x16xf32> to vector<32x16xbf16>
    %290 = arith.truncf %285 : vector<32x16xf32> to vector<32x16xbf16>
    %cst_107 = arith.constant dense<0.000000e+00> : vector<32x32xf32>
    %291 = tpu.matmul %289, %290, %cst_107 {dimension_numbers = #tpu.dot_dimension_numbers<[1], [1], [0], [0], [0, 0, 1, 0], [], []>} : vector<32x16xbf16>, vector<32x16xbf16>, vector<32x32xf32> -> vector<32x32xf32>
    %292 = arith.addf %291, %14 : vector<32x32xf32>
    %cst_108 = arith.constant dense<0xFF800000> : vector<32xf32>
    %293 = vector.multi_reduction <maximumf>, %292, %cst_108 [1] : vector<32x32xf32> to vector<32xf32>
    %294 = vector.shape_cast %293 : vector<32xf32> to vector<32x1xf32>
    %295 = vector.broadcast %294 : vector<32x1xf32> to vector<32x32xf32>
    %296 = arith.subf %292, %295 : vector<32x32xf32>
    %297 = math.exp %296 : vector<32x32xf32>
    %cst_109 = arith.constant dense<0.000000e+00> : vector<32xf32>
    %298 = vector.multi_reduction <add>, %297, %cst_109 [1] : vector<32x32xf32> to vector<32xf32>
    %299 = vector.shape_cast %298 : vector<32xf32> to vector<32x1xf32>
    %300 = tpu.reciprocal %299 {approx = true} : vector<32x1xf32> -> vector<32x1xf32>
    %301 = vector.broadcast %300 : vector<32x1xf32> to vector<32x32xf32>
    %302 = arith.mulf %297, %301 : vector<32x32xf32>
    %303 = arith.truncf %302 : vector<32x32xf32> to vector<32x32xbf16>
    %304 = arith.truncf %286 : vector<32x16xf32> to vector<32x16xbf16>
    %cst_110 = arith.constant dense<0.000000e+00> : vector<32x16xf32>
    %305 = tpu.matmul %303, %304, %cst_110 {dimension_numbers = #tpu.dot_dimension_numbers<[1], [0], [0], [1], [0, 0, 1, 1], [], []>} : vector<32x32xbf16>, vector<32x16xbf16>, vector<32x16xf32> -> vector<32x16xf32>
    %306 = vector.extract_strided_slice %261 {offsets = [0, 32], sizes = [32, 16], strides = [1, 1]} : vector<32x192xf32> to vector<32x16xf32>
    %307 = vector.extract_strided_slice %261 {offsets = [0, 96], sizes = [32, 16], strides = [1, 1]} : vector<32x192xf32> to vector<32x16xf32>
    %308 = vector.extract_strided_slice %261 {offsets = [0, 160], sizes = [32, 16], strides = [1, 1]} : vector<32x192xf32> to vector<32x16xf32>
    %cst_111 = arith.constant 2.500000e-01 : f32
    %309 = vector.broadcast %cst_111 : f32 to vector<32x16xf32>
    %310 = arith.mulf %306, %309 : vector<32x16xf32>
    %311 = arith.truncf %310 : vector<32x16xf32> to vector<32x16xbf16>
    %312 = arith.truncf %307 : vector<32x16xf32> to vector<32x16xbf16>
    %cst_112 = arith.constant dense<0.000000e+00> : vector<32x32xf32>
    %313 = tpu.matmul %311, %312, %cst_112 {dimension_numbers = #tpu.dot_dimension_numbers<[1], [1], [0], [0], [0, 0, 1, 0], [], []>} : vector<32x16xbf16>, vector<32x16xbf16>, vector<32x32xf32> -> vector<32x32xf32>
    %314 = arith.addf %313, %14 : vector<32x32xf32>
    %cst_113 = arith.constant dense<0xFF800000> : vector<32xf32>
    %315 = vector.multi_reduction <maximumf>, %314, %cst_113 [1] : vector<32x32xf32> to vector<32xf32>
    %316 = vector.shape_cast %315 : vector<32xf32> to vector<32x1xf32>
    %317 = vector.broadcast %316 : vector<32x1xf32> to vector<32x32xf32>
    %318 = arith.subf %314, %317 : vector<32x32xf32>
    %319 = math.exp %318 : vector<32x32xf32>
    %cst_114 = arith.constant dense<0.000000e+00> : vector<32xf32>
    %320 = vector.multi_reduction <add>, %319, %cst_114 [1] : vector<32x32xf32> to vector<32xf32>
    %321 = vector.shape_cast %320 : vector<32xf32> to vector<32x1xf32>
    %322 = tpu.reciprocal %321 {approx = true} : vector<32x1xf32> -> vector<32x1xf32>
    %323 = vector.broadcast %322 : vector<32x1xf32> to vector<32x32xf32>
    %324 = arith.mulf %319, %323 : vector<32x32xf32>
    %325 = arith.truncf %324 : vector<32x32xf32> to vector<32x32xbf16>
    %326 = arith.truncf %308 : vector<32x16xf32> to vector<32x16xbf16>
    %cst_115 = arith.constant dense<0.000000e+00> : vector<32x16xf32>
    %327 = tpu.matmul %325, %326, %cst_115 {dimension_numbers = #tpu.dot_dimension_numbers<[1], [0], [0], [1], [0, 0, 1, 1], [], []>} : vector<32x32xbf16>, vector<32x16xbf16>, vector<32x16xf32> -> vector<32x16xf32>
    %328 = vector.extract_strided_slice %261 {offsets = [0, 48], sizes = [32, 16], strides = [1, 1]} : vector<32x192xf32> to vector<32x16xf32>
    %329 = vector.extract_strided_slice %261 {offsets = [0, 112], sizes = [32, 16], strides = [1, 1]} : vector<32x192xf32> to vector<32x16xf32>
    %330 = vector.extract_strided_slice %261 {offsets = [0, 176], sizes = [32, 16], strides = [1, 1]} : vector<32x192xf32> to vector<32x16xf32>
    %cst_116 = arith.constant 2.500000e-01 : f32
    %331 = vector.broadcast %cst_116 : f32 to vector<32x16xf32>
    %332 = arith.mulf %328, %331 : vector<32x16xf32>
    %333 = arith.truncf %332 : vector<32x16xf32> to vector<32x16xbf16>
    %334 = arith.truncf %329 : vector<32x16xf32> to vector<32x16xbf16>
    %cst_117 = arith.constant dense<0.000000e+00> : vector<32x32xf32>
    %335 = tpu.matmul %333, %334, %cst_117 {dimension_numbers = #tpu.dot_dimension_numbers<[1], [1], [0], [0], [0, 0, 1, 0], [], []>} : vector<32x16xbf16>, vector<32x16xbf16>, vector<32x32xf32> -> vector<32x32xf32>
    %336 = arith.addf %335, %14 : vector<32x32xf32>
    %cst_118 = arith.constant dense<0xFF800000> : vector<32xf32>
    %337 = vector.multi_reduction <maximumf>, %336, %cst_118 [1] : vector<32x32xf32> to vector<32xf32>
    %338 = vector.shape_cast %337 : vector<32xf32> to vector<32x1xf32>
    %339 = vector.broadcast %338 : vector<32x1xf32> to vector<32x32xf32>
    %340 = arith.subf %336, %339 : vector<32x32xf32>
    %341 = math.exp %340 : vector<32x32xf32>
    %cst_119 = arith.constant dense<0.000000e+00> : vector<32xf32>
    %342 = vector.multi_reduction <add>, %341, %cst_119 [1] : vector<32x32xf32> to vector<32xf32>
    %343 = vector.shape_cast %342 : vector<32xf32> to vector<32x1xf32>
    %344 = tpu.reciprocal %343 {approx = true} : vector<32x1xf32> -> vector<32x1xf32>
    %345 = vector.broadcast %344 : vector<32x1xf32> to vector<32x32xf32>
    %346 = arith.mulf %341, %345 : vector<32x32xf32>
    %347 = arith.truncf %346 : vector<32x32xf32> to vector<32x32xbf16>
    %348 = arith.truncf %330 : vector<32x16xf32> to vector<32x16xbf16>
    %cst_120 = arith.constant dense<0.000000e+00> : vector<32x16xf32>
    %349 = tpu.matmul %347, %348, %cst_120 {dimension_numbers = #tpu.dot_dimension_numbers<[1], [0], [0], [1], [0, 0, 1, 1], [], []>} : vector<32x32xbf16>, vector<32x16xbf16>, vector<32x16xf32> -> vector<32x16xf32>
    %350 = tpu.concatenate %283, %305, %327, %349 in 1 : vector<32x16xf32>, vector<32x16xf32>, vector<32x16xf32>, vector<32x16xf32> -> vector<32x64xf32>
    %c0_121 = arith.constant 0 : index
    %c0_122 = arith.constant 0 : index
    %351 = vector.load %arg21[%c0_121, %c0_122] : memref<64x64xf32, #tpu.memory_space<vmem>>, vector<64x64xf32>
    %352 = arith.truncf %350 : vector<32x64xf32> to vector<32x64xbf16>
    %353 = arith.truncf %351 : vector<64x64xf32> to vector<64x64xbf16>
    %cst_123 = arith.constant dense<0.000000e+00> : vector<32x64xf32>
    %354 = tpu.matmul %352, %353, %cst_123 {dimension_numbers = #tpu.dot_dimension_numbers<[1], [0], [0], [1], [0, 0, 1, 1], [], []>} : vector<32x64xbf16>, vector<64x64xbf16>, vector<32x64xf32> -> vector<32x64xf32>
    %355 = arith.addf %232, %354 : vector<32x64xf32>
    %c0_124 = arith.constant 0 : index
    %c0_125 = arith.constant 0 : index
    %356 = vector.load %arg22[%c0_124, %c0_125] : memref<1x64xf32, #tpu.memory_space<vmem>>, vector<1x64xf32>
    %357 = vector.broadcast %356 : vector<1x64xf32> to vector<32x64xf32>
    %358 = arith.addf %355, %357 : vector<32x64xf32>
    %c0_126 = arith.constant 0 : index
    %c0_127 = arith.constant 0 : index
    %359 = vector.load %arg23[%c0_126, %c0_127] : memref<1x64xf32, #tpu.memory_space<vmem>>, vector<1x64xf32>
    %c0_128 = arith.constant 0 : index
    %c0_129 = arith.constant 0 : index
    %360 = vector.load %arg24[%c0_128, %c0_129] : memref<1x64xf32, #tpu.memory_space<vmem>>, vector<1x64xf32>
    %cst_130 = arith.constant dense<0.000000e+00> : vector<32xf32>
    %361 = vector.multi_reduction <add>, %358, %cst_130 [1] : vector<32x64xf32> to vector<32xf32>
    %362 = vector.shape_cast %361 : vector<32xf32> to vector<32x1xf32>
    %cst_131 = arith.constant 6.400000e+01 : f32
    %363 = vector.broadcast %cst_131 : f32 to vector<32x1xf32>
    %364 = arith.divf %362, %363 : vector<32x1xf32>
    %365 = vector.broadcast %364 : vector<32x1xf32> to vector<32x64xf32>
    %366 = arith.subf %358, %365 : vector<32x64xf32>
    %367 = arith.mulf %366, %366 : vector<32x64xf32>
    %cst_132 = arith.constant dense<0.000000e+00> : vector<32xf32>
    %368 = vector.multi_reduction <add>, %367, %cst_132 [1] : vector<32x64xf32> to vector<32xf32>
    %369 = vector.shape_cast %368 : vector<32xf32> to vector<32x1xf32>
    %cst_133 = arith.constant 6.400000e+01 : f32
    %370 = vector.broadcast %cst_133 : f32 to vector<32x1xf32>
    %371 = arith.divf %369, %370 : vector<32x1xf32>
    %cst_134 = arith.constant 9.99999974E-6 : f32
    %372 = vector.broadcast %cst_134 : f32 to vector<32x1xf32>
    %373 = arith.addf %371, %372 : vector<32x1xf32>
    %374 = math.rsqrt %373 : vector<32x1xf32>
    %375 = vector.broadcast %374 : vector<32x1xf32> to vector<32x64xf32>
    %376 = arith.mulf %366, %375 : vector<32x64xf32>
    %377 = vector.broadcast %359 : vector<1x64xf32> to vector<32x64xf32>
    %378 = arith.mulf %376, %377 : vector<32x64xf32>
    %379 = vector.broadcast %360 : vector<1x64xf32> to vector<32x64xf32>
    %380 = arith.addf %378, %379 : vector<32x64xf32>
    %c0_135 = arith.constant 0 : index
    %c0_136 = arith.constant 0 : index
    %381 = vector.load %arg25[%c0_135, %c0_136] : memref<64x128xf32, #tpu.memory_space<vmem>>, vector<64x128xf32>
    %382 = arith.truncf %380 : vector<32x64xf32> to vector<32x64xbf16>
    %383 = arith.truncf %381 : vector<64x128xf32> to vector<64x128xbf16>
    %cst_137 = arith.constant dense<0.000000e+00> : vector<32x128xf32>
    %384 = tpu.matmul %382, %383, %cst_137 {dimension_numbers = #tpu.dot_dimension_numbers<[1], [0], [0], [1], [0, 0, 1, 1], [], []>} : vector<32x64xbf16>, vector<64x128xbf16>, vector<32x128xf32> -> vector<32x128xf32>
    %c0_138 = arith.constant 0 : index
    %c0_139 = arith.constant 0 : index
    %385 = vector.load %arg26[%c0_138, %c0_139] : memref<1x128xf32, #tpu.memory_space<vmem>>, vector<1x128xf32>
    %386 = vector.broadcast %385 : vector<1x128xf32> to vector<32x128xf32>
    %387 = arith.addf %384, %386 : vector<32x128xf32>
    %cst_140 = arith.constant 5.000000e-01 : f32
    %388 = vector.broadcast %cst_140 : f32 to vector<32x128xf32>
    %389 = arith.mulf %388, %387 : vector<32x128xf32>
    %cst_141 = arith.constant 0.707106769 : f32
    %390 = vector.broadcast %cst_141 : f32 to vector<32x128xf32>
    %391 = arith.mulf %387, %390 : vector<32x128xf32>
    %cst_142 = arith.constant 0.000000e+00 : f32
    %392 = vector.broadcast %cst_142 : f32 to vector<32x128xf32>
    %393 = arith.cmpf olt, %391, %392 : vector<32x128xf32>
    %cst_143 = arith.constant -1.000000e+00 : f32
    %cst_144 = arith.constant 1.000000e+00 : f32
    %394 = vector.broadcast %cst_143 : f32 to vector<32x128xf32>
    %395 = vector.broadcast %cst_144 : f32 to vector<32x128xf32>
    %396 = arith.select %393, %394, %395 : vector<32x128xi1>, vector<32x128xf32>
    %397 = math.absf %391 : vector<32x128xf32>
    %cst_145 = arith.constant 0.327591091 : f32
    %398 = vector.broadcast %cst_145 : f32 to vector<32x128xf32>
    %399 = arith.mulf %398, %397 : vector<32x128xf32>
    %cst_146 = arith.constant 1.000000e+00 : f32
    %400 = vector.broadcast %cst_146 : f32 to vector<32x128xf32>
    %401 = arith.addf %400, %399 : vector<32x128xf32>
    %cst_147 = arith.constant 1.000000e+00 : f32
    %402 = vector.broadcast %cst_147 : f32 to vector<32x128xf32>
    %403 = arith.divf %402, %401 : vector<32x128xf32>
    %cst_148 = arith.constant 1.06140542 : f32
    %404 = vector.broadcast %cst_148 : f32 to vector<32x128xf32>
    %405 = arith.mulf %403, %404 : vector<32x128xf32>
    %cst_149 = arith.constant -1.45315206 : f32
    %406 = vector.broadcast %cst_149 : f32 to vector<32x128xf32>
    %407 = arith.addf %406, %405 : vector<32x128xf32>
    %408 = arith.mulf %403, %407 : vector<32x128xf32>
    %cst_150 = arith.constant 1.42141378 : f32
    %409 = vector.broadcast %cst_150 : f32 to vector<32x128xf32>
    %410 = arith.addf %409, %408 : vector<32x128xf32>
    %411 = arith.mulf %403, %410 : vector<32x128xf32>
    %cst_151 = arith.constant -0.284496725 : f32
    %412 = vector.broadcast %cst_151 : f32 to vector<32x128xf32>
    %413 = arith.addf %412, %411 : vector<32x128xf32>
    %414 = arith.mulf %403, %413 : vector<32x128xf32>
    %cst_152 = arith.constant 0.254829586 : f32
    %415 = vector.broadcast %cst_152 : f32 to vector<32x128xf32>
    %416 = arith.addf %415, %414 : vector<32x128xf32>
    %417 = arith.mulf %403, %416 : vector<32x128xf32>
    %cst_153 = arith.constant 0.000000e+00 : f32
    %418 = vector.broadcast %cst_153 : f32 to vector<32x128xf32>
    %419 = arith.subf %418, %397 : vector<32x128xf32>
    %420 = arith.mulf %419, %397 : vector<32x128xf32>
    %421 = math.exp %420 : vector<32x128xf32>
    %422 = arith.mulf %417, %421 : vector<32x128xf32>
    %cst_154 = arith.constant 1.000000e+00 : f32
    %423 = vector.broadcast %cst_154 : f32 to vector<32x128xf32>
    %424 = arith.subf %423, %422 : vector<32x128xf32>
    %425 = arith.mulf %396, %424 : vector<32x128xf32>
    %cst_155 = arith.constant 1.000000e+00 : f32
    %426 = vector.broadcast %cst_155 : f32 to vector<32x128xf32>
    %427 = arith.addf %426, %425 : vector<32x128xf32>
    %428 = arith.mulf %389, %427 : vector<32x128xf32>
    %c0_156 = arith.constant 0 : index
    %c0_157 = arith.constant 0 : index
    %429 = vector.load %arg27[%c0_156, %c0_157] : memref<128x64xf32, #tpu.memory_space<vmem>>, vector<128x64xf32>
    %430 = arith.truncf %428 : vector<32x128xf32> to vector<32x128xbf16>
    %431 = arith.truncf %429 : vector<128x64xf32> to vector<128x64xbf16>
    %cst_158 = arith.constant dense<0.000000e+00> : vector<32x64xf32>
    %432 = tpu.matmul %430, %431, %cst_158 {dimension_numbers = #tpu.dot_dimension_numbers<[1], [0], [0], [1], [0, 0, 1, 1], [], []>} : vector<32x128xbf16>, vector<128x64xbf16>, vector<32x64xf32> -> vector<32x64xf32>
    %433 = arith.addf %358, %432 : vector<32x64xf32>
    %c0_159 = arith.constant 0 : index
    %c0_160 = arith.constant 0 : index
    %434 = vector.load %arg28[%c0_159, %c0_160] : memref<1x64xf32, #tpu.memory_space<vmem>>, vector<1x64xf32>
    %435 = vector.broadcast %434 : vector<1x64xf32> to vector<32x64xf32>
    %436 = arith.addf %433, %435 : vector<32x64xf32>
    %c0_161 = arith.constant 0 : index
    %c0_162 = arith.constant 0 : index
    %437 = vector.load %arg29[%c0_161, %c0_162] : memref<64x32xf32, #tpu.memory_space<vmem>>, vector<64x32xf32>
    %438 = arith.truncf %436 : vector<32x64xf32> to vector<32x64xbf16>
    %439 = arith.truncf %437 : vector<64x32xf32> to vector<64x32xbf16>
    %cst_163 = arith.constant dense<0.000000e+00> : vector<32x32xf32>
    %440 = tpu.matmul %438, %439, %cst_163 {dimension_numbers = #tpu.dot_dimension_numbers<[1], [0], [0], [1], [0, 0, 1, 1], [], []>} : vector<32x64xbf16>, vector<64x32xbf16>, vector<32x32xf32> -> vector<32x32xf32>
    %c0_164 = arith.constant 0 : index
    %c0_165 = arith.constant 0 : index
    %441 = vector.load %arg30[%c0_164, %c0_165] : memref<1x32xf32, #tpu.memory_space<vmem>>, vector<1x32xf32>
    %c0_166 = arith.constant 0 : index
    %c0_167 = arith.constant 0 : index
    %442 = vector.load %arg31[%c0_166, %c0_167] : memref<1x32xf32, #tpu.memory_space<vmem>>, vector<1x32xf32>
    %cst_168 = arith.constant dense<0.000000e+00> : vector<32xf32>
    %443 = vector.multi_reduction <add>, %440, %cst_168 [1] : vector<32x32xf32> to vector<32xf32>
    %444 = vector.shape_cast %443 : vector<32xf32> to vector<32x1xf32>
    %cst_169 = arith.constant 3.200000e+01 : f32
    %445 = vector.broadcast %cst_169 : f32 to vector<32x1xf32>
    %446 = arith.divf %444, %445 : vector<32x1xf32>
    %447 = vector.broadcast %446 : vector<32x1xf32> to vector<32x32xf32>
    %448 = arith.subf %440, %447 : vector<32x32xf32>
    %449 = arith.mulf %448, %448 : vector<32x32xf32>
    %cst_170 = arith.constant dense<0.000000e+00> : vector<32xf32>
    %450 = vector.multi_reduction <add>, %449, %cst_170 [1] : vector<32x32xf32> to vector<32xf32>
    %451 = vector.shape_cast %450 : vector<32xf32> to vector<32x1xf32>
    %cst_171 = arith.constant 3.200000e+01 : f32
    %452 = vector.broadcast %cst_171 : f32 to vector<32x1xf32>
    %453 = arith.divf %451, %452 : vector<32x1xf32>
    %cst_172 = arith.constant 9.99999997E-7 : f32
    %454 = vector.broadcast %cst_172 : f32 to vector<32x1xf32>
    %455 = arith.addf %453, %454 : vector<32x1xf32>
    %456 = math.rsqrt %455 : vector<32x1xf32>
    %457 = vector.broadcast %456 : vector<32x1xf32> to vector<32x32xf32>
    %458 = arith.mulf %448, %457 : vector<32x32xf32>
    %459 = vector.broadcast %441 : vector<1x32xf32> to vector<32x32xf32>
    %460 = arith.mulf %458, %459 : vector<32x32xf32>
    %461 = vector.broadcast %442 : vector<1x32xf32> to vector<32x32xf32>
    %462 = arith.addf %460, %461 : vector<32x32xf32>
    %463 = tpu.iota {dimensions = array<i32: 0>} : vector<32x32xi32>
    %c2_i32 = arith.constant 2 : i32
    %464 = vector.broadcast %c2_i32 : i32 to vector<32x32xi32>
    %465 = arith.shrsi %463, %464 : vector<32x32xi32>
    %c3_i32 = arith.constant 3 : i32
    %466 = vector.broadcast %c3_i32 : i32 to vector<32x32xi32>
    %467 = arith.andi %465, %466 : vector<32x32xi32>
    %c3_i32_173 = arith.constant 3 : i32
    %468 = vector.broadcast %c3_i32_173 : i32 to vector<32x32xi32>
    %469 = arith.andi %463, %468 : vector<32x32xi32>
    %c5_i32 = arith.constant 5 : i32
    %470 = tpu.dynamic_rotate %462 by %c5_i32 dim 0 : vector<32x32xf32>, i32 -> vector<32x32xf32>
    %c-1_i32 = arith.constant -1 : i32
    %471 = vector.broadcast %c-1_i32 : i32 to vector<32x32xi32>
    %472 = arith.addi %467, %471 : vector<32x32xi32>
    %c0_i32 = arith.constant 0 : i32
    %473 = vector.broadcast %c0_i32 : i32 to vector<32x32xi32>
    %474 = arith.cmpi sge, %472, %473 : vector<32x32xi32>
    %c-1_i32_174 = arith.constant -1 : i32
    %475 = vector.broadcast %c-1_i32_174 : i32 to vector<32x32xi32>
    %476 = arith.addi %467, %475 : vector<32x32xi32>
    %c4_i32 = arith.constant 4 : i32
    %477 = vector.broadcast %c4_i32 : i32 to vector<32x32xi32>
    %478 = arith.cmpi slt, %476, %477 : vector<32x32xi32>
    %479 = arith.andi %474, %478 : vector<32x32xi1>
    %c-1_i32_175 = arith.constant -1 : i32
    %480 = vector.broadcast %c-1_i32_175 : i32 to vector<32x32xi32>
    %481 = arith.addi %469, %480 : vector<32x32xi32>
    %c0_i32_176 = arith.constant 0 : i32
    %482 = vector.broadcast %c0_i32_176 : i32 to vector<32x32xi32>
    %483 = arith.cmpi sge, %481, %482 : vector<32x32xi32>
    %484 = arith.andi %479, %483 : vector<32x32xi1>
    %c-1_i32_177 = arith.constant -1 : i32
    %485 = vector.broadcast %c-1_i32_177 : i32 to vector<32x32xi32>
    %486 = arith.addi %469, %485 : vector<32x32xi32>
    %c4_i32_178 = arith.constant 4 : i32
    %487 = vector.broadcast %c4_i32_178 : i32 to vector<32x32xi32>
    %488 = arith.cmpi slt, %486, %487 : vector<32x32xi32>
    %489 = arith.andi %484, %488 : vector<32x32xi1>
    %cst_179 = arith.constant 0.000000e+00 : f32
    %490 = vector.broadcast %cst_179 : f32 to vector<32x32xf32>
    %491 = arith.select %489, %470, %490 : vector<32x32xi1>, vector<32x32xf32>
    %c4_i32_180 = arith.constant 4 : i32
    %492 = tpu.dynamic_rotate %462 by %c4_i32_180 dim 0 : vector<32x32xf32>, i32 -> vector<32x32xf32>
    %c-1_i32_181 = arith.constant -1 : i32
    %493 = vector.broadcast %c-1_i32_181 : i32 to vector<32x32xi32>
    %494 = arith.addi %467, %493 : vector<32x32xi32>
    %c0_i32_182 = arith.constant 0 : i32
    %495 = vector.broadcast %c0_i32_182 : i32 to vector<32x32xi32>
    %496 = arith.cmpi sge, %494, %495 : vector<32x32xi32>
    %c-1_i32_183 = arith.constant -1 : i32
    %497 = vector.broadcast %c-1_i32_183 : i32 to vector<32x32xi32>
    %498 = arith.addi %467, %497 : vector<32x32xi32>
    %c4_i32_184 = arith.constant 4 : i32
    %499 = vector.broadcast %c4_i32_184 : i32 to vector<32x32xi32>
    %500 = arith.cmpi slt, %498, %499 : vector<32x32xi32>
    %501 = arith.andi %496, %500 : vector<32x32xi1>
    %c0_i32_185 = arith.constant 0 : i32
    %502 = vector.broadcast %c0_i32_185 : i32 to vector<32x32xi32>
    %503 = arith.addi %469, %502 : vector<32x32xi32>
    %c0_i32_186 = arith.constant 0 : i32
    %504 = vector.broadcast %c0_i32_186 : i32 to vector<32x32xi32>
    %505 = arith.cmpi sge, %503, %504 : vector<32x32xi32>
    %506 = arith.andi %501, %505 : vector<32x32xi1>
    %c0_i32_187 = arith.constant 0 : i32
    %507 = vector.broadcast %c0_i32_187 : i32 to vector<32x32xi32>
    %508 = arith.addi %469, %507 : vector<32x32xi32>
    %c4_i32_188 = arith.constant 4 : i32
    %509 = vector.broadcast %c4_i32_188 : i32 to vector<32x32xi32>
    %510 = arith.cmpi slt, %508, %509 : vector<32x32xi32>
    %511 = arith.andi %506, %510 : vector<32x32xi1>
    %cst_189 = arith.constant 0.000000e+00 : f32
    %512 = vector.broadcast %cst_189 : f32 to vector<32x32xf32>
    %513 = arith.select %511, %492, %512 : vector<32x32xi1>, vector<32x32xf32>
    %c3_i32_190 = arith.constant 3 : i32
    %514 = tpu.dynamic_rotate %462 by %c3_i32_190 dim 0 : vector<32x32xf32>, i32 -> vector<32x32xf32>
    %c-1_i32_191 = arith.constant -1 : i32
    %515 = vector.broadcast %c-1_i32_191 : i32 to vector<32x32xi32>
    %516 = arith.addi %467, %515 : vector<32x32xi32>
    %c0_i32_192 = arith.constant 0 : i32
    %517 = vector.broadcast %c0_i32_192 : i32 to vector<32x32xi32>
    %518 = arith.cmpi sge, %516, %517 : vector<32x32xi32>
    %c-1_i32_193 = arith.constant -1 : i32
    %519 = vector.broadcast %c-1_i32_193 : i32 to vector<32x32xi32>
    %520 = arith.addi %467, %519 : vector<32x32xi32>
    %c4_i32_194 = arith.constant 4 : i32
    %521 = vector.broadcast %c4_i32_194 : i32 to vector<32x32xi32>
    %522 = arith.cmpi slt, %520, %521 : vector<32x32xi32>
    %523 = arith.andi %518, %522 : vector<32x32xi1>
    %c1_i32 = arith.constant 1 : i32
    %524 = vector.broadcast %c1_i32 : i32 to vector<32x32xi32>
    %525 = arith.addi %469, %524 : vector<32x32xi32>
    %c0_i32_195 = arith.constant 0 : i32
    %526 = vector.broadcast %c0_i32_195 : i32 to vector<32x32xi32>
    %527 = arith.cmpi sge, %525, %526 : vector<32x32xi32>
    %528 = arith.andi %523, %527 : vector<32x32xi1>
    %c1_i32_196 = arith.constant 1 : i32
    %529 = vector.broadcast %c1_i32_196 : i32 to vector<32x32xi32>
    %530 = arith.addi %469, %529 : vector<32x32xi32>
    %c4_i32_197 = arith.constant 4 : i32
    %531 = vector.broadcast %c4_i32_197 : i32 to vector<32x32xi32>
    %532 = arith.cmpi slt, %530, %531 : vector<32x32xi32>
    %533 = arith.andi %528, %532 : vector<32x32xi1>
    %cst_198 = arith.constant 0.000000e+00 : f32
    %534 = vector.broadcast %cst_198 : f32 to vector<32x32xf32>
    %535 = arith.select %533, %514, %534 : vector<32x32xi1>, vector<32x32xf32>
    %c1_i32_199 = arith.constant 1 : i32
    %536 = tpu.dynamic_rotate %462 by %c1_i32_199 dim 0 : vector<32x32xf32>, i32 -> vector<32x32xf32>
    %c0_i32_200 = arith.constant 0 : i32
    %537 = vector.broadcast %c0_i32_200 : i32 to vector<32x32xi32>
    %538 = arith.addi %467, %537 : vector<32x32xi32>
    %c0_i32_201 = arith.constant 0 : i32
    %539 = vector.broadcast %c0_i32_201 : i32 to vector<32x32xi32>
    %540 = arith.cmpi sge, %538, %539 : vector<32x32xi32>
    %c0_i32_202 = arith.constant 0 : i32
    %541 = vector.broadcast %c0_i32_202 : i32 to vector<32x32xi32>
    %542 = arith.addi %467, %541 : vector<32x32xi32>
    %c4_i32_203 = arith.constant 4 : i32
    %543 = vector.broadcast %c4_i32_203 : i32 to vector<32x32xi32>
    %544 = arith.cmpi slt, %542, %543 : vector<32x32xi32>
    %545 = arith.andi %540, %544 : vector<32x32xi1>
    %c-1_i32_204 = arith.constant -1 : i32
    %546 = vector.broadcast %c-1_i32_204 : i32 to vector<32x32xi32>
    %547 = arith.addi %469, %546 : vector<32x32xi32>
    %c0_i32_205 = arith.constant 0 : i32
    %548 = vector.broadcast %c0_i32_205 : i32 to vector<32x32xi32>
    %549 = arith.cmpi sge, %547, %548 : vector<32x32xi32>
    %550 = arith.andi %545, %549 : vector<32x32xi1>
    %c-1_i32_206 = arith.constant -1 : i32
    %551 = vector.broadcast %c-1_i32_206 : i32 to vector<32x32xi32>
    %552 = arith.addi %469, %551 : vector<32x32xi32>
    %c4_i32_207 = arith.constant 4 : i32
    %553 = vector.broadcast %c4_i32_207 : i32 to vector<32x32xi32>
    %554 = arith.cmpi slt, %552, %553 : vector<32x32xi32>
    %555 = arith.andi %550, %554 : vector<32x32xi1>
    %cst_208 = arith.constant 0.000000e+00 : f32
    %556 = vector.broadcast %cst_208 : f32 to vector<32x32xf32>
    %557 = arith.select %555, %536, %556 : vector<32x32xi1>, vector<32x32xf32>
    %c0_i32_209 = arith.constant 0 : i32
    %558 = vector.broadcast %c0_i32_209 : i32 to vector<32x32xi32>
    %559 = arith.addi %467, %558 : vector<32x32xi32>
    %c0_i32_210 = arith.constant 0 : i32
    %560 = vector.broadcast %c0_i32_210 : i32 to vector<32x32xi32>
    %561 = arith.cmpi sge, %559, %560 : vector<32x32xi32>
    %c0_i32_211 = arith.constant 0 : i32
    %562 = vector.broadcast %c0_i32_211 : i32 to vector<32x32xi32>
    %563 = arith.addi %467, %562 : vector<32x32xi32>
    %c4_i32_212 = arith.constant 4 : i32
    %564 = vector.broadcast %c4_i32_212 : i32 to vector<32x32xi32>
    %565 = arith.cmpi slt, %563, %564 : vector<32x32xi32>
    %566 = arith.andi %561, %565 : vector<32x32xi1>
    %c0_i32_213 = arith.constant 0 : i32
    %567 = vector.broadcast %c0_i32_213 : i32 to vector<32x32xi32>
    %568 = arith.addi %469, %567 : vector<32x32xi32>
    %c0_i32_214 = arith.constant 0 : i32
    %569 = vector.broadcast %c0_i32_214 : i32 to vector<32x32xi32>
    %570 = arith.cmpi sge, %568, %569 : vector<32x32xi32>
    %571 = arith.andi %566, %570 : vector<32x32xi1>
    %c0_i32_215 = arith.constant 0 : i32
    %572 = vector.broadcast %c0_i32_215 : i32 to vector<32x32xi32>
    %573 = arith.addi %469, %572 : vector<32x32xi32>
    %c4_i32_216 = arith.constant 4 : i32
    %574 = vector.broadcast %c4_i32_216 : i32 to vector<32x32xi32>
    %575 = arith.cmpi slt, %573, %574 : vector<32x32xi32>
    %576 = arith.andi %571, %575 : vector<32x32xi1>
    %cst_217 = arith.constant 0.000000e+00 : f32
    %577 = vector.broadcast %cst_217 : f32 to vector<32x32xf32>
    %578 = arith.select %576, %462, %577 : vector<32x32xi1>, vector<32x32xf32>
    %c31_i32 = arith.constant 31 : i32
    %579 = tpu.dynamic_rotate %462 by %c31_i32 dim 0 : vector<32x32xf32>, i32 -> vector<32x32xf32>
    %c0_i32_218 = arith.constant 0 : i32
    %580 = vector.broadcast %c0_i32_218 : i32 to vector<32x32xi32>
    %581 = arith.addi %467, %580 : vector<32x32xi32>
    %c0_i32_219 = arith.constant 0 : i32
    %582 = vector.broadcast %c0_i32_219 : i32 to vector<32x32xi32>
    %583 = arith.cmpi sge, %581, %582 : vector<32x32xi32>
    %c0_i32_220 = arith.constant 0 : i32
    %584 = vector.broadcast %c0_i32_220 : i32 to vector<32x32xi32>
    %585 = arith.addi %467, %584 : vector<32x32xi32>
    %c4_i32_221 = arith.constant 4 : i32
    %586 = vector.broadcast %c4_i32_221 : i32 to vector<32x32xi32>
    %587 = arith.cmpi slt, %585, %586 : vector<32x32xi32>
    %588 = arith.andi %583, %587 : vector<32x32xi1>
    %c1_i32_222 = arith.constant 1 : i32
    %589 = vector.broadcast %c1_i32_222 : i32 to vector<32x32xi32>
    %590 = arith.addi %469, %589 : vector<32x32xi32>
    %c0_i32_223 = arith.constant 0 : i32
    %591 = vector.broadcast %c0_i32_223 : i32 to vector<32x32xi32>
    %592 = arith.cmpi sge, %590, %591 : vector<32x32xi32>
    %593 = arith.andi %588, %592 : vector<32x32xi1>
    %c1_i32_224 = arith.constant 1 : i32
    %594 = vector.broadcast %c1_i32_224 : i32 to vector<32x32xi32>
    %595 = arith.addi %469, %594 : vector<32x32xi32>
    %c4_i32_225 = arith.constant 4 : i32
    %596 = vector.broadcast %c4_i32_225 : i32 to vector<32x32xi32>
    %597 = arith.cmpi slt, %595, %596 : vector<32x32xi32>
    %598 = arith.andi %593, %597 : vector<32x32xi1>
    %cst_226 = arith.constant 0.000000e+00 : f32
    %599 = vector.broadcast %cst_226 : f32 to vector<32x32xf32>
    %600 = arith.select %598, %579, %599 : vector<32x32xi1>, vector<32x32xf32>
    %c29_i32 = arith.constant 29 : i32
    %601 = tpu.dynamic_rotate %462 by %c29_i32 dim 0 : vector<32x32xf32>, i32 -> vector<32x32xf32>
    %c1_i32_227 = arith.constant 1 : i32
    %602 = vector.broadcast %c1_i32_227 : i32 to vector<32x32xi32>
    %603 = arith.addi %467, %602 : vector<32x32xi32>
    %c0_i32_228 = arith.constant 0 : i32
    %604 = vector.broadcast %c0_i32_228 : i32 to vector<32x32xi32>
    %605 = arith.cmpi sge, %603, %604 : vector<32x32xi32>
    %c1_i32_229 = arith.constant 1 : i32
    %606 = vector.broadcast %c1_i32_229 : i32 to vector<32x32xi32>
    %607 = arith.addi %467, %606 : vector<32x32xi32>
    %c4_i32_230 = arith.constant 4 : i32
    %608 = vector.broadcast %c4_i32_230 : i32 to vector<32x32xi32>
    %609 = arith.cmpi slt, %607, %608 : vector<32x32xi32>
    %610 = arith.andi %605, %609 : vector<32x32xi1>
    %c-1_i32_231 = arith.constant -1 : i32
    %611 = vector.broadcast %c-1_i32_231 : i32 to vector<32x32xi32>
    %612 = arith.addi %469, %611 : vector<32x32xi32>
    %c0_i32_232 = arith.constant 0 : i32
    %613 = vector.broadcast %c0_i32_232 : i32 to vector<32x32xi32>
    %614 = arith.cmpi sge, %612, %613 : vector<32x32xi32>
    %615 = arith.andi %610, %614 : vector<32x32xi1>
    %c-1_i32_233 = arith.constant -1 : i32
    %616 = vector.broadcast %c-1_i32_233 : i32 to vector<32x32xi32>
    %617 = arith.addi %469, %616 : vector<32x32xi32>
    %c4_i32_234 = arith.constant 4 : i32
    %618 = vector.broadcast %c4_i32_234 : i32 to vector<32x32xi32>
    %619 = arith.cmpi slt, %617, %618 : vector<32x32xi32>
    %620 = arith.andi %615, %619 : vector<32x32xi1>
    %cst_235 = arith.constant 0.000000e+00 : f32
    %621 = vector.broadcast %cst_235 : f32 to vector<32x32xf32>
    %622 = arith.select %620, %601, %621 : vector<32x32xi1>, vector<32x32xf32>
    %c28_i32 = arith.constant 28 : i32
    %623 = tpu.dynamic_rotate %462 by %c28_i32 dim 0 : vector<32x32xf32>, i32 -> vector<32x32xf32>
    %c1_i32_236 = arith.constant 1 : i32
    %624 = vector.broadcast %c1_i32_236 : i32 to vector<32x32xi32>
    %625 = arith.addi %467, %624 : vector<32x32xi32>
    %c0_i32_237 = arith.constant 0 : i32
    %626 = vector.broadcast %c0_i32_237 : i32 to vector<32x32xi32>
    %627 = arith.cmpi sge, %625, %626 : vector<32x32xi32>
    %c1_i32_238 = arith.constant 1 : i32
    %628 = vector.broadcast %c1_i32_238 : i32 to vector<32x32xi32>
    %629 = arith.addi %467, %628 : vector<32x32xi32>
    %c4_i32_239 = arith.constant 4 : i32
    %630 = vector.broadcast %c4_i32_239 : i32 to vector<32x32xi32>
    %631 = arith.cmpi slt, %629, %630 : vector<32x32xi32>
    %632 = arith.andi %627, %631 : vector<32x32xi1>
    %c0_i32_240 = arith.constant 0 : i32
    %633 = vector.broadcast %c0_i32_240 : i32 to vector<32x32xi32>
    %634 = arith.addi %469, %633 : vector<32x32xi32>
    %c0_i32_241 = arith.constant 0 : i32
    %635 = vector.broadcast %c0_i32_241 : i32 to vector<32x32xi32>
    %636 = arith.cmpi sge, %634, %635 : vector<32x32xi32>
    %637 = arith.andi %632, %636 : vector<32x32xi1>
    %c0_i32_242 = arith.constant 0 : i32
    %638 = vector.broadcast %c0_i32_242 : i32 to vector<32x32xi32>
    %639 = arith.addi %469, %638 : vector<32x32xi32>
    %c4_i32_243 = arith.constant 4 : i32
    %640 = vector.broadcast %c4_i32_243 : i32 to vector<32x32xi32>
    %641 = arith.cmpi slt, %639, %640 : vector<32x32xi32>
    %642 = arith.andi %637, %641 : vector<32x32xi1>
    %cst_244 = arith.constant 0.000000e+00 : f32
    %643 = vector.broadcast %cst_244 : f32 to vector<32x32xf32>
    %644 = arith.select %642, %623, %643 : vector<32x32xi1>, vector<32x32xf32>
    %c27_i32 = arith.constant 27 : i32
    %645 = tpu.dynamic_rotate %462 by %c27_i32 dim 0 : vector<32x32xf32>, i32 -> vector<32x32xf32>
    %c1_i32_245 = arith.constant 1 : i32
    %646 = vector.broadcast %c1_i32_245 : i32 to vector<32x32xi32>
    %647 = arith.addi %467, %646 : vector<32x32xi32>
    %c0_i32_246 = arith.constant 0 : i32
    %648 = vector.broadcast %c0_i32_246 : i32 to vector<32x32xi32>
    %649 = arith.cmpi sge, %647, %648 : vector<32x32xi32>
    %c1_i32_247 = arith.constant 1 : i32
    %650 = vector.broadcast %c1_i32_247 : i32 to vector<32x32xi32>
    %651 = arith.addi %467, %650 : vector<32x32xi32>
    %c4_i32_248 = arith.constant 4 : i32
    %652 = vector.broadcast %c4_i32_248 : i32 to vector<32x32xi32>
    %653 = arith.cmpi slt, %651, %652 : vector<32x32xi32>
    %654 = arith.andi %649, %653 : vector<32x32xi1>
    %c1_i32_249 = arith.constant 1 : i32
    %655 = vector.broadcast %c1_i32_249 : i32 to vector<32x32xi32>
    %656 = arith.addi %469, %655 : vector<32x32xi32>
    %c0_i32_250 = arith.constant 0 : i32
    %657 = vector.broadcast %c0_i32_250 : i32 to vector<32x32xi32>
    %658 = arith.cmpi sge, %656, %657 : vector<32x32xi32>
    %659 = arith.andi %654, %658 : vector<32x32xi1>
    %c1_i32_251 = arith.constant 1 : i32
    %660 = vector.broadcast %c1_i32_251 : i32 to vector<32x32xi32>
    %661 = arith.addi %469, %660 : vector<32x32xi32>
    %c4_i32_252 = arith.constant 4 : i32
    %662 = vector.broadcast %c4_i32_252 : i32 to vector<32x32xi32>
    %663 = arith.cmpi slt, %661, %662 : vector<32x32xi32>
    %664 = arith.andi %659, %663 : vector<32x32xi1>
    %cst_253 = arith.constant 0.000000e+00 : f32
    %665 = vector.broadcast %cst_253 : f32 to vector<32x32xf32>
    %666 = arith.select %664, %645, %665 : vector<32x32xi1>, vector<32x32xf32>
    %667 = tpu.concatenate %491, %513, %535, %557, %578, %600, %622, %644, %666 in 1 : vector<32x32xf32>, vector<32x32xf32>, vector<32x32xf32>, vector<32x32xf32>, vector<32x32xf32>, vector<32x32xf32>, vector<32x32xf32>, vector<32x32xf32>, vector<32x32xf32> -> vector<32x288xf32>
    %c0_254 = arith.constant 0 : index
    %c0_255 = arith.constant 0 : index
    %668 = vector.load %arg32[%c0_254, %c0_255] : memref<288x32xf32, #tpu.memory_space<vmem>>, vector<288x32xf32>
    %669 = arith.truncf %667 : vector<32x288xf32> to vector<32x288xbf16>
    %670 = arith.truncf %668 : vector<288x32xf32> to vector<288x32xbf16>
    %cst_256 = arith.constant dense<0.000000e+00> : vector<32x32xf32>
    %671 = tpu.matmul %669, %670, %cst_256 {dimension_numbers = #tpu.dot_dimension_numbers<[1], [0], [0], [1], [0, 0, 1, 1], [], []>} : vector<32x288xbf16>, vector<288x32xbf16>, vector<32x32xf32> -> vector<32x32xf32>
    %c0_257 = arith.constant 0 : index
    %c0_258 = arith.constant 0 : index
    %672 = vector.load %arg33[%c0_257, %c0_258] : memref<1x32xf32, #tpu.memory_space<vmem>>, vector<1x32xf32>
    %c0_259 = arith.constant 0 : index
    %c0_260 = arith.constant 0 : index
    %673 = vector.load %arg34[%c0_259, %c0_260] : memref<1x32xf32, #tpu.memory_space<vmem>>, vector<1x32xf32>
    %cst_261 = arith.constant dense<0.000000e+00> : vector<32xf32>
    %674 = vector.multi_reduction <add>, %671, %cst_261 [1] : vector<32x32xf32> to vector<32xf32>
    %675 = vector.shape_cast %674 : vector<32xf32> to vector<32x1xf32>
    %cst_262 = arith.constant 3.200000e+01 : f32
    %676 = vector.broadcast %cst_262 : f32 to vector<32x1xf32>
    %677 = arith.divf %675, %676 : vector<32x1xf32>
    %678 = vector.broadcast %677 : vector<32x1xf32> to vector<32x32xf32>
    %679 = arith.subf %671, %678 : vector<32x32xf32>
    %680 = arith.mulf %679, %679 : vector<32x32xf32>
    %cst_263 = arith.constant dense<0.000000e+00> : vector<32xf32>
    %681 = vector.multi_reduction <add>, %680, %cst_263 [1] : vector<32x32xf32> to vector<32xf32>
    %682 = vector.shape_cast %681 : vector<32xf32> to vector<32x1xf32>
    %cst_264 = arith.constant 3.200000e+01 : f32
    %683 = vector.broadcast %cst_264 : f32 to vector<32x1xf32>
    %684 = arith.divf %682, %683 : vector<32x1xf32>
    %cst_265 = arith.constant 9.99999997E-7 : f32
    %685 = vector.broadcast %cst_265 : f32 to vector<32x1xf32>
    %686 = arith.addf %684, %685 : vector<32x1xf32>
    %687 = math.rsqrt %686 : vector<32x1xf32>
    %688 = vector.broadcast %687 : vector<32x1xf32> to vector<32x32xf32>
    %689 = arith.mulf %679, %688 : vector<32x32xf32>
    %690 = vector.broadcast %672 : vector<1x32xf32> to vector<32x32xf32>
    %691 = arith.mulf %689, %690 : vector<32x32xf32>
    %692 = vector.broadcast %673 : vector<1x32xf32> to vector<32x32xf32>
    %693 = arith.addf %691, %692 : vector<32x32xf32>
    %694 = tpu.iota {dimensions = array<i32: 0>} : vector<2x32xi32>
    %695 = tpu.iota {dimensions = array<i32: 1>} : vector<2x32xi32>
    %c4_i32_266 = arith.constant 4 : i32
    %696 = vector.broadcast %c4_i32_266 : i32 to vector<2x32xi32>
    %697 = arith.shrsi %695, %696 : vector<2x32xi32>
    %698 = arith.cmpi eq, %697, %694 : vector<2x32xi32>
    %cst_267 = arith.constant 6.250000e-02 : f32
    %cst_268 = arith.constant 0.000000e+00 : f32
    %699 = vector.broadcast %cst_267 : f32 to vector<2x32xf32>
    %700 = vector.broadcast %cst_268 : f32 to vector<2x32xf32>
    %701 = arith.select %698, %699, %700 : vector<2x32xi1>, vector<2x32xf32>
    %cst_269 = arith.constant dense<0.000000e+00> : vector<2x32xf32>
    %702 = tpu.matmul %701, %693, %cst_269 {dimension_numbers = #tpu.dot_dimension_numbers<[1], [0], [0], [1], [0, 0, 1, 1], [], []>} : vector<2x32xf32>, vector<32x32xf32>, vector<2x32xf32> -> vector<2x32xf32>
    %c0_270 = arith.constant 0 : index
    %c0_271 = arith.constant 0 : index
    %703 = vector.load %arg35[%c0_270, %c0_271] : memref<32x16xf32, #tpu.memory_space<vmem>>, vector<32x16xf32>
    %cst_272 = arith.constant dense<0.000000e+00> : vector<2x16xf32>
    %704 = tpu.matmul %702, %703, %cst_272 {dimension_numbers = #tpu.dot_dimension_numbers<[1], [0], [0], [1], [0, 0, 1, 1], [], []>} : vector<2x32xf32>, vector<32x16xf32>, vector<2x16xf32> -> vector<2x16xf32>
    %c0_273 = arith.constant 0 : index
    %c0_274 = arith.constant 0 : index
    %705 = vector.load %arg36[%c0_273, %c0_274] : memref<1x16xf32, #tpu.memory_space<vmem>>, vector<1x16xf32>
    %706 = vector.broadcast %705 : vector<1x16xf32> to vector<2x16xf32>
    %707 = arith.addf %704, %706 : vector<2x16xf32>
    %c0_275 = arith.constant 0 : index
    %c0_276 = arith.constant 0 : index
    %708 = vector.load %arg37[%c0_275, %c0_276] : memref<2x16xf32, #tpu.memory_space<vmem>>, vector<2x16xf32>
    tpu.vector_store %arg37[%c0_275, %c0_276], %707 {strides = array<i32>} : memref<2x16xf32, #tpu.memory_space<vmem>>, vector<2x16xf32>,
    return
  }
  func.func @transform_0(%arg0: i32) -> (i32, i32) {
    %c0_i32 = arith.constant 0 : i32
    %c0_i32_0 = arith.constant 0 : i32
    return %arg0, %c0_i32 : i32, i32
  }
  func.func @transform_1(%arg0: i32) -> (i32, i32) {
    %c0_i32 = arith.constant 0 : i32
    %c0_i32_0 = arith.constant 0 : i32
    %c0_i32_1 = arith.constant 0 : i32
    return %c0_i32, %c0_i32_0 : i32, i32
  }
  func.func @transform_2(%arg0: i32) -> (i32, i32) {
    %c0_i32 = arith.constant 0 : i32
    %c0_i32_0 = arith.constant 0 : i32
    %c0_i32_1 = arith.constant 0 : i32
    return %c0_i32, %c0_i32_0 : i32, i32
  }
  func.func @transform_3(%arg0: i32) -> (i32, i32) {
    %c0_i32 = arith.constant 0 : i32
    %c0_i32_0 = arith.constant 0 : i32
    %c0_i32_1 = arith.constant 0 : i32
    return %c0_i32, %c0_i32_0 : i32, i32
  }
  func.func @transform_4(%arg0: i32) -> (i32, i32) {
    %c0_i32 = arith.constant 0 : i32
    %c0_i32_0 = arith.constant 0 : i32
    %c0_i32_1 = arith.constant 0 : i32
    return %c0_i32, %c0_i32_0 : i32, i32
  }
  func.func @transform_5(%arg0: i32) -> (i32, i32) {
    %c0_i32 = arith.constant 0 : i32
    %c0_i32_0 = arith.constant 0 : i32
    %c0_i32_1 = arith.constant 0 : i32
    return %c0_i32, %c0_i32_0 : i32, i32
  }
  func.func @transform_6(%arg0: i32) -> (i32, i32) {
    %c0_i32 = arith.constant 0 : i32
    %c0_i32_0 = arith.constant 0 : i32
    %c0_i32_1 = arith.constant 0 : i32
    return %c0_i32, %c0_i32_0 : i32, i32
  }
  func.func @transform_7(%arg0: i32) -> (i32, i32) {
    %c0_i32 = arith.constant 0 : i32
    %c0_i32_0 = arith.constant 0 : i32
    %c0_i32_1 = arith.constant 0 : i32
    return %c0_i32, %c0_i32_0 : i32, i32
  }
  func.func @transform_8(%arg0: i32) -> (i32, i32) {
    %c0_i32 = arith.constant 0 : i32
    %c0_i32_0 = arith.constant 0 : i32
    %c0_i32_1 = arith.constant 0 : i32
    return %c0_i32, %c0_i32_0 : i32, i32
  }
  func.func @transform_9(%arg0: i32) -> (i32, i32) {
    %c0_i32 = arith.constant 0 : i32
    %c0_i32_0 = arith.constant 0 : i32
    %c0_i32_1 = arith.constant 0 : i32
    return %c0_i32, %c0_i32_0 : i32, i32
  }
  func.func @transform_10(%arg0: i32) -> (i32, i32) {
    %c0_i32 = arith.constant 0 : i32
    %c0_i32_0 = arith.constant 0 : i32
    %c0_i32_1 = arith.constant 0 : i32
    return %c0_i32, %c0_i32_0 : i32, i32
  }
  func.func @transform_11(%arg0: i32) -> (i32, i32) {
    %c0_i32 = arith.constant 0 : i32
    %c0_i32_0 = arith.constant 0 : i32
    %c0_i32_1 = arith.constant 0 : i32
    return %c0_i32, %c0_i32_0 : i32, i32
  }
  func.func @transform_12(%arg0: i32) -> (i32, i32) {
    %c0_i32 = arith.constant 0 : i32
    %c0_i32_0 = arith.constant 0 : i32
    %c0_i32_1 = arith.constant 0 : i32
    return %c0_i32, %c0_i32_0 : i32, i32
  }
  func.func @transform_13(%arg0: i32) -> (i32, i32) {
    %c0_i32 = arith.constant 0 : i32
    %c0_i32_0 = arith.constant 0 : i32
    %c0_i32_1 = arith.constant 0 : i32
    return %c0_i32, %c0_i32_0 : i32, i32
  }
  func.func @transform_14(%arg0: i32) -> (i32, i32) {
    %c0_i32 = arith.constant 0 : i32
    %c0_i32_0 = arith.constant 0 : i32
    %c0_i32_1 = arith.constant 0 : i32
    return %c0_i32, %c0_i32_0 : i32, i32
  }
  func.func @transform_15(%arg0: i32) -> (i32, i32) {
    %c0_i32 = arith.constant 0 : i32
    %c0_i32_0 = arith.constant 0 : i32
    %c0_i32_1 = arith.constant 0 : i32
    return %c0_i32, %c0_i32_0 : i32, i32
  }
  func.func @transform_16(%arg0: i32) -> (i32, i32) {
    %c0_i32 = arith.constant 0 : i32
    %c0_i32_0 = arith.constant 0 : i32
    %c0_i32_1 = arith.constant 0 : i32
    return %c0_i32, %c0_i32_0 : i32, i32
  }
  func.func @transform_17(%arg0: i32) -> (i32, i32) {
    %c0_i32 = arith.constant 0 : i32
    %c0_i32_0 = arith.constant 0 : i32
    %c0_i32_1 = arith.constant 0 : i32
    return %c0_i32, %c0_i32_0 : i32, i32
  }
  func.func @transform_18(%arg0: i32) -> (i32, i32) {
    %c0_i32 = arith.constant 0 : i32
    %c0_i32_0 = arith.constant 0 : i32
    %c0_i32_1 = arith.constant 0 : i32
    return %c0_i32, %c0_i32_0 : i32, i32
  }
  func.func @transform_19(%arg0: i32) -> (i32, i32) {
    %c0_i32 = arith.constant 0 : i32
    %c0_i32_0 = arith.constant 0 : i32
    %c0_i32_1 = arith.constant 0 : i32
    return %c0_i32, %c0_i32_0 : i32, i32
  }
  func.func @transform_20(%arg0: i32) -> (i32, i32) {
    %c0_i32 = arith.constant 0 : i32
    %c0_i32_0 = arith.constant 0 : i32
    %c0_i32_1 = arith.constant 0 : i32
    return %c0_i32, %c0_i32_0 : i32, i32
  }
  func.func @transform_21(%arg0: i32) -> (i32, i32) {
    %c0_i32 = arith.constant 0 : i32
    %c0_i32_0 = arith.constant 0 : i32
    %c0_i32_1 = arith.constant 0 : i32
    return %c0_i32, %c0_i32_0 : i32, i32
  }
  func.func @transform_22(%arg0: i32) -> (i32, i32) {
    %c0_i32 = arith.constant 0 : i32
    %c0_i32_0 = arith.constant 0 : i32
    %c0_i32_1 = arith.constant 0 : i32
    return %c0_i32, %c0_i32_0 : i32, i32
  }
  func.func @transform_23(%arg0: i32) -> (i32, i32) {
    %c0_i32 = arith.constant 0 : i32
    %c0_i32_0 = arith.constant 0 : i32
    %c0_i32_1 = arith.constant 0 : i32
    return %c0_i32, %c0_i32_0 : i32, i32
  }
  func.func @transform_24(%arg0: i32) -> (i32, i32) {
    %c0_i32 = arith.constant 0 : i32
    %c0_i32_0 = arith.constant 0 : i32
    %c0_i32_1 = arith.constant 0 : i32
    return %c0_i32, %c0_i32_0 : i32, i32
  }
  func.func @transform_25(%arg0: i32) -> (i32, i32) {
    %c0_i32 = arith.constant 0 : i32
    %c0_i32_0 = arith.constant 0 : i32
    %c0_i32_1 = arith.constant 0 : i32
    return %c0_i32, %c0_i32_0 : i32, i32
  }
  func.func @transform_26(%arg0: i32) -> (i32, i32) {
    %c0_i32 = arith.constant 0 : i32
    %c0_i32_0 = arith.constant 0 : i32
    %c0_i32_1 = arith.constant 0 : i32
    return %c0_i32, %c0_i32_0 : i32, i32
  }
  func.func @transform_27(%arg0: i32) -> (i32, i32) {
    %c0_i32 = arith.constant 0 : i32
    %c0_i32_0 = arith.constant 0 : i32
    %c0_i32_1 = arith.constant 0 : i32
    return %c0_i32, %c0_i32_0 : i32, i32
  }
  func.func @transform_28(%arg0: i32) -> (i32, i32) {
    %c0_i32 = arith.constant 0 : i32
    %c0_i32_0 = arith.constant 0 : i32
    %c0_i32_1 = arith.constant 0 : i32
    return %c0_i32, %c0_i32_0 : i32, i32
  }
  func.func @transform_29(%arg0: i32) -> (i32, i32) {
    %c0_i32 = arith.constant 0 : i32
    %c0_i32_0 = arith.constant 0 : i32
    %c0_i32_1 = arith.constant 0 : i32
    return %c0_i32, %c0_i32_0 : i32, i32
  }
  func.func @transform_30(%arg0: i32) -> (i32, i32) {
    %c0_i32 = arith.constant 0 : i32
    %c0_i32_0 = arith.constant 0 : i32
    %c0_i32_1 = arith.constant 0 : i32
    return %c0_i32, %c0_i32_0 : i32, i32
  }
  func.func @transform_31(%arg0: i32) -> (i32, i32) {
    %c0_i32 = arith.constant 0 : i32
    %c0_i32_0 = arith.constant 0 : i32
    %c0_i32_1 = arith.constant 0 : i32
    return %c0_i32, %c0_i32_0 : i32, i32
  }
  func.func @transform_32(%arg0: i32) -> (i32, i32) {
    %c0_i32 = arith.constant 0 : i32
    %c0_i32_0 = arith.constant 0 : i32
    %c0_i32_1 = arith.constant 0 : i32
    return %c0_i32, %c0_i32_0 : i32, i32
  }
  func.func @transform_33(%arg0: i32) -> (i32, i32) {
    %c0_i32 = arith.constant 0 : i32
    %c0_i32_0 = arith.constant 0 : i32
    %c0_i32_1 = arith.constant 0 : i32
    return %c0_i32, %c0_i32_0 : i32, i32
  }
  func.func @transform_34(%arg0: i32) -> (i32, i32) {
    %c0_i32 = arith.constant 0 : i32
    %c0_i32_0 = arith.constant 0 : i32
    %c0_i32_1 = arith.constant 0 : i32
    return %c0_i32, %c0_i32_0 : i32, i32
  }
  func.func @transform_35(%arg0: i32) -> (i32, i32) {
    %c0_i32 = arith.constant 0 : i32
    %c0_i32_0 = arith.constant 0 : i32
    %c0_i32_1 = arith.constant 0 : i32
    return %c0_i32, %c0_i32_0 : i32, i32
  }
  func.func @transform_36(%arg0: i32) -> (i32, i32) {
    %c0_i32 = arith.constant 0 : i32
    %c0_i32_0 = arith.constant 0 : i32
    return %arg0, %c0_i32 : i32, i32
  }
}

</mosaic_0001>

<llo_original>
// kernel: forward.1
$region0: #{forward.1}
  #allocation0 [shape = 'u32[]', space=smem, size = 0x4, offset = 0x4, fixed_abs, tag = 'smem constant byte address 0x4 - core index']
  #allocation1 [shape = 'u32[144,128]{1,0:T(1,128)}', space=vmem, size = 0x12000, scoped, tag = 'internal scratch']
  %s0 = inlined_call_operand.smem [shape: u32[37], index: -1, kind: input, shape index: {}]
  %s1 = sld [smem:[%s0]]
  %s2 = scalar_lea.smem %s0, 1
  %s3 = sld [smem:[%s2]]
  %s4 = scalar_lea.smem %s0, 2
  %s5 = sld [smem:[%s4]]
  %s6 = scalar_lea.smem %s0, 3
  %s7 = sld [smem:[%s6]]
  %s8 = scalar_lea.smem %s0, 4
  %s9 = sld [smem:[%s8]]
  %s10 = scalar_lea.smem %s0, 5
  %s11 = sld [smem:[%s10]]
  %s12 = scalar_lea.smem %s0, 6
  %s13 = sld [smem:[%s12]]
  %s14 = scalar_lea.smem %s0, 7
  %s15 = sld [smem:[%s14]]
  %s16 = scalar_lea.smem %s0, 8
  %s17 = sld [smem:[%s16]]
  %s18 = scalar_lea.smem %s0, 9
  %s19 = sld [smem:[%s18]]
  %s20 = scalar_lea.smem %s0, 10
  %s21 = sld [smem:[%s20]]
  %s22 = scalar_lea.smem %s0, 11
  %s23 = sld [smem:[%s22]]
  %s24 = scalar_lea.smem %s0, 12
  %s25 = sld [smem:[%s24]]
  %s26 = scalar_lea.smem %s0, 13
  %s27 = sld [smem:[%s26]]
  %s28 = scalar_lea.smem %s0, 14
  %s29 = sld [smem:[%s28]]
  %s30 = scalar_lea.smem %s0, 15
  %s31 = sld [smem:[%s30]]
  %s32 = scalar_lea.smem %s0, 16
  %s33 = sld [smem:[%s32]]
  %s34 = scalar_lea.smem %s0, 17
  %s35 = sld [smem:[%s34]]
  %s36 = scalar_lea.smem %s0, 18
  %s37 = sld [smem:[%s36]]
  %s38 = scalar_lea.smem %s0, 19
  %s39 = sld [smem:[%s38]]
  %s40 = scalar_lea.smem %s0, 20
  %s41 = sld [smem:[%s40]]
  %s42 = scalar_lea.smem %s0, 21
  %s43 = sld [smem:[%s42]]
  %s44 = scalar_lea.smem %s0, 22
  %s45 = sld [smem:[%s44]]
  %s46 = scalar_lea.smem %s0, 23
  %s47 = sld [smem:[%s46]]
  %s48 = scalar_lea.smem %s0, 24
  %s49 = sld [smem:[%s48]]
  %s50 = scalar_lea.smem %s0, 25
  %s51 = sld [smem:[%s50]]
  %s52 = scalar_lea.smem %s0, 26
  %s53 = sld [smem:[%s52]]
  %s54 = scalar_lea.smem %s0, 27
  %s55 = sld [smem:[%s54]]
  %s56 = scalar_lea.smem %s0, 28
  %s57 = sld [smem:[%s56]]
  %s58 = scalar_lea.smem %s0, 29
  %s59 = sld [smem:[%s58]]
  %s60 = scalar_lea.smem %s0, 30
  %s61 = sld [smem:[%s60]]
  %s62 = scalar_lea.smem %s0, 31
  %s63 = sld [smem:[%s62]]
  %s64 = scalar_lea.smem %s0, 32
  %s65 = sld [smem:[%s64]]
  %s66 = scalar_lea.smem %s0, 33
  %s67 = sld [smem:[%s66]]
  %s68 = scalar_lea.smem %s0, 34
  %s69 = sld [smem:[%s68]]
  %s70 = scalar_lea.smem %s0, 35
  %s71 = sld [smem:[%s70]]
  %s72 = scalar_lea.smem %s0, 36
  %s73 = sld [smem:[%s72]]
  %s74 = sld [smem:[#allocation0]]
  $region154: #{forward.1} parent=0
    _
  %s76 = ssub.s32 1, %s74
  %s77 = scalar_select 0, %s76, %s74
  $region1: #{forward.1} parent=0
    #allocation2 [shape = 'u8[1024]{0}', space=vmem, size = 0x400, scoped, tag = 'output window, operand 0, single buffered']
    #allocation3 [shape = 's32[1]{0}', space=sflag, size = 0x4, scoped, tag = 'scoped memory for forward.1']
    %78 = vsyncpa [#allocation3], 0
    // Predicated region
    $region2: #{forward.1} parent=1 // pred_check
      _
    $region3: #{forward.1} parent=1 // pred_check_branch
      %80 = sbr.rel (0) target = $region5
    $region4: #{forward.1} parent=1 // pred_region
      _
    $region5: #{forward.1} parent=1 // pred_fallthru
      _
    // Predicated region
    $region6: #{forward.1} parent=1 // pred_check
      _
    $region7: #{forward.1} parent=1 // pred_check_branch
      %82 = sbr.rel (0) target = $region9
    $region8: #{forward.1} parent=1 // pred_region
      _
    $region9: #{forward.1} parent=1 // pred_fallthru
      _
    // Predicated region
    $region10: #{forward.1} parent=1 // pred_check
      _
    $region11: #{forward.1} parent=1 // pred_check_branch
      %84 = sbr.rel (0) target = $region13
    $region12: #{forward.1} parent=1 // pred_region
      _
    $region13: #{forward.1} parent=1 // pred_fallthru
      _
    // Predicated region
    $region14: #{forward.1} parent=1 // pred_check
      _
    $region15: #{forward.1} parent=1 // pred_check_branch
      %86 = sbr.rel (0) target = $region17
    $region16: #{forward.1} parent=1 // pred_region
      _
    $region17: #{forward.1} parent=1 // pred_fallthru
      _
    // Predicated region
    $region18: #{forward.1} parent=1 // pred_check
      _
    $region19: #{forward.1} parent=1 // pred_check_branch
      %88 = sbr.rel (0) target = $region21
    $region20: #{forward.1} parent=1 // pred_region
      _
    $region21: #{forward.1} parent=1 // pred_fallthru
      _
    // Predicated region
    $region22: #{forward.1} parent=1 // pred_check
      _
    $region23: #{forward.1} parent=1 // pred_check_branch
      %90 = sbr.rel (0) target = $region25
    $region24: #{forward.1} parent=1 // pred_region
      _
    $region25: #{forward.1} parent=1 // pred_fallthru
      _
    // Predicated region
    $region26: #{forward.1} parent=1 // pred_check
      _
    $region27: #{forward.1} parent=1 // pred_check_branch
      %92 = sbr.rel (0) target = $region29
    $region28: #{forward.1} parent=1 // pred_region
      _
    $region29: #{forward.1} parent=1 // pred_fallthru
      _
    // Predicated region
    $region30: #{forward.1} parent=1 // pred_check
      _
    $region31: #{forward.1} parent=1 // pred_check_branch
      %94 = sbr.rel (0) target = $region33
    $region32: #{forward.1} parent=1 // pred_region
      _
    $region33: #{forward.1} parent=1 // pred_fallthru
      _
    // Predicated region
    $region34: #{forward.1} parent=1 // pred_check
      _
    $region35: #{forward.1} parent=1 // pred_check_branch
      %96 = sbr.rel (0) target = $region37
    $region36: #{forward.1} parent=1 // pred_region
      _
    $region37: #{forward.1} parent=1 // pred_fallthru
      _
    // Predicated region
    $region38: #{forward.1} parent=1 // pred_check
      _
    $region39: #{forward.1} parent=1 // pred_check_branch
      %98 = sbr.rel (0) target = $region41
    $region40: #{forward.1} parent=1 // pred_region
      _
    $region41: #{forward.1} parent=1 // pred_fallthru
      _
    // Predicated region
    $region42: #{forward.1} parent=1 // pred_check
      _
    $region43: #{forward.1} parent=1 // pred_check_branch
      %100 = sbr.rel (0) target = $region45
    $region44: #{forward.1} parent=1 // pred_region
      _
    $region45: #{forward.1} parent=1 // pred_fallthru
      _
    // Predicated region
    $region46: #{forward.1} parent=1 // pred_check
      _
    $region47: #{forward.1} parent=1 // pred_check_branch
      %102 = sbr.rel (0) target = $region49
    $region48: #{forward.1} parent=1 // pred_region
      _
    $region49: #{forward.1} parent=1 // pred_fallthru
      _
    // Predicated region
    $region50: #{forward.1} parent=1 // pred_check
      _
    $region51: #{forward.1} parent=1 // pred_check_branch
      %104 = sbr.rel (0) target = $region53
    $region52: #{forward.1} parent=1 // pred_region
      _
    $region53: #{forward.1} parent=1 // pred_fallthru
      _
    // Predicated region
    $region54: #{forward.1} parent=1 // pred_check
      _
    $region55: #{forward.1} parent=1 // pred_check_branch
      %106 = sbr.rel (0) target = $region57
    $region56: #{forward.1} parent=1 // pred_region
      _
    $region57: #{forward.1} parent=1 // pred_fallthru
      _
    // Predicated region
    $region58: #{forward.1} parent=1 // pred_check
      _
    $region59: #{forward.1} parent=1 // pred_check_branch
      %108 = sbr.rel (0) target = $region61
    $region60: #{forward.1} parent=1 // pred_region
      _
    $region61: #{forward.1} parent=1 // pred_fallthru
      _
    // Predicated region
    $region62: #{forward.1} parent=1 // pred_check
      _
    $region63: #{forward.1} parent=1 // pred_check_branch
      %110 = sbr.rel (0) target = $region65
    $region64: #{forward.1} parent=1 // pred_region
      _
    $region65: #{forward.1} parent=1 // pred_fallthru
      _
    // Predicated region
    $region66: #{forward.1} parent=1 // pred_check
      _
    $region67: #{forward.1} parent=1 // pred_check_branch
      %112 = sbr.rel (0) target = $region69
    $region68: #{forward.1} parent=1 // pred_region
      _
    $region69: #{forward.1} parent=1 // pred_fallthru
      _
    // Predicated region
    $region70: #{forward.1} parent=1 // pred_check
      _
    $region71: #{forward.1} parent=1 // pred_check_branch
      %114 = sbr.rel (0) target = $region73
    $region72: #{forward.1} parent=1 // pred_region
      _
    $region73: #{forward.1} parent=1 // pred_fallthru
      _
    // Predicated region
    $region74: #{forward.1} parent=1 // pred_check
      _
    $region75: #{forward.1} parent=1 // pred_check_branch
      %116 = sbr.rel (0) target = $region77
    $region76: #{forward.1} parent=1 // pred_region
      _
    $region77: #{forward.1} parent=1 // pred_fallthru
      _
    // Predicated region
    $region78: #{forward.1} parent=1 // pred_check
      _
    $region79: #{forward.1} parent=1 // pred_check_branch
      %118 = sbr.rel (0) target = $region81
    $region80: #{forward.1} parent=1 // pred_region
      _
    $region81: #{forward.1} parent=1 // pred_fallthru
      _
    // Predicated region
    $region82: #{forward.1} parent=1 // pred_check
      _
    $region83: #{forward.1} parent=1 // pred_check_branch
      %120 = sbr.rel (0) target = $region85
    $region84: #{forward.1} parent=1 // pred_region
      _
    $region85: #{forward.1} parent=1 // pred_fallthru
      _
    // Predicated region
    $region86: #{forward.1} parent=1 // pred_check
      _
    $region87: #{forward.1} parent=1 // pred_check_branch
      %122 = sbr.rel (0) target = $region89
    $region88: #{forward.1} parent=1 // pred_region
      _
    $region89: #{forward.1} parent=1 // pred_fallthru
      _
    // Predicated region
    $region90: #{forward.1} parent=1 // pred_check
      _
    $region91: #{forward.1} parent=1 // pred_check_branch
      %124 = sbr.rel (0) target = $region93
    $region92: #{forward.1} parent=1 // pred_region
      _
    $region93: #{forward.1} parent=1 // pred_fallthru
      _
    // Predicated region
    $region94: #{forward.1} parent=1 // pred_check
      _
    $region95: #{forward.1} parent=1 // pred_check_branch
      %126 = sbr.rel (0) target = $region97
    $region96: #{forward.1} parent=1 // pred_region
      _
    $region97: #{forward.1} parent=1 // pred_fallthru
      _
    // Predicated region
    $region98: #{forward.1} parent=1 // pred_check
      _
    $region99: #{forward.1} parent=1 // pred_check_branch
      %128 = sbr.rel (0) target = $region101
    $region100: #{forward.1} parent=1 // pred_region
      _
    $region101: #{forward.1} parent=1 // pred_fallthru
      _
    // Predicated region
    $region102: #{forward.1} parent=1 // pred_check
      _
    $region103: #{forward.1} parent=1 // pred_check_branch
      %130 = sbr.rel (0) target = $region105
    $region104: #{forward.1} parent=1 // pred_region
      _
    $region105: #{forward.1} parent=1 // pred_fallthru
      _
    // Predicated region
    $region106: #{forward.1} parent=1 // pred_check
      _
    $region107: #{forward.1} parent=1 // pred_check_branch
      %132 = sbr.rel (0) target = $region109
    $region108: #{forward.1} parent=1 // pred_region
      _
    $region109: #{forward.1} parent=1 // pred_fallthru
      _
    // Predicated region
    $region110: #{forward.1} parent=1 // pred_check
      _
    $region111: #{forward.1} parent=1 // pred_check_branch
      %134 = sbr.rel (0) target = $region113
    $region112: #{forward.1} parent=1 // pred_region
      _
    $region113: #{forward.1} parent=1 // pred_fallthru
      _
    // Predicated region
    $region114: #{forward.1} parent=1 // pred_check
      _
    $region115: #{forward.1} parent=1 // pred_check_branch
      %136 = sbr.rel (0) target = $region117
    $region116: #{forward.1} parent=1 // pred_region
      _
    $region117: #{forward.1} parent=1 // pred_fallthru
      _
    // Predicated region
    $region118: #{forward.1} parent=1 // pred_check
      _
    $region119: #{forward.1} parent=1 // pred_check_branch
      %138 = sbr.rel (0) target = $region121
    $region120: #{forward.1} parent=1 // pred_region
      _
    $region121: #{forward.1} parent=1 // pred_fallthru
      _
    // Predicated region
    $region122: #{forward.1} parent=1 // pred_check
      _
    $region123: #{forward.1} parent=1 // pred_check_branch
      %140 = sbr.rel (0) target = $region125
    $region124: #{forward.1} parent=1 // pred_region
      _
    $region125: #{forward.1} parent=1 // pred_fallthru
      _
    // Predicated region
    $region126: #{forward.1} parent=1 // pred_check
      _
    $region127: #{forward.1} parent=1 // pred_check_branch
      %142 = sbr.rel (0) target = $region129
    $region128: #{forward.1} parent=1 // pred_region
      _
    $region129: #{forward.1} parent=1 // pred_fallthru
      _
    // Predicated region
    $region130: #{forward.1} parent=1 // pred_check
      _
    $region131: #{forward.1} parent=1 // pred_check_branch
      %144 = sbr.rel (0) target = $region133
    $region132: #{forward.1} parent=1 // pred_region
      _
    $region133: #{forward.1} parent=1 // pred_fallthru
      _
    // Predicated region
    $region134: #{forward.1} parent=1 // pred_check
      _
    $region135: #{forward.1} parent=1 // pred_check_branch
      %146 = sbr.rel (0) target = $region137
    $region136: #{forward.1} parent=1 // pred_region
      _
    $region137: #{forward.1} parent=1 // pred_fallthru
      _
    // Predicated region
    $region138: #{forward.1} parent=1 // pred_check
      _
    $region139: #{forward.1} parent=1 // pred_check_branch
      %148 = sbr.rel (0) target = $region141
    $region140: #{forward.1} parent=1 // pred_region
      _
    $region141: #{forward.1} parent=1 // pred_fallthru
      _
    // Predicated region
    $region142: #{forward.1} parent=1 // pred_check
      _
    $region143: #{forward.1} parent=1 // pred_check_branch
      %150 = sbr.rel (0) target = $region145
    $region144: #{forward.1} parent=1 // pred_region
      _
    $region145: #{forward.1} parent=1 // pred_fallthru
      _
    %v152 = vlaneseq
    %v153 = vshrl.u32 %v152, 7
    %v154 = vadd.s32 %v153, 8
    %v155 = vadd.s32 %v153, 16
    %v156 = vadd.s32 %v153, 24
    %v157 = vlaneseq
    %v158 = vand.u32 %v157, 127
    %v159 = vand.u32 %v153, 4294967280
    %v160 = vand.u32 %v154, 4294967280
    %v161 = vand.u32 %v155, 4294967280
    %v162 = vand.u32 %v156, 4294967280
    %v163 = vand.u32 %v158, 4294967280
    %vm164 = vcmp.eq.s32.totalorder %v159, %v163
    %vm165 = vcmp.eq.s32.totalorder %v160, %v163
    %vm166 = vcmp.eq.s32.totalorder %v161, %v163
    %vm167 = vcmp.eq.s32.totalorder %v162, %v163
    %v168 = vand.u32 %v153, 4294967290
    %v169 = vand.u32 %v154, 4294967290
    %v170 = vand.u32 %v155, 4294967290
    %v171 = vand.u32 %v156, 4294967290
    %v172 = vand.u32 %v158, 4294967290
    %vm173 = vcmp.eq.s32.totalorder %v168, %v172
    %vm174 = vcmp.eq.s32.totalorder %v169, %v172
    %vm175 = vcmp.eq.s32.totalorder %v170, %v172
    %vm176 = vcmp.eq.s32.totalorder %v171, %v172
    %v177 = vsel %vm164, 0.0, -1e+09
    %v178 = vsel %vm165, 0.0, -1e+09
    %v179 = vsel %vm166, 0.0, -1e+09
    %v180 = vsel %vm167, 0.0, -1e+09
    %v181 = vsel %vm173, 0.0, -1e+09
    %v182 = vsel %vm174, 0.0, -1e+09
    %v183 = vsel %vm175, 0.0, -1e+09
    %v184 = vsel %vm176, 0.0, -1e+09
    %v185 = vld [vmem:[%s1] sm:$0xff]
    %v186 = vld [vmem:[%s1 + $0x8] sm:$0xff]
    %v187 = vld [vmem:[%s1 + $0x10] sm:$0xff]
    %v188 = vld [vmem:[%s1 + $0x18] sm:$0xff]
    %v189 = vld [vmem:[%s1 + $0x20] sm:$0xff]
    %v190 = vld [vmem:[%s1 + $0x28] sm:$0xff]
    %v191 = vld [vmem:[%s1 + $0x30] sm:$0xff]
    %v192 = vld [vmem:[%s1 + $0x38] sm:$0xff]
    %v193 = vld [vmem:[%s3] sm:$0xff]
    %v194 = vld [vmem:[%s3 + $0x8] sm:$0xff]
    %v195 = vld [vmem:[%s3 + $0x10] sm:$0xff]
    %v196 = vld [vmem:[%s3 + $0x18] sm:$0xff]
    %v197 = vld [vmem:[%s3 + $0x20] sm:$0xff]
    %v198 = vld [vmem:[%s3 + $0x28] sm:$0xff]
    %v199 = vld [vmem:[%s3 + $0x30] sm:$0xff]
    %v200 = vld [vmem:[%s3 + $0x38] sm:$0xff]
    %v201 = vld [vmem:[%s3 + $0x40] sm:$0xff]
    %v202 = vld [vmem:[%s3 + $0x48] sm:$0xff]
    %v203 = vld [vmem:[%s3 + $0x50] sm:$0xff]
    %v204 = vld [vmem:[%s3 + $0x58] sm:$0xff]
    %v205 = vld [vmem:[%s3 + $0x60] sm:$0xff]
    %v206 = vld [vmem:[%s3 + $0x68] sm:$0xff]
    %v207 = vld [vmem:[%s3 + $0x70] sm:$0xff]
    %v208 = vld [vmem:[%s3 + $0x78] sm:$0xff]
    %v209 = vld [vmem:[%s3 + $0x80] sm:$0xff]
    %v210 = vld [vmem:[%s3 + $0x88] sm:$0xff]
    %v211 = vld [vmem:[%s3 + $0x90] sm:$0xff]
    %v212 = vld [vmem:[%s3 + $0x98] sm:$0xff]
    %v213 = vld [vmem:[%s3 + $0xa0] sm:$0xff]
    %v214 = vld [vmem:[%s3 + $0xa8] sm:$0xff]
    %v215 = vld [vmem:[%s3 + $0xb0] sm:$0xff]
    %v216 = vld [vmem:[%s3 + $0xb8] sm:$0xff]
    %v217 = vpack.c.bf16 %v187, %v185
    %v218 = vpack.c.bf16 %v188, %v186
    %v219 = vpack.c.bf16 %v191, %v189
    %v220 = vpack.c.bf16 %v192, %v190
    %v221 = vpack.c.bf16 %v194, %v193
    %v222 = vpack.c.bf16 %v196, %v195
    %v223 = vpack.c.bf16 %v198, %v197
    %v224 = vpack.c.bf16 %v200, %v199
    %v225 = vpack.c.bf16 %v202, %v201
    %v226 = vpack.c.bf16 %v204, %v203
    %v227 = vpack.c.bf16 %v206, %v205
    %v228 = vpack.c.bf16 %v208, %v207
    %v229 = vpack.c.bf16 %v210, %v209
    %v230 = vpack.c.bf16 %v212, %v211
    %v231 = vpack.c.bf16 %v214, %v213
    %v232 = vpack.c.bf16 %v216, %v215
    %v233 = vld [vmem:[%s5] sm:$0x1]
    %v235 = vlaneseq
    %v236 = vshrl.u32 %v235, 7
    %v237 = vsub.s32 0, %v236
    %v238 = vrot.slane %v233, %v237
    %vm240 = vcmask 523264
    %v242 = vsel %vm240, %v218, 0
    %v245 = vsel %vm240, %v220, 0
    %247 = vmatprep.subr.bf16.mxu0 0
    %248 = vmatpush1.bf16.msra.mxu0 %v228
    %249 = vmatprep.subr.bf16.mxu0 0
    %250 = vmatpush1.bf16.msra.mxu0 %v227
    %251 = vmatprep.subr.bf16.mxu0 0
    %252 = vmatpush1.bf16.msra.mxu0 %v226
    %253 = vmatprep.subr.bf16.mxu0 0
    %254 = vmatpush1.bf16.msra.mxu0 %v225
    %255 = vmatprep.subr.bf16.mxu0 0
    %256 = vmatpush1.bf16.msra.mxu0 %v224
    %257 = vmatprep.subr.bf16.mxu0 0
    %258 = vmatpush1.bf16.msra.mxu0 %v223
    %259 = vmatprep.subr.bf16.mxu0 0
    %260 = vmatpush1.bf16.msra.mxu0 %v222
    %261 = vmatprep.subr.bf16.mxu0 0
    %262 = vmatpush1.bf16.msra.mxu0 %v221
    %263 = vmatprep.subr.bf16.mxu0 0
    %264 = vmatpush2.bf16.msra.mxu0 0
    %265 = vmatprep.subr.bf16.mxu0 0
    %266 = vmatpush2.bf16.msra.mxu0 0
    %267 = vmatprep.subr.bf16.mxu0 0
    %268 = vmatpush2.bf16.msra.mxu0 0
    %269 = vmatprep.subr.bf16.mxu0 0
    %270 = vmatpush2.bf16.msra.mxu0 0
    %271 = vmatprep.subr.bf16.mxu0 0
    %272 = vmatpush2.bf16.msra.mxu0 %v232
    %273 = vmatprep.subr.bf16.mxu0 0
    %274 = vmatpush2.bf16.msra.mxu0 %v231
    %275 = vmatprep.subr.bf16.mxu0 0
    %276 = vmatpush2.bf16.msra.mxu0 %v230
    %277 = vmatprep.subr.bf16.mxu0 0
    %278 = vmatpush2.bf16.msra.mxu0 %v229
    %279 = vmatprep.mubr.bf16.mxu0 %v242
    %280 = vmatmul.mubr.bf16.gmra.mxu0 %v217
    %v281 = vpop.f32.mrf.mxu0
    %v282 = vadd.f32 %v238, %v281
    %v283 = vpop.f32.mrf.mxu0
    %v284 = vpop.f32.mrf.mxu0
    %v285 = vadd.f32 %v238, %v284
    %v286 = vpop.f32.mrf.mxu0
    %287 = vmatprep.mubr.bf16.mxu0 %v245
    %288 = vmatmul.mubr.bf16.gmra.mxu0 %v219
    %v289 = vpop.f32.mrf.mxu0
    %v290 = vadd.f32 %v238, %v289
    %v291 = vpop.f32.mrf.mxu0
    %v292 = vpop.f32.mrf.mxu0
    %v293 = vadd.f32 %v238, %v292
    %v294 = vpop.f32.mrf.mxu0
    %295 = vdwg.mxu0
    %v296 = vld [vmem:[%s7] sm:$0xff]
    %v297 = vld [vmem:[%s7 + $0x8] sm:$0xff]
    %v298 = vadd.f32 %v282, %v296
    %v299 = vadd.f32 %v285, %v297
    %v300 = vadd.f32 %v290, %v296
    %v301 = vadd.f32 %v293, %v297
    %v302 = vld [vmem:[%s9] sm:$0x1]
    %v303 = vld [vmem:[%s11] sm:$0x1]
    %v304 = vsel %vm240, %v298, 0.0
    %305 = vadd.xlane.f32.xlu0 %v304
    %v306 = vpop.xlane.xlu0 %305
    %v307 = vsel %vm240, %v299, 0.0
    %308 = vadd.xlane.f32.xlu0 %v307
    %v309 = vpop.xlane.xlu0 %308
    %v310 = vsel %vm240, %v300, 0.0
    %311 = vadd.xlane.f32.xlu0 %v310
    %v312 = vpop.xlane.xlu0 %311
    %v313 = vsel %vm240, %v301, 0.0
    %314 = vadd.xlane.f32.xlu0 %v313
    %v315 = vpop.xlane.xlu0 %314
    %v316 = vrcp.pop 64.0
    %v317 = vmul.f32 %v306, %v316
    %v318 = vmul.f32 %v309, %v316
    %v319 = vmul.f32 %v312, %v316
    %v320 = vmul.f32 %v315, %v316
    %v321 = vsub.f32 %v298, %v317
    %v322 = vsub.f32 %v299, %v318
    %v323 = vsub.f32 %v300, %v319
    %v324 = vsub.f32 %v301, %v320
    %v325 = vmul.f32 %v321, %v321
    %v326 = vmul.f32 %v322, %v322
    %v327 = vmul.f32 %v323, %v323
    %v328 = vmul.f32 %v324, %v324
    %v329 = vsel %vm240, %v325, 0.0
    %330 = vadd.xlane.f32.xlu0 %v329
    %v331 = vpop.xlane.xlu0 %330
    %v332 = vsel %vm240, %v326, 0.0
    %333 = vadd.xlane.f32.xlu0 %v332
    %v334 = vpop.xlane.xlu0 %333
    %v335 = vsel %vm240, %v327, 0.0
    %336 = vadd.xlane.f32.xlu0 %v335
    %v337 = vpop.xlane.xlu0 %336
    %v338 = vsel %vm240, %v328, 0.0
    %339 = vadd.xlane.f32.xlu0 %v338
    %v340 = vpop.xlane.xlu0 %339
    %v341 = vmul.f32 %v331, %v316
    %v342 = vmul.f32 %v334, %v316
    %v343 = vmul.f32 %v337, %v316
    %v344 = vmul.f32 %v340, %v316
    %v345 = vadd.f32 %v341, 1e-05
    %v346 = vadd.f32 %v342, 1e-05
    %v347 = vadd.f32 %v343, 1e-05
    %v348 = vadd.f32 %v344, 1e-05
    %v349 = vrsqrt.pop %v345
    %v350 = vrsqrt.pop %v346
    %v351 = vrsqrt.pop %v347
    %v352 = vrsqrt.pop %v348
    %v353 = vmul.f32 %v321, %v349
    %v354 = vmul.f32 %v322, %v350
    %v355 = vmul.f32 %v323, %v351
    %v356 = vmul.f32 %v324, %v352
    %v358 = vlaneseq
    %v359 = vshrl.u32 %v358, 7
    %v360 = vsub.s32 0, %v359
    %v361 = vrot.slane %v302, %v360
    %v363 = vmul.f32 %v353, %v361
    %v364 = vmul.f32 %v354, %v361
    %v365 = vmul.f32 %v355, %v361
    %v366 = vmul.f32 %v356, %v361
    %v368 = vlaneseq
    %v369 = vshrl.u32 %v368, 7
    %v370 = vsub.s32 0, %v369
    %v371 = vrot.slane %v303, %v370
    %v373 = vadd.f32 %v363, %v371
    %v374 = vadd.f32 %v364, %v371
    %v375 = vadd.f32 %v365, %v371
    %v376 = vadd.f32 %v366, %v371
    %v377 = vld [vmem:[%s13] sm:$0xff]
    %v378 = vld [vmem:[%s13 + $0x8] sm:$0xff]
    %v379 = vld [vmem:[%s13 + $0x10] sm:$0xff]
    %v380 = vld [vmem:[%s13 + $0x18] sm:$0xff]
    %v381 = vld [vmem:[%s13 + $0x20] sm:$0xff]
    %v382 = vld [vmem:[%s13 + $0x28] sm:$0xff]
    %v383 = vld [vmem:[%s13 + $0x30] sm:$0xff]
    %v384 = vld [vmem:[%s13 + $0x38] sm:$0xff]
    %v385 = vld [vmem:[%s13 + $0x40] sm:$0xff]
    %v386 = vld [vmem:[%s13 + $0x48] sm:$0xff]
    %v387 = vld [vmem:[%s13 + $0x50] sm:$0xff]
    %v388 = vld [vmem:[%s13 + $0x58] sm:$0xff]
    %v389 = vld [vmem:[%s13 + $0x60] sm:$0xff]
    %v390 = vld [vmem:[%s13 + $0x68] sm:$0xff]
    %v391 = vld [vmem:[%s13 + $0x70] sm:$0xff]
    %v392 = vld [vmem:[%s13 + $0x78] sm:$0xff]
    %v393 = vpack.c.bf16 %v374, %v373
    %v394 = vpack.c.bf16 %v376, %v375
    %v395 = vpack.c.bf16 %v379, %v377
    %v396 = vpack.c.bf16 %v380, %v378
    %v397 = vpack.c.bf16 %v383, %v381
    %v398 = vpack.c.bf16 %v384, %v382
    %v399 = vpack.c.bf16 %v387, %v385
    %v400 = vpack.c.bf16 %v388, %v386
    %v401 = vpack.c.bf16 %v391, %v389
    %v402 = vpack.c.bf16 %v392, %v390
    %v403 = vld [vmem:[%s15] sm:$0x3]
    %v405 = vlaneseq
    %v406 = vshrl.u32 %v405, 7
    %v407 = vsub.s32 0, %v406
    %v408 = vrot.slane %v403, %v407
    %v409 = vlaneseq
    %v410 = vshrl.u32 %v409, 7
    %v411 = vsub.s32 1, %v410
    %v412 = vrot.slane %v403, %v411
    %v416 = vsel %vm240, %v393, 0
    %v419 = vsel %vm240, %v394, 0
    %421 = vmatprep.subr.bf16.mxu0 0
    %422 = vmatpush1.bf16.msra.mxu0 0
    %423 = vmatprep.subr.bf16.mxu0 0
    %424 = vmatpush1.bf16.msra.mxu0 0
    %425 = vmatprep.subr.bf16.mxu0 0
    %426 = vmatpush1.bf16.msra.mxu0 0
    %427 = vmatprep.subr.bf16.mxu0 0
    %428 = vmatpush1.bf16.msra.mxu0 0
    %429 = vmatprep.subr.bf16.mxu0 %v402
    %430 = vmatpush1.bf16.msra.mxu0 %v401
    %431 = vmatprep.subr.bf16.mxu0 %v400
    %432 = vmatpush1.bf16.msra.mxu0 %v399
    %433 = vmatprep.subr.bf16.mxu0 %v398
    %434 = vmatpush1.bf16.msra.mxu0 %v397
    %435 = vmatprep.subr.bf16.mxu0 %v396
    %436 = vmatpush1.bf16.msra.mxu0 %v395
    %437 = vmatprep.subr.bf16.mxu0 0
    %438 = vmatpush2.bf16.msra.mxu0 0
    %439 = vmatprep.subr.bf16.mxu0 0
    %440 = vmatpush2.bf16.msra.mxu0 0
    %441 = vmatprep.subr.bf16.mxu0 0
    %442 = vmatpush2.bf16.msra.mxu0 0
    %443 = vmatprep.subr.bf16.mxu0 0
    %444 = vmatpush2.bf16.msra.mxu0 0
    %445 = vmatprep.subr.bf16.mxu0 0
    %446 = vmatpush2.bf16.msra.mxu0 0
    %447 = vmatprep.subr.bf16.mxu0 0
    %448 = vmatpush2.bf16.msra.mxu0 0
    %449 = vmatprep.subr.bf16.mxu0 0
    %450 = vmatpush2.bf16.msra.mxu0 0
    %451 = vmatprep.subr.bf16.mxu0 0
    %452 = vmatpush2.bf16.msra.mxu0 0
    %453 = vmatprep.mubr.bf16.mxu0 0
    %454 = vmatmul.mubr.bf16.gmra.mxu0 %v416
    %v455 = vpop.f32.mrf.mxu0
    %v456 = vadd.f32 %v408, %v455
    %v457 = vpop.f32.mrf.mxu0
    %v458 = vadd.f32 %v412, %v457
    %v459 = vpop.f32.mrf.mxu0
    %v460 = vadd.f32 %v408, %v459
    %v461 = vpop.f32.mrf.mxu0
    %v462 = vadd.f32 %v412, %v461
    %463 = vmatprep.mubr.bf16.mxu0 0
    %464 = vmatmul.mubr.bf16.gmra.mxu0 %v419
    %v465 = vpop.f32.mrf.mxu0
    %v466 = vadd.f32 %v408, %v465
    %v467 = vpop.f32.mrf.mxu0
    %v468 = vadd.f32 %v412, %v467
    %v469 = vpop.f32.mrf.mxu0
    %v470 = vadd.f32 %v408, %v469
    %v471 = vpop.f32.mrf.mxu0
    %v472 = vadd.f32 %v412, %v471
    %473 = vdwg.mxu0
    %v474 = vmul.f32 %v456, 0.25
    %v475 = vmul.f32 %v460, 0.25
    %v476 = vmul.f32 %v466, 0.25
    %v477 = vmul.f32 %v470, 0.25
    %v478 = vpack.c.bf16 %v475, %v474
    %v479 = vpack.c.bf16 %v477, %v476
    %v480 = vpack.c.bf16 %v460, %v456
    %v481 = vpack.c.bf16 %v470, %v466
    %484 = vrot.lane.b32.xlu0 %v480, 64
    %v485 = vpop.permute.xlu0 %484
    %486 = vrot.lane.b32.xlu0 %v481, 64
    %v487 = vpop.permute.xlu0 %486
    %vm488 = vcmask 130048
    %v490 = vsel %vm488, %v478, 0
    %v493 = vsel %vm488, %v479, 0
    %v496 = vsel %vm488, %v485, 0
    %v499 = vsel %vm488, %v487, 0
    %501 = vmatprep.subr.bf16.mxu0 0
    %502 = vmatpush1.bf16.xpose.msra.mxu0 0
    %503 = vmatprep.subr.bf16.mxu0 0
    %504 = vmatpush1.bf16.xpose.msra.mxu0 0
    %505 = vmatprep.subr.bf16.mxu0 0
    %506 = vmatpush1.bf16.xpose.msra.mxu0 0
    %507 = vmatprep.subr.bf16.mxu0 0
    %508 = vmatpush1.bf16.xpose.msra.mxu0 0
    %509 = vmatprep.subr.bf16.mxu0 0
    %510 = vmatpush1.bf16.xpose.msra.mxu0 0
    %511 = vmatprep.subr.bf16.mxu0 0
    %512 = vmatpush1.bf16.xpose.msra.mxu0 0
    %513 = vmatprep.subr.bf16.mxu0 0
    %514 = vmatpush1.bf16.xpose.msra.mxu0 %v499
    %515 = vmatprep.subr.bf16.mxu0 0
    %516 = vmatpush1.bf16.xpose.msra.mxu0 %v496
    %517 = vmatprep.subr.bf16.mxu0 0
    %518 = vmatpush2.bf16.xpose.msra.mxu0 0
    %519 = vmatprep.subr.bf16.mxu0 0
    %520 = vmatpush2.bf16.xpose.msra.mxu0 0
    %521 = vmatprep.subr.bf16.mxu0 0
    %522 = vmatpush2.bf16.xpose.msra.mxu0 0
    %523 = vmatprep.subr.bf16.mxu0 0
    %524 = vmatpush2.bf16.xpose.msra.mxu0 0
    %525 = vmatprep.subr.bf16.mxu0 0
    %526 = vmatpush2.bf16.xpose.msra.mxu0 0
    %527 = vmatprep.subr.bf16.mxu0 0
    %528 = vmatpush2.bf16.xpose.msra.mxu0 0
    %529 = vmatprep.subr.bf16.mxu0 0
    %530 = vmatpush2.bf16.xpose.msra.mxu0 0
    %531 = vmatprep.subr.bf16.mxu0 0
    %532 = vmatpush2.bf16.xpose.msra.mxu0 0
    %533 = vmatprep.mubr.bf16.mxu0 0
    %534 = vmatmul.mubr.bf16.gmra.mxu0 %v490
    %v535 = vpop.f32.mrf.mxu0
    %v536 = vadd.f32 %v181, %v535
    %v537 = vpop.f32.mrf.mxu0
    %v538 = vpop.f32.mrf.mxu0
    %v539 = vadd.f32 %v182, %v538
    %v540 = vpop.f32.mrf.mxu0
    %541 = vmatprep.mubr.bf16.mxu0 0
    %542 = vmatmul.mubr.bf16.gmra.mxu0 %v493
    %v543 = vpop.f32.mrf.mxu0
    %v544 = vadd.f32 %v183, %v543
    %v545 = vpop.f32.mrf.mxu0
    %v546 = vpop.f32.mrf.mxu0
    %v547 = vadd.f32 %v184, %v546
    %v548 = vpop.f32.mrf.mxu0
    %549 = vdwg.mxu0
    %vm550 = vcmask 261120
    %v551 = vsel %vm550, %v536, -inf
    %552 = vmax.xlane.f32.xlu0 %v551
    %v553 = vpop.xlane.xlu0 %552
    %v554 = vsel %vm550, %v539, -inf
    %555 = vmax.xlane.f32.xlu0 %v554
    %v556 = vpop.xlane.xlu0 %555
    %v557 = vsel %vm550, %v544, -inf
    %558 = vmax.xlane.f32.xlu0 %v557
    %v559 = vpop.xlane.xlu0 %558
    %v560 = vsel %vm550, %v547, -inf
    %561 = vmax.xlane.f32.xlu0 %v560
    %v562 = vpop.xlane.xlu0 %561
    %v563 = vsub.f32 %v536, %v553
    %v564 = vsub.f32 %v539, %v556
    %v565 = vsub.f32 %v544, %v559
    %v566 = vsub.f32 %v547, %v562
    %v567 = vmul.f32 %v563, 1.442695
    %v568 = vpow.pop %v567
    %v569 = vmul.f32 %v564, 1.442695
    %v570 = vpow.pop %v569
    %v571 = vmul.f32 %v565, 1.442695
    %v572 = vpow.pop %v571
    %v573 = vmul.f32 %v566, 1.442695
    %v574 = vpow.pop %v573
    %v575 = vsel %vm550, %v568, 0.0
    %576 = vadd.xlane.f32.xlu0 %v575
    %v577 = vpop.xlane.xlu0 %576
    %v578 = vsel %vm550, %v570, 0.0
    %579 = vadd.xlane.f32.xlu0 %v578
    %v580 = vpop.xlane.xlu0 %579
    %v581 = vsel %vm550, %v572, 0.0
    %582 = vadd.xlane.f32.xlu0 %v581
    %v583 = vpop.xlane.xlu0 %582
    %v584 = vsel %vm550, %v574, 0.0
    %585 = vadd.xlane.f32.xlu0 %v584
    %v586 = vpop.xlane.xlu0 %585
    %v587 = vrcp.pop %v577
    %v588 = vrcp.pop %v580
    %v589 = vrcp.pop %v583
    %v590 = vrcp.pop %v586
    %v591 = vmul.f32 %v568, %v587
    %v592 = vmul.f32 %v570, %v588
    %v593 = vmul.f32 %v572, %v589
    %v594 = vmul.f32 %v574, %v590
    %v595 = vpack.c.bf16 %v592, %v591
    %v596 = vpack.c.bf16 %v594, %v593
    %v597 = vpack.c.bf16 %v462, %v458
    %v598 = vpack.c.bf16 %v472, %v468
    %v600 = vsel %vm550, %v595, 0
    %v603 = vsel %vm550, %v596, 0
    %605 = vmatprep.subr.bf16.mxu0 0
    %606 = vmatpush1.bf16.msra.mxu0 0
    %607 = vmatprep.subr.bf16.mxu0 0
    %608 = vmatpush1.bf16.msra.mxu0 0
    %609 = vmatprep.subr.bf16.mxu0 0
    %610 = vmatpush1.bf16.msra.mxu0 0
    %611 = vmatprep.subr.bf16.mxu0 0
    %612 = vmatpush1.bf16.msra.mxu0 0
    %613 = vmatprep.subr.bf16.mxu0 0
    %614 = vmatpush1.bf16.msra.mxu0 0
    %615 = vmatprep.subr.bf16.mxu0 0
    %616 = vmatpush1.bf16.msra.mxu0 0
    %617 = vmatprep.subr.bf16.mxu0 0
    %618 = vmatpush1.bf16.msra.mxu0 %v598
    %619 = vmatprep.subr.bf16.mxu0 0
    %620 = vmatpush1.bf16.msra.mxu0 %v597
    %621 = vmatprep.subr.bf16.mxu0 0
    %622 = vmatpush2.bf16.msra.mxu0 0
    %623 = vmatprep.subr.bf16.mxu0 0
    %624 = vmatpush2.bf16.msra.mxu0 0
    %625 = vmatprep.subr.bf16.mxu0 0
    %626 = vmatpush2.bf16.msra.mxu0 0
    %627 = vmatprep.subr.bf16.mxu0 0
    %628 = vmatpush2.bf16.msra.mxu0 0
    %629 = vmatprep.subr.bf16.mxu0 0
    %630 = vmatpush2.bf16.msra.mxu0 0
    %631 = vmatprep.subr.bf16.mxu0 0
    %632 = vmatpush2.bf16.msra.mxu0 0
    %633 = vmatprep.subr.bf16.mxu0 0
    %634 = vmatpush2.bf16.msra.mxu0 0
    %635 = vmatprep.subr.bf16.mxu0 0
    %636 = vmatpush2.bf16.msra.mxu0 0
    %637 = vmatprep.mubr.bf16.mxu0 0
    %638 = vmatmul.mubr.bf16.gmra.mxu0 %v600
    %v639 = vpop.f32.mrf.mxu0
    %v640 = vadd.f32 0.0, %v639
    %v641 = vpop.f32.mrf.mxu0
    %v642 = vpop.f32.mrf.mxu0
    %v643 = vadd.f32 0.0, %v642
    %v644 = vpop.f32.mrf.mxu0
    %645 = vmatprep.mubr.bf16.mxu0 0
    %646 = vmatmul.mubr.bf16.gmra.mxu0 %v603
    %v647 = vpop.f32.mrf.mxu0
    %v648 = vadd.f32 0.0, %v647
    %v649 = vpop.f32.mrf.mxu0
    %v650 = vpop.f32.mrf.mxu0
    %v651 = vadd.f32 0.0, %v650
    %v652 = vpop.f32.mrf.mxu0
    %653 = vdwg.mxu0
    %656 = vrot.lane.b32.xlu0 %v478, 112
    %v657 = vpop.permute.xlu0 %656
    %658 = vrot.lane.b32.xlu0 %v479, 112
    %v659 = vpop.permute.xlu0 %658
    %660 = vrot.lane.b32.xlu0 %v480, 48
    %v661 = vpop.permute.xlu0 %660
    %662 = vrot.lane.b32.xlu0 %v481, 48
    %v663 = vpop.permute.xlu0 %662
    %v665 = vsel %vm488, %v657, 0
    %v668 = vsel %vm488, %v659, 0
    %v671 = vsel %vm488, %v661, 0
    %v674 = vsel %vm488, %v663, 0
    %676 = vmatprep.subr.bf16.mxu0 0
    %677 = vmatpush1.bf16.xpose.msra.mxu0 0
    %678 = vmatprep.subr.bf16.mxu0 0
    %679 = vmatpush1.bf16.xpose.msra.mxu0 0
    %680 = vmatprep.subr.bf16.mxu0 0
    %681 = vmatpush1.bf16.xpose.msra.mxu0 0
    %682 = vmatprep.subr.bf16.mxu0 0
    %683 = vmatpush1.bf16.xpose.msra.mxu0 0
    %684 = vmatprep.subr.bf16.mxu0 0
    %685 = vmatpush1.bf16.xpose.msra.mxu0 0
    %686 = vmatprep.subr.bf16.mxu0 0
    %687 = vmatpush1.bf16.xpose.msra.mxu0 0
    %688 = vmatprep.subr.bf16.mxu0 0
    %689 = vmatpush1.bf16.xpose.msra.mxu0 %v674
    %690 = vmatprep.subr.bf16.mxu0 0
    %691 = vmatpush1.bf16.xpose.msra.mxu0 %v671
    %692 = vmatprep.subr.bf16.mxu0 0
    %693 = vmatpush2.bf16.xpose.msra.mxu0 0
    %694 = vmatprep.subr.bf16.mxu0 0
    %695 = vmatpush2.bf16.xpose.msra.mxu0 0
    %696 = vmatprep.subr.bf16.mxu0 0
    %697 = vmatpush2.bf16.xpose.msra.mxu0 0
    %698 = vmatprep.subr.bf16.mxu0 0
    %699 = vmatpush2.bf16.xpose.msra.mxu0 0
    %700 = vmatprep.subr.bf16.mxu0 0
    %701 = vmatpush2.bf16.xpose.msra.mxu0 0
    %702 = vmatprep.subr.bf16.mxu0 0
    %703 = vmatpush2.bf16.xpose.msra.mxu0 0
    %704 = vmatprep.subr.bf16.mxu0 0
    %705 = vmatpush2.bf16.xpose.msra.mxu0 0
    %706 = vmatprep.subr.bf16.mxu0 0
    %707 = vmatpush2.bf16.xpose.msra.mxu0 0
    %708 = vmatprep.mubr.bf16.mxu0 0
    %709 = vmatmul.mubr.bf16.gmra.mxu0 %v665
    %v710 = vpop.f32.mrf.mxu0
    %v711 = vadd.f32 %v181, %v710
    %v712 = vpop.f32.mrf.mxu0
    %v713 = vpop.f32.mrf.mxu0
    %v714 = vadd.f32 %v182, %v713
    %v715 = vpop.f32.mrf.mxu0
    %716 = vmatprep.mubr.bf16.mxu0 0
    %717 = vmatmul.mubr.bf16.gmra.mxu0 %v668
    %v718 = vpop.f32.mrf.mxu0
    %v719 = vadd.f32 %v183, %v718
    %v720 = vpop.f32.mrf.mxu0
    %v721 = vpop.f32.mrf.mxu0
    %v722 = vadd.f32 %v184, %v721
    %v723 = vpop.f32.mrf.mxu0
    %724 = vdwg.mxu0
    %v725 = vsel %vm550, %v711, -inf
    %726 = vmax.xlane.f32.xlu0 %v725
    %v727 = vpop.xlane.xlu0 %726
    %v728 = vsel %vm550, %v714, -inf
    %729 = vmax.xlane.f32.xlu0 %v728
    %v730 = vpop.xlane.xlu0 %729
    %v731 = vsel %vm550, %v719, -inf
    %732 = vmax.xlane.f32.xlu0 %v731
    %v733 = vpop.xlane.xlu0 %732
    %v734 = vsel %vm550, %v722, -inf
    %735 = vmax.xlane.f32.xlu0 %v734
    %v736 = vpop.xlane.xlu0 %735
    %v737 = vsub.f32 %v711, %v727
    %v738 = vsub.f32 %v714, %v730
    %v739 = vsub.f32 %v719, %v733
    %v740 = vsub.f32 %v722, %v736
    %v741 = vmul.f32 %v737, 1.442695
    %v742 = vpow.pop %v741
    %v743 = vmul.f32 %v738, 1.442695
    %v744 = vpow.pop %v743
    %v745 = vmul.f32 %v739, 1.442695
    %v746 = vpow.pop %v745
    %v747 = vmul.f32 %v740, 1.442695
    %v748 = vpow.pop %v747
    %v749 = vsel %vm550, %v742, 0.0
    %750 = vadd.xlane.f32.xlu0 %v749
    %v751 = vpop.xlane.xlu0 %750
    %v752 = vsel %vm550, %v744, 0.0
    %753 = vadd.xlane.f32.xlu0 %v752
    %v754 = vpop.xlane.xlu0 %753
    %v755 = vsel %vm550, %v746, 0.0
    %756 = vadd.xlane.f32.xlu0 %v755
    %v757 = vpop.xlane.xlu0 %756
    %v758 = vsel %vm550, %v748, 0.0
    %759 = vadd.xlane.f32.xlu0 %v758
    %v760 = vpop.xlane.xlu0 %759
    %v761 = vrcp.pop %v751
    %v762 = vrcp.pop %v754
    %v763 = vrcp.pop %v757
    %v764 = vrcp.pop %v760
    %v765 = vmul.f32 %v742, %v761
    %v766 = vmul.f32 %v744, %v762
    %v767 = vmul.f32 %v746, %v763
    %v768 = vmul.f32 %v748, %v764
    %v769 = vpack.c.bf16 %v766, %v765
    %v770 = vpack.c.bf16 %v768, %v767
    %773 = vrot.lane.b32.xlu0 %v597, 112
    %v774 = vpop.permute.xlu0 %773
    %775 = vrot.lane.b32.xlu0 %v598, 112
    %v776 = vpop.permute.xlu0 %775
    %v780 = vsel %vm550, %v769, 0
    %v783 = vsel %vm550, %v770, 0
    %785 = vmatprep.subr.bf16.mxu0 0
    %786 = vmatpush1.bf16.msra.mxu0 0
    %787 = vmatprep.subr.bf16.mxu0 0
    %788 = vmatpush1.bf16.msra.mxu0 0
    %789 = vmatprep.subr.bf16.mxu0 0
    %790 = vmatpush1.bf16.msra.mxu0 0
    %791 = vmatprep.subr.bf16.mxu0 0
    %792 = vmatpush1.bf16.msra.mxu0 0
    %793 = vmatprep.subr.bf16.mxu0 0
    %794 = vmatpush1.bf16.msra.mxu0 0
    %795 = vmatprep.subr.bf16.mxu0 0
    %796 = vmatpush1.bf16.msra.mxu0 0
    %797 = vmatprep.subr.bf16.mxu0 0
    %798 = vmatpush1.bf16.msra.mxu0 %v776
    %799 = vmatprep.subr.bf16.mxu0 0
    %800 = vmatpush1.bf16.msra.mxu0 %v774
    %801 = vmatprep.subr.bf16.mxu0 0
    %802 = vmatpush2.bf16.msra.mxu0 0
    %803 = vmatprep.subr.bf16.mxu0 0
    %804 = vmatpush2.bf16.msra.mxu0 0
    %805 = vmatprep.subr.bf16.mxu0 0
    %806 = vmatpush2.bf16.msra.mxu0 0
    %807 = vmatprep.subr.bf16.mxu0 0
    %808 = vmatpush2.bf16.msra.mxu0 0
    %809 = vmatprep.subr.bf16.mxu0 0
    %810 = vmatpush2.bf16.msra.mxu0 0
    %811 = vmatprep.subr.bf16.mxu0 0
    %812 = vmatpush2.bf16.msra.mxu0 0
    %813 = vmatprep.subr.bf16.mxu0 0
    %814 = vmatpush2.bf16.msra.mxu0 0
    %815 = vmatprep.subr.bf16.mxu0 0
    %816 = vmatpush2.bf16.msra.mxu0 0
    %817 = vmatprep.mubr.bf16.mxu0 0
    %818 = vmatmul.mubr.bf16.gmra.mxu0 %v780
    %v819 = vpop.f32.mrf.mxu0
    %v820 = vadd.f32 0.0, %v819
    %v821 = vpop.f32.mrf.mxu0
    %v822 = vpop.f32.mrf.mxu0
    %v823 = vadd.f32 0.0, %v822
    %v824 = vpop.f32.mrf.mxu0
    %825 = vmatprep.mubr.bf16.mxu0 0
    %826 = vmatmul.mubr.bf16.gmra.mxu0 %v783
    %v827 = vpop.f32.mrf.mxu0
    %v828 = vadd.f32 0.0, %v827
    %v829 = vpop.f32.mrf.mxu0
    %v830 = vpop.f32.mrf.mxu0
    %v831 = vadd.f32 0.0, %v830
    %v832 = vpop.f32.mrf.mxu0
    %833 = vdwg.mxu0
    %834 = vrot.lane.b32.xlu0 %v478, 96
    %v835 = vpop.permute.xlu0 %834
    %836 = vrot.lane.b32.xlu0 %v479, 96
    %v837 = vpop.permute.xlu0 %836
    %838 = vrot.lane.b32.xlu0 %v480, 32
    %v839 = vpop.permute.xlu0 %838
    %840 = vrot.lane.b32.xlu0 %v481, 32
    %v841 = vpop.permute.xlu0 %840
    %v843 = vsel %vm488, %v835, 0
    %v846 = vsel %vm488, %v837, 0
    %v849 = vsel %vm488, %v839, 0
    %v852 = vsel %vm488, %v841, 0
    %854 = vmatprep.subr.bf16.mxu0 0
    %855 = vmatpush1.bf16.xpose.msra.mxu0 0
    %856 = vmatprep.subr.bf16.mxu0 0
    %857 = vmatpush1.bf16.xpose.msra.mxu0 0
    %858 = vmatprep.subr.bf16.mxu0 0
    %859 = vmatpush1.bf16.xpose.msra.mxu0 0
    %860 = vmatprep.subr.bf16.mxu0 0
    %861 = vmatpush1.bf16.xpose.msra.mxu0 0
    %862 = vmatprep.subr.bf16.mxu0 0
    %863 = vmatpush1.bf16.xpose.msra.mxu0 0
    %864 = vmatprep.subr.bf16.mxu0 0
    %865 = vmatpush1.bf16.xpose.msra.mxu0 0
    %866 = vmatprep.subr.bf16.mxu0 0
    %867 = vmatpush1.bf16.xpose.msra.mxu0 %v852
    %868 = vmatprep.subr.bf16.mxu0 0
    %869 = vmatpush1.bf16.xpose.msra.mxu0 %v849
    %870 = vmatprep.subr.bf16.mxu0 0
    %871 = vmatpush2.bf16.xpose.msra.mxu0 0
    %872 = vmatprep.subr.bf16.mxu0 0
    %873 = vmatpush2.bf16.xpose.msra.mxu0 0
    %874 = vmatprep.subr.bf16.mxu0 0
    %875 = vmatpush2.bf16.xpose.msra.mxu0 0
    %876 = vmatprep.subr.bf16.mxu0 0
    %877 = vmatpush2.bf16.xpose.msra.mxu0 0
    %878 = vmatprep.subr.bf16.mxu0 0
    %879 = vmatpush2.bf16.xpose.msra.mxu0 0
    %880 = vmatprep.subr.bf16.mxu0 0
    %881 = vmatpush2.bf16.xpose.msra.mxu0 0
    %882 = vmatprep.subr.bf16.mxu0 0
    %883 = vmatpush2.bf16.xpose.msra.mxu0 0
    %884 = vmatprep.subr.bf16.mxu0 0
    %885 = vmatpush2.bf16.xpose.msra.mxu0 0
    %886 = vmatprep.mubr.bf16.mxu0 0
    %887 = vmatmul.mubr.bf16.gmra.mxu0 %v843
    %v888 = vpop.f32.mrf.mxu0
    %v889 = vadd.f32 %v181, %v888
    %v890 = vpop.f32.mrf.mxu0
    %v891 = vpop.f32.mrf.mxu0
    %v892 = vadd.f32 %v182, %v891
    %v893 = vpop.f32.mrf.mxu0
    %894 = vmatprep.mubr.bf16.mxu0 0
    %895 = vmatmul.mubr.bf16.gmra.mxu0 %v846
    %v896 = vpop.f32.mrf.mxu0
    %v897 = vadd.f32 %v183, %v896
    %v898 = vpop.f32.mrf.mxu0
    %v899 = vpop.f32.mrf.mxu0
    %v900 = vadd.f32 %v184, %v899
    %v901 = vpop.f32.mrf.mxu0
    %902 = vdwg.mxu0
    %v903 = vsel %vm550, %v889, -inf
    %904 = vmax.xlane.f32.xlu0 %v903
    %v905 = vpop.xlane.xlu0 %904
    %v906 = vsel %vm550, %v892, -inf
    %907 = vmax.xlane.f32.xlu0 %v906
    %v908 = vpop.xlane.xlu0 %907
    %v909 = vsel %vm550, %v897, -inf
    %910 = vmax.xlane.f32.xlu0 %v909
    %v911 = vpop.xlane.xlu0 %910
    %v912 = vsel %vm550, %v900, -inf
    %913 = vmax.xlane.f32.xlu0 %v912
    %v914 = vpop.xlane.xlu0 %913
    %v915 = vsub.f32 %v889, %v905
    %v916 = vsub.f32 %v892, %v908
    %v917 = vsub.f32 %v897, %v911
    %v918 = vsub.f32 %v900, %v914
    %v919 = vmul.f32 %v915, 1.442695
    %v920 = vpow.pop %v919
    %v921 = vmul.f32 %v916, 1.442695
    %v922 = vpow.pop %v921
    %v923 = vmul.f32 %v917, 1.442695
    %v924 = vpow.pop %v923
    %v925 = vmul.f32 %v918, 1.442695
    %v926 = vpow.pop %v925
    %v927 = vsel %vm550, %v920, 0.0
    %928 = vadd.xlane.f32.xlu0 %v927
    %v929 = vpop.xlane.xlu0 %928
    %v930 = vsel %vm550, %v922, 0.0
    %931 = vadd.xlane.f32.xlu0 %v930
    %v932 = vpop.xlane.xlu0 %931
    %v933 = vsel %vm550, %v924, 0.0
    %934 = vadd.xlane.f32.xlu0 %v933
    %v935 = vpop.xlane.xlu0 %934
    %v936 = vsel %vm550, %v926, 0.0
    %937 = vadd.xlane.f32.xlu0 %v936
    %v938 = vpop.xlane.xlu0 %937
    %v939 = vrcp.pop %v929
    %v940 = vrcp.pop %v932
    %v941 = vrcp.pop %v935
    %v942 = vrcp.pop %v938
    %v943 = vmul.f32 %v920, %v939
    %v944 = vmul.f32 %v922, %v940
    %v945 = vmul.f32 %v924, %v941
    %v946 = vmul.f32 %v926, %v942
    %v947 = vpack.c.bf16 %v944, %v943
    %v948 = vpack.c.bf16 %v946, %v945
    %949 = vrot.lane.b32.xlu0 %v597, 96
    %v950 = vpop.permute.xlu0 %949
    %951 = vrot.lane.b32.xlu0 %v598, 96
    %v952 = vpop.permute.xlu0 %951
    %v956 = vsel %vm550, %v947, 0
    %v959 = vsel %vm550, %v948, 0
    %961 = vmatprep.subr.bf16.mxu0 0
    %962 = vmatpush1.bf16.msra.mxu0 0
    %963 = vmatprep.subr.bf16.mxu0 0
    %964 = vmatpush1.bf16.msra.mxu0 0
    %965 = vmatprep.subr.bf16.mxu0 0
    %966 = vmatpush1.bf16.msra.mxu0 0
    %967 = vmatprep.subr.bf16.mxu0 0
    %968 = vmatpush1.bf16.msra.mxu0 0
    %969 = vmatprep.subr.bf16.mxu0 0
    %970 = vmatpush1.bf16.msra.mxu0 0
    %971 = vmatprep.subr.bf16.mxu0 0
    %972 = vmatpush1.bf16.msra.mxu0 0
    %973 = vmatprep.subr.bf16.mxu0 0
    %974 = vmatpush1.bf16.msra.mxu0 %v952
    %975 = vmatprep.subr.bf16.mxu0 0
    %976 = vmatpush1.bf16.msra.mxu0 %v950
    %977 = vmatprep.subr.bf16.mxu0 0
    %978 = vmatpush2.bf16.msra.mxu0 0
    %979 = vmatprep.subr.bf16.mxu0 0
    %980 = vmatpush2.bf16.msra.mxu0 0
    %981 = vmatprep.subr.bf16.mxu0 0
    %982 = vmatpush2.bf16.msra.mxu0 0
    %983 = vmatprep.subr.bf16.mxu0 0
    %984 = vmatpush2.bf16.msra.mxu0 0
    %985 = vmatprep.subr.bf16.mxu0 0
    %986 = vmatpush2.bf16.msra.mxu0 0
    %987 = vmatprep.subr.bf16.mxu0 0
    %988 = vmatpush2.bf16.msra.mxu0 0
    %989 = vmatprep.subr.bf16.mxu0 0
    %990 = vmatpush2.bf16.msra.mxu0 0
    %991 = vmatprep.subr.bf16.mxu0 0
    %992 = vmatpush2.bf16.msra.mxu0 0
    %993 = vmatprep.mubr.bf16.mxu0 0
    %994 = vmatmul.mubr.bf16.gmra.mxu0 %v956
    %v995 = vpop.f32.mrf.mxu0
    %v996 = vadd.f32 0.0, %v995
    %v997 = vpop.f32.mrf.mxu0
    %v998 = vpop.f32.mrf.mxu0
    %v999 = vadd.f32 0.0, %v998
    %v1000 = vpop.f32.mrf.mxu0
    %1001 = vmatprep.mubr.bf16.mxu0 0
    %1002 = vmatmul.mubr.bf16.gmra.mxu0 %v959
    %v1003 = vpop.f32.mrf.mxu0
    %v1004 = vadd.f32 0.0, %v1003
    %v1005 = vpop.f32.mrf.mxu0
    %v1006 = vpop.f32.mrf.mxu0
    %v1007 = vadd.f32 0.0, %v1006
    %v1008 = vpop.f32.mrf.mxu0
    %1009 = vdwg.mxu0
    %1010 = vrot.lane.b32.xlu0 %v478, 80
    %v1011 = vpop.permute.xlu0 %1010
    %1012 = vrot.lane.b32.xlu0 %v479, 80
    %v1013 = vpop.permute.xlu0 %1012
    %1014 = vrot.lane.b32.xlu0 %v480, 16
    %v1015 = vpop.permute.xlu0 %1014
    %1016 = vrot.lane.b32.xlu0 %v481, 16
    %v1017 = vpop.permute.xlu0 %1016
    %v1019 = vsel %vm488, %v1011, 0
    %v1022 = vsel %vm488, %v1013, 0
    %v1025 = vsel %vm488, %v1015, 0
    %v1028 = vsel %vm488, %v1017, 0
    %1030 = vmatprep.subr.bf16.mxu0 0
    %1031 = vmatpush1.bf16.xpose.msra.mxu0 0
    %1032 = vmatprep.subr.bf16.mxu0 0
    %1033 = vmatpush1.bf16.xpose.msra.mxu0 0
    %1034 = vmatprep.subr.bf16.mxu0 0
    %1035 = vmatpush1.bf16.xpose.msra.mxu0 0
    %1036 = vmatprep.subr.bf16.mxu0 0
    %1037 = vmatpush1.bf16.xpose.msra.mxu0 0
    %1038 = vmatprep.subr.bf16.mxu0 0
    %1039 = vmatpush1.bf16.xpose.msra.mxu0 0
    %1040 = vmatprep.subr.bf16.mxu0 0
    %1041 = vmatpush1.bf16.xpose.msra.mxu0 0
    %1042 = vmatprep.subr.bf16.mxu0 0
    %1043 = vmatpush1.bf16.xpose.msra.mxu0 %v1028
    %1044 = vmatprep.subr.bf16.mxu0 0
    %1045 = vmatpush1.bf16.xpose.msra.mxu0 %v1025
    %1046 = vmatprep.subr.bf16.mxu0 0
    %1047 = vmatpush2.bf16.xpose.msra.mxu0 0
    %1048 = vmatprep.subr.bf16.mxu0 0
    %1049 = vmatpush2.bf16.xpose.msra.mxu0 0
    %1050 = vmatprep.subr.bf16.mxu0 0
    %1051 = vmatpush2.bf16.xpose.msra.mxu0 0
    %1052 = vmatprep.subr.bf16.mxu0 0
    %1053 = vmatpush2.bf16.xpose.msra.mxu0 0
    %1054 = vmatprep.subr.bf16.mxu0 0
    %1055 = vmatpush2.bf16.xpose.msra.mxu0 0
    %1056 = vmatprep.subr.bf16.mxu0 0
    %1057 = vmatpush2.bf16.xpose.msra.mxu0 0
    %1058 = vmatprep.subr.bf16.mxu0 0
    %1059 = vmatpush2.bf16.xpose.msra.mxu0 0
    %1060 = vmatprep.subr.bf16.mxu0 0
    %1061 = vmatpush2.bf16.xpose.msra.mxu0 0
    %1062 = vmatprep.mubr.bf16.mxu0 0
    %1063 = vmatmul.mubr.bf16.gmra.mxu0 %v1019
    %v1064 = vpop.f32.mrf.mxu0
    %v1065 = vadd.f32 %v181, %v1064
    %v1066 = vpop.f32.mrf.mxu0
    %v1067 = vpop.f32.mrf.mxu0
    %v1068 = vadd.f32 %v182, %v1067
    %v1069 = vpop.f32.mrf.mxu0
    %1070 = vmatprep.mubr.bf16.mxu0 0
    %1071 = vmatmul.mubr.bf16.gmra.mxu0 %v1022
    %v1072 = vpop.f32.mrf.mxu0
    %v1073 = vadd.f32 %v183, %v1072
    %v1074 = vpop.f32.mrf.mxu0
    %v1075 = vpop.f32.mrf.mxu0
    %v1076 = vadd.f32 %v184, %v1075
    %v1077 = vpop.f32.mrf.mxu0
    %1078 = vdwg.mxu0
    %v1079 = vsel %vm550, %v1065, -inf
    %1080 = vmax.xlane.f32.xlu0 %v1079
    %v1081 = vpop.xlane.xlu0 %1080
    %v1082 = vsel %vm550, %v1068, -inf
    %1083 = vmax.xlane.f32.xlu0 %v1082
    %v1084 = vpop.xlane.xlu0 %1083
    %v1085 = vsel %vm550, %v1073, -inf
    %1086 = vmax.xlane.f32.xlu0 %v1085
    %v1087 = vpop.xlane.xlu0 %1086
    %v1088 = vsel %vm550, %v1076, -inf
    %1089 = vmax.xlane.f32.xlu0 %v1088
    %v1090 = vpop.xlane.xlu0 %1089
    %v1091 = vsub.f32 %v1065, %v1081
    %v1092 = vsub.f32 %v1068, %v1084
    %v1093 = vsub.f32 %v1073, %v1087
    %v1094 = vsub.f32 %v1076, %v1090
    %v1095 = vmul.f32 %v1091, 1.442695
    %v1096 = vpow.pop %v1095
    %v1097 = vmul.f32 %v1092, 1.442695
    %v1098 = vpow.pop %v1097
    %v1099 = vmul.f32 %v1093, 1.442695
    %v1100 = vpow.pop %v1099
    %v1101 = vmul.f32 %v1094, 1.442695
    %v1102 = vpow.pop %v1101
    %v1103 = vsel %vm550, %v1096, 0.0
    %1104 = vadd.xlane.f32.xlu0 %v1103
    %v1105 = vpop.xlane.xlu0 %1104
    %v1106 = vsel %vm550, %v1098, 0.0
    %1107 = vadd.xlane.f32.xlu0 %v1106
    %v1108 = vpop.xlane.xlu0 %1107
    %v1109 = vsel %vm550, %v1100, 0.0
    %1110 = vadd.xlane.f32.xlu0 %v1109
    %v1111 = vpop.xlane.xlu0 %1110
    %v1112 = vsel %vm550, %v1102, 0.0
    %1113 = vadd.xlane.f32.xlu0 %v1112
    %v1114 = vpop.xlane.xlu0 %1113
    %v1115 = vrcp.pop %v1105
    %v1116 = vrcp.pop %v1108
    %v1117 = vrcp.pop %v1111
    %v1118 = vrcp.pop %v1114
    %v1119 = vmul.f32 %v1096, %v1115
    %v1120 = vmul.f32 %v1098, %v1116
    %v1121 = vmul.f32 %v1100, %v1117
    %v1122 = vmul.f32 %v1102, %v1118
    %v1123 = vpack.c.bf16 %v1120, %v1119
    %v1124 = vpack.c.bf16 %v1122, %v1121
    %1125 = vrot.lane.b32.xlu0 %v597, 80
    %v1126 = vpop.permute.xlu0 %1125
    %1127 = vrot.lane.b32.xlu0 %v598, 80
    %v1128 = vpop.permute.xlu0 %1127
    %v1132 = vsel %vm550, %v1123, 0
    %v1135 = vsel %vm550, %v1124, 0
    %1137 = vmatprep.subr.bf16.mxu0 0
    %1138 = vmatpush1.bf16.msra.mxu0 0
    %1139 = vmatprep.subr.bf16.mxu0 0
    %1140 = vmatpush1.bf16.msra.mxu0 0
    %1141 = vmatprep.subr.bf16.mxu0 0
    %1142 = vmatpush1.bf16.msra.mxu0 0
    %1143 = vmatprep.subr.bf16.mxu0 0
    %1144 = vmatpush1.bf16.msra.mxu0 0
    %1145 = vmatprep.subr.bf16.mxu0 0
    %1146 = vmatpush1.bf16.msra.mxu0 0
    %1147 = vmatprep.subr.bf16.mxu0 0
    %1148 = vmatpush1.bf16.msra.mxu0 0
    %1149 = vmatprep.subr.bf16.mxu0 0
    %1150 = vmatpush1.bf16.msra.mxu0 %v1128
    %1151 = vmatprep.subr.bf16.mxu0 0
    %1152 = vmatpush1.bf16.msra.mxu0 %v1126
    %1153 = vmatprep.subr.bf16.mxu0 0
    %1154 = vmatpush2.bf16.msra.mxu0 0
    %1155 = vmatprep.subr.bf16.mxu0 0
    %1156 = vmatpush2.bf16.msra.mxu0 0
    %1157 = vmatprep.subr.bf16.mxu0 0
    %1158 = vmatpush2.bf16.msra.mxu0 0
    %1159 = vmatprep.subr.bf16.mxu0 0
    %1160 = vmatpush2.bf16.msra.mxu0 0
    %1161 = vmatprep.subr.bf16.mxu0 0
    %1162 = vmatpush2.bf16.msra.mxu0 0
    %1163 = vmatprep.subr.bf16.mxu0 0
    %1164 = vmatpush2.bf16.msra.mxu0 0
    %1165 = vmatprep.subr.bf16.mxu0 0
    %1166 = vmatpush2.bf16.msra.mxu0 0
    %1167 = vmatprep.subr.bf16.mxu0 0
    %1168 = vmatpush2.bf16.msra.mxu0 0
    %1169 = vmatprep.mubr.bf16.mxu0 0
    %1170 = vmatmul.mubr.bf16.gmra.mxu0 %v1132
    %v1171 = vpop.f32.mrf.mxu0
    %v1172 = vadd.f32 0.0, %v1171
    %v1173 = vpop.f32.mrf.mxu0
    %v1174 = vpop.f32.mrf.mxu0
    %v1175 = vadd.f32 0.0, %v1174
    %v1176 = vpop.f32.mrf.mxu0
    %1177 = vmatprep.mubr.bf16.mxu0 0
    %1178 = vmatmul.mubr.bf16.gmra.mxu0 %v1135
    %v1179 = vpop.f32.mrf.mxu0
    %v1180 = vadd.f32 0.0, %v1179
    %v1181 = vpop.f32.mrf.mxu0
    %v1182 = vpop.f32.mrf.mxu0
    %v1183 = vadd.f32 0.0, %v1182
    %v1184 = vpop.f32.mrf.mxu0
    %1185 = vdwg.mxu0
    %1190 = vrot.lane.b32.xlu0 %v820, 16
    %v1191 = vpop.permute.xlu0 %1190
    %1192 = vrot.lane.b32.xlu0 %v823, 16
    %v1193 = vpop.permute.xlu0 %1192
    %1194 = vrot.lane.b32.xlu0 %v828, 16
    %v1195 = vpop.permute.xlu0 %1194
    %1196 = vrot.lane.b32.xlu0 %v831, 16
    %v1197 = vpop.permute.xlu0 %1196
    %1206 = vrot.lane.b32.xlu0 %v996, 32
    %v1207 = vpop.permute.xlu0 %1206
    %1208 = vrot.lane.b32.xlu0 %v999, 32
    %v1209 = vpop.permute.xlu0 %1208
    %1210 = vrot.lane.b32.xlu0 %v1004, 32
    %v1211 = vpop.permute.xlu0 %1210
    %1212 = vrot.lane.b32.xlu0 %v1007, 32
    %v1213 = vpop.permute.xlu0 %1212
    %1222 = vrot.lane.b32.xlu0 %v1172, 48
    %v1223 = vpop.permute.xlu0 %1222
    %1224 = vrot.lane.b32.xlu0 %v1175, 48
    %v1225 = vpop.permute.xlu0 %1224
    %1226 = vrot.lane.b32.xlu0 %v1180, 48
    %v1227 = vpop.permute.xlu0 %1226
    %1228 = vrot.lane.b32.xlu0 %v1183, 48
    %v1229 = vpop.permute.xlu0 %1228
    %v1234 = vsel %vm488, %v640, %v1191
    %v1235 = vsel %vm488, %v643, %v1193
    %v1236 = vsel %vm488, %v648, %v1195
    %v1237 = vsel %vm488, %v651, %v1197
    %v1238 = vsel %vm550, %v1234, %v1207
    %v1239 = vsel %vm550, %v1235, %v1209
    %v1240 = vsel %vm550, %v1236, %v1211
    %v1241 = vsel %vm550, %v1237, %v1213
    %vm1242 = vcmask 392192
    %v1243 = vsel %vm1242, %v1238, %v1223
    %v1244 = vsel %vm1242, %v1239, %v1225
    %v1245 = vsel %vm1242, %v1240, %v1227
    %v1246 = vsel %vm1242, %v1241, %v1229
    %v1247 = vld [vmem:[%s17] sm:$0xff]
    %v1248 = vld [vmem:[%s17 + $0x8] sm:$0xff]
    %v1249 = vld [vmem:[%s17 + $0x10] sm:$0xff]
    %v1250 = vld [vmem:[%s17 + $0x18] sm:$0xff]
    %v1251 = vld [vmem:[%s17 + $0x20] sm:$0xff]
    %v1252 = vld [vmem:[%s17 + $0x28] sm:$0xff]
    %v1253 = vld [vmem:[%s17 + $0x30] sm:$0xff]
    %v1254 = vld [vmem:[%s17 + $0x38] sm:$0xff]
    %v1255 = vpack.c.bf16 %v1244, %v1243
    %v1256 = vpack.c.bf16 %v1246, %v1245
    %v1257 = vpack.c.bf16 %v1248, %v1247
    %v1258 = vpack.c.bf16 %v1250, %v1249
    %v1259 = vpack.c.bf16 %v1252, %v1251
    %v1260 = vpack.c.bf16 %v1254, %v1253
    %v1262 = vsel %vm240, %v1255, 0
    %v1265 = vsel %vm240, %v1256, 0
    %1267 = vmatprep.subr.bf16.mxu0 0
    %1268 = vmatpush1.bf16.msra.mxu0 0
    %1269 = vmatprep.subr.bf16.mxu0 0
    %1270 = vmatpush1.bf16.msra.mxu0 0
    %1271 = vmatprep.subr.bf16.mxu0 0
    %1272 = vmatpush1.bf16.msra.mxu0 0
    %1273 = vmatprep.subr.bf16.mxu0 0
    %1274 = vmatpush1.bf16.msra.mxu0 0
    %1275 = vmatprep.subr.bf16.mxu0 0
    %1276 = vmatpush1.bf16.msra.mxu0 %v1260
    %1277 = vmatprep.subr.bf16.mxu0 0
    %1278 = vmatpush1.bf16.msra.mxu0 %v1259
    %1279 = vmatprep.subr.bf16.mxu0 0
    %1280 = vmatpush1.bf16.msra.mxu0 %v1258
    %1281 = vmatprep.subr.bf16.mxu0 0
    %1282 = vmatpush1.bf16.msra.mxu0 %v1257
    %1283 = vmatprep.subr.bf16.mxu0 0
    %1284 = vmatpush2.bf16.msra.mxu0 0
    %1285 = vmatprep.subr.bf16.mxu0 0
    %1286 = vmatpush2.bf16.msra.mxu0 0
    %1287 = vmatprep.subr.bf16.mxu0 0
    %1288 = vmatpush2.bf16.msra.mxu0 0
    %1289 = vmatprep.subr.bf16.mxu0 0
    %1290 = vmatpush2.bf16.msra.mxu0 0
    %1291 = vmatprep.subr.bf16.mxu0 0
    %1292 = vmatpush2.bf16.msra.mxu0 0
    %1293 = vmatprep.subr.bf16.mxu0 0
    %1294 = vmatpush2.bf16.msra.mxu0 0
    %1295 = vmatprep.subr.bf16.mxu0 0
    %1296 = vmatpush2.bf16.msra.mxu0 0
    %1297 = vmatprep.subr.bf16.mxu0 0
    %1298 = vmatpush2.bf16.msra.mxu0 0
    %1299 = vmatprep.mubr.bf16.mxu0 0
    %1300 = vmatmul.mubr.bf16.gmra.mxu0 %v1262
    %v1301 = vpop.f32.mrf.mxu0
    %v1302 = vadd.f32 0.0, %v1301
    %v1303 = vpop.f32.mrf.mxu0
    %v1304 = vpop.f32.mrf.mxu0
    %v1305 = vadd.f32 0.0, %v1304
    %v1306 = vpop.f32.mrf.mxu0
    %1307 = vmatprep.mubr.bf16.mxu0 0
    %1308 = vmatmul.mubr.bf16.gmra.mxu0 %v1265
    %v1309 = vpop.f32.mrf.mxu0
    %v1310 = vadd.f32 0.0, %v1309
    %v1311 = vpop.f32.mrf.mxu0
    %v1312 = vpop.f32.mrf.mxu0
    %v1313 = vadd.f32 0.0, %v1312
    %v1314 = vpop.f32.mrf.mxu0
    %1315 = vdwg.mxu0
    %v1316 = vadd.f32 %v298, %v1302
    %v1317 = vadd.f32 %v299, %v1305
    %v1318 = vadd.f32 %v300, %v1310
    %v1319 = vadd.f32 %v301, %v1313
    %v1320 = vld [vmem:[%s19] sm:$0x1]
    %v1322 = vlaneseq
    %v1323 = vshrl.u32 %v1322, 7
    %v1324 = vsub.s32 0, %v1323
    %v1325 = vrot.slane %v1320, %v1324
    %v1327 = vadd.f32 %v1316, %v1325
    %v1328 = vadd.f32 %v1317, %v1325
    %v1329 = vadd.f32 %v1318, %v1325
    %v1330 = vadd.f32 %v1319, %v1325
    %v1331 = vld [vmem:[%s21] sm:$0x1]
    %v1332 = vld [vmem:[%s23] sm:$0x1]
    %v1333 = vsel %vm240, %v1327, 0.0
    %1334 = vadd.xlane.f32.xlu0 %v1333
    %v1335 = vpop.xlane.xlu0 %1334
    %v1336 = vsel %vm240, %v1328, 0.0
    %1337 = vadd.xlane.f32.xlu0 %v1336
    %v1338 = vpop.xlane.xlu0 %1337
    %v1339 = vsel %vm240, %v1329, 0.0
    %1340 = vadd.xlane.f32.xlu0 %v1339
    %v1341 = vpop.xlane.xlu0 %1340
    %v1342 = vsel %vm240, %v1330, 0.0
    %1343 = vadd.xlane.f32.xlu0 %v1342
    %v1344 = vpop.xlane.xlu0 %1343
    %v1345 = vmul.f32 %v1335, %v316
    %v1346 = vmul.f32 %v1338, %v316
    %v1347 = vmul.f32 %v1341, %v316
    %v1348 = vmul.f32 %v1344, %v316
    %v1349 = vsub.f32 %v1327, %v1345
    %v1350 = vsub.f32 %v1328, %v1346
    %v1351 = vsub.f32 %v1329, %v1347
    %v1352 = vsub.f32 %v1330, %v1348
    %v1353 = vmul.f32 %v1349, %v1349
    %v1354 = vmul.f32 %v1350, %v1350
    %v1355 = vmul.f32 %v1351, %v1351
    %v1356 = vmul.f32 %v1352, %v1352
    %v1357 = vsel %vm240, %v1353, 0.0
    %1358 = vadd.xlane.f32.xlu0 %v1357
    %v1359 = vpop.xlane.xlu0 %1358
    %v1360 = vsel %vm240, %v1354, 0.0
    %1361 = vadd.xlane.f32.xlu0 %v1360
    %v1362 = vpop.xlane.xlu0 %1361
    %v1363 = vsel %vm240, %v1355, 0.0
    %1364 = vadd.xlane.f32.xlu0 %v1363
    %v1365 = vpop.xlane.xlu0 %1364
    %v1366 = vsel %vm240, %v1356, 0.0
    %1367 = vadd.xlane.f32.xlu0 %v1366
    %v1368 = vpop.xlane.xlu0 %1367
    %v1369 = vmul.f32 %v1359, %v316
    %v1370 = vmul.f32 %v1362, %v316
    %v1371 = vmul.f32 %v1365, %v316
    %v1372 = vmul.f32 %v1368, %v316
    %v1373 = vadd.f32 %v1369, 1e-05
    %v1374 = vadd.f32 %v1370, 1e-05
    %v1375 = vadd.f32 %v1371, 1e-05
    %v1376 = vadd.f32 %v1372, 1e-05
    %v1377 = vrsqrt.pop %v1373
    %v1378 = vrsqrt.pop %v1374
    %v1379 = vrsqrt.pop %v1375
    %v1380 = vrsqrt.pop %v1376
    %v1381 = vmul.f32 %v1349, %v1377
    %v1382 = vmul.f32 %v1350, %v1378
    %v1383 = vmul.f32 %v1351, %v1379
    %v1384 = vmul.f32 %v1352, %v1380
    %v1386 = vlaneseq
    %v1387 = vshrl.u32 %v1386, 7
    %v1388 = vsub.s32 0, %v1387
    %v1389 = vrot.slane %v1331, %v1388
    %v1391 = vmul.f32 %v1381, %v1389
    %v1392 = vmul.f32 %v1382, %v1389
    %v1393 = vmul.f32 %v1383, %v1389
    %v1394 = vmul.f32 %v1384, %v1389
    %v1396 = vlaneseq
    %v1397 = vshrl.u32 %v1396, 7
    %v1398 = vsub.s32 0, %v1397
    %v1399 = vrot.slane %v1332, %v1398
    %v1401 = vadd.f32 %v1391, %v1399
    %v1402 = vadd.f32 %v1392, %v1399
    %v1403 = vadd.f32 %v1393, %v1399
    %v1404 = vadd.f32 %v1394, %v1399
    %v1405 = vld [vmem:[%s25] sm:$0xff]
    %v1406 = vld [vmem:[%s25 + $0x8] sm:$0xff]
    %v1407 = vld [vmem:[%s25 + $0x10] sm:$0xff]
    %v1408 = vld [vmem:[%s25 + $0x18] sm:$0xff]
    %v1409 = vld [vmem:[%s25 + $0x20] sm:$0xff]
    %v1410 = vld [vmem:[%s25 + $0x28] sm:$0xff]
    %v1411 = vld [vmem:[%s25 + $0x30] sm:$0xff]
    %v1412 = vld [vmem:[%s25 + $0x38] sm:$0xff]
    %v1413 = vpack.c.bf16 %v1402, %v1401
    %v1414 = vpack.c.bf16 %v1404, %v1403
    %v1415 = vpack.c.bf16 %v1406, %v1405
    %v1416 = vpack.c.bf16 %v1408, %v1407
    %v1417 = vpack.c.bf16 %v1410, %v1409
    %v1418 = vpack.c.bf16 %v1412, %v1411
    %v1419 = vld [vmem:[%s27] sm:$0x1]
    %v1421 = vlaneseq
    %v1422 = vshrl.u32 %v1421, 7
    %v1423 = vsub.s32 0, %v1422
    %v1424 = vrot.slane %v1419, %v1423
    %v1427 = vsel %vm240, %v1413, 0
    %v1430 = vsel %vm240, %v1414, 0
    %1432 = vmatprep.subr.bf16.mxu0 0
    %1433 = vmatpush1.bf16.msra.mxu0 0
    %1434 = vmatprep.subr.bf16.mxu0 0
    %1435 = vmatpush1.bf16.msra.mxu0 0
    %1436 = vmatprep.subr.bf16.mxu0 0
    %1437 = vmatpush1.bf16.msra.mxu0 0
    %1438 = vmatprep.subr.bf16.mxu0 0
    %1439 = vmatpush1.bf16.msra.mxu0 0
    %1440 = vmatprep.subr.bf16.mxu0 0
    %1441 = vmatpush1.bf16.msra.mxu0 %v1418
    %1442 = vmatprep.subr.bf16.mxu0 0
    %1443 = vmatpush1.bf16.msra.mxu0 %v1417
    %1444 = vmatprep.subr.bf16.mxu0 0
    %1445 = vmatpush1.bf16.msra.mxu0 %v1416
    %1446 = vmatprep.subr.bf16.mxu0 0
    %1447 = vmatpush1.bf16.msra.mxu0 %v1415
    %1448 = vmatprep.subr.bf16.mxu0 0
    %1449 = vmatpush2.bf16.msra.mxu0 0
    %1450 = vmatprep.subr.bf16.mxu0 0
    %1451 = vmatpush2.bf16.msra.mxu0 0
    %1452 = vmatprep.subr.bf16.mxu0 0
    %1453 = vmatpush2.bf16.msra.mxu0 0
    %1454 = vmatprep.subr.bf16.mxu0 0
    %1455 = vmatpush2.bf16.msra.mxu0 0
    %1456 = vmatprep.subr.bf16.mxu0 0
    %1457 = vmatpush2.bf16.msra.mxu0 0
    %1458 = vmatprep.subr.bf16.mxu0 0
    %1459 = vmatpush2.bf16.msra.mxu0 0
    %1460 = vmatprep.subr.bf16.mxu0 0
    %1461 = vmatpush2.bf16.msra.mxu0 0
    %1462 = vmatprep.subr.bf16.mxu0 0
    %1463 = vmatpush2.bf16.msra.mxu0 0
    %1464 = vmatprep.mubr.bf16.mxu0 0
    %1465 = vmatmul.mubr.bf16.gmra.mxu0 %v1427
    %v1466 = vpop.f32.mrf.mxu0
    %v1467 = vadd.f32 %v1424, %v1466
    %v1468 = vpop.f32.mrf.mxu0
    %v1469 = vpop.f32.mrf.mxu0
    %v1470 = vadd.f32 %v1424, %v1469
    %v1471 = vpop.f32.mrf.mxu0
    %1472 = vmatprep.mubr.bf16.mxu0 0
    %1473 = vmatmul.mubr.bf16.gmra.mxu0 %v1430
    %v1474 = vpop.f32.mrf.mxu0
    %v1475 = vadd.f32 %v1424, %v1474
    %v1476 = vpop.f32.mrf.mxu0
    %v1477 = vpop.f32.mrf.mxu0
    %v1478 = vadd.f32 %v1424, %v1477
    %v1479 = vpop.f32.mrf.mxu0
    %1480 = vdwg.mxu0
    %v1481 = vmul.f32 %v1467, 0.5
    %v1482 = vmul.f32 %v1470, 0.5
    %v1483 = vmul.f32 %v1475, 0.5
    %v1484 = vmul.f32 %v1478, 0.5
    %v1485 = vmul.f32 %v1467, 0.70710677
    %v1486 = vmul.f32 %v1470, 0.70710677
    %v1487 = vmul.f32 %v1475, 0.70710677
    %v1488 = vmul.f32 %v1478, 0.70710677
    %vm1489 = vcmp.lt.f32.partialorder %v1485, 0.0
    %vm1490 = vcmp.lt.f32.partialorder %v1486, 0.0
    %vm1491 = vcmp.lt.f32.partialorder %v1487, 0.0
    %vm1492 = vcmp.lt.f32.partialorder %v1488, 0.0
    %v1493 = vsel %vm1489, -1.0, 1.0
    %v1494 = vsel %vm1490, -1.0, 1.0
    %v1495 = vsel %vm1491, -1.0, 1.0
    %v1496 = vsel %vm1492, -1.0, 1.0
    %v1497 = vand.u32 2147483647, %v1485
    %v1498 = vand.u32 2147483647, %v1486
    %v1499 = vand.u32 2147483647, %v1487
    %v1500 = vand.u32 2147483647, %v1488
    %v1501 = vmul.f32 %v1497, 0.3275911
    %v1502 = vmul.f32 %v1498, 0.3275911
    %v1503 = vmul.f32 %v1499, 0.3275911
    %v1504 = vmul.f32 %v1500, 0.3275911
    %v1505 = vadd.f32 %v1501, 1.0
    %v1506 = vadd.f32 %v1502, 1.0
    %v1507 = vadd.f32 %v1503, 1.0
    %v1508 = vadd.f32 %v1504, 1.0
    %v1509 = vrcp.pop %v1505
    %v1510 = vmul.f32 1.0, %v1509
    %v1511 = vrcp.pop %v1506
    %v1512 = vmul.f32 1.0, %v1511
    %v1513 = vrcp.pop %v1507
    %v1514 = vmul.f32 1.0, %v1513
    %v1515 = vrcp.pop %v1508
    %v1516 = vmul.f32 1.0, %v1515
    %v1517 = vmul.f32 %v1510, 1.0614054
    %v1518 = vmul.f32 %v1512, 1.0614054
    %v1519 = vmul.f32 %v1514, 1.0614054
    %v1520 = vmul.f32 %v1516, 1.0614054
    %v1521 = vadd.f32 %v1517, -1.4531521
    %v1522 = vadd.f32 %v1518, -1.4531521
    %v1523 = vadd.f32 %v1519, -1.4531521
    %v1524 = vadd.f32 %v1520, -1.4531521
    %v1525 = vmul.f32 %v1510, %v1521
    %v1526 = vmul.f32 %v1512, %v1522
    %v1527 = vmul.f32 %v1514, %v1523
    %v1528 = vmul.f32 %v1516, %v1524
    %v1529 = vadd.f32 %v1525, 1.4214138
    %v1530 = vadd.f32 %v1526, 1.4214138
    %v1531 = vadd.f32 %v1527, 1.4214138
    %v1532 = vadd.f32 %v1528, 1.4214138
    %v1533 = vmul.f32 %v1510, %v1529
    %v1534 = vmul.f32 %v1512, %v1530
    %v1535 = vmul.f32 %v1514, %v1531
    %v1536 = vmul.f32 %v1516, %v1532
    %v1537 = vadd.f32 %v1533, -0.28449672
    %v1538 = vadd.f32 %v1534, -0.28449672
    %v1539 = vadd.f32 %v1535, -0.28449672
    %v1540 = vadd.f32 %v1536, -0.28449672
    %v1541 = vmul.f32 %v1510, %v1537
    %v1542 = vmul.f32 %v1512, %v1538
    %v1543 = vmul.f32 %v1514, %v1539
    %v1544 = vmul.f32 %v1516, %v1540
    %v1545 = vadd.f32 %v1541, 0.2548296
    %v1546 = vadd.f32 %v1542, 0.2548296
    %v1547 = vadd.f32 %v1543, 0.2548296
    %v1548 = vadd.f32 %v1544, 0.2548296
    %v1549 = vmul.f32 %v1510, %v1545
    %v1550 = vmul.f32 %v1512, %v1546
    %v1551 = vmul.f32 %v1514, %v1547
    %v1552 = vmul.f32 %v1516, %v1548
    %v1553 = vsub.f32 0.0, %v1497
    %v1554 = vsub.f32 0.0, %v1498
    %v1555 = vsub.f32 0.0, %v1499
    %v1556 = vsub.f32 0.0, %v1500
    %v1557 = vmul.f32 %v1553, %v1497
    %v1558 = vmul.f32 %v1554, %v1498
    %v1559 = vmul.f32 %v1555, %v1499
    %v1560 = vmul.f32 %v1556, %v1500
    %v1561 = vmul.f32 %v1557, 1.442695
    %v1562 = vpow.pop %v1561
    %v1563 = vmul.f32 %v1558, 1.442695
    %v1564 = vpow.pop %v1563
    %v1565 = vmul.f32 %v1559, 1.442695
    %v1566 = vpow.pop %v1565
    %v1567 = vmul.f32 %v1560, 1.442695
    %v1568 = vpow.pop %v1567
    %v1569 = vmul.f32 %v1549, %v1562
    %v1570 = vmul.f32 %v1550, %v1564
    %v1571 = vmul.f32 %v1551, %v1566
    %v1572 = vmul.f32 %v1552, %v1568
    %v1573 = vsub.f32 1.0, %v1569
    %v1574 = vsub.f32 1.0, %v1570
    %v1575 = vsub.f32 1.0, %v1571
    %v1576 = vsub.f32 1.0, %v1572
    %v1577 = vmul.f32 %v1493, %v1573
    %v1578 = vmul.f32 %v1494, %v1574
    %v1579 = vmul.f32 %v1495, %v1575
    %v1580 = vmul.f32 %v1496, %v1576
    %v1581 = vadd.f32 %v1577, 1.0
    %v1582 = vadd.f32 %v1578, 1.0
    %v1583 = vadd.f32 %v1579, 1.0
    %v1584 = vadd.f32 %v1580, 1.0
    %v1585 = vmul.f32 %v1481, %v1581
    %v1586 = vmul.f32 %v1482, %v1582
    %v1587 = vmul.f32 %v1483, %v1583
    %v1588 = vmul.f32 %v1484, %v1584
    %v1589 = vld [vmem:[%s29] sm:$0xff]
    %v1590 = vld [vmem:[%s29 + $0x8] sm:$0xff]
    %v1591 = vld [vmem:[%s29 + $0x10] sm:$0xff]
    %v1592 = vld [vmem:[%s29 + $0x18] sm:$0xff]
    %v1593 = vld [vmem:[%s29 + $0x20] sm:$0xff]
    %v1594 = vld [vmem:[%s29 + $0x28] sm:$0xff]
    %v1595 = vld [vmem:[%s29 + $0x30] sm:$0xff]
    %v1596 = vld [vmem:[%s29 + $0x38] sm:$0xff]
    %v1597 = vld [vmem:[%s29 + $0x40] sm:$0xff]
    %v1598 = vld [vmem:[%s29 + $0x48] sm:$0xff]
    %v1599 = vld [vmem:[%s29 + $0x50] sm:$0xff]
    %v1600 = vld [vmem:[%s29 + $0x58] sm:$0xff]
    %v1601 = vld [vmem:[%s29 + $0x60] sm:$0xff]
    %v1602 = vld [vmem:[%s29 + $0x68] sm:$0xff]
    %v1603 = vld [vmem:[%s29 + $0x70] sm:$0xff]
    %v1604 = vld [vmem:[%s29 + $0x78] sm:$0xff]
    %v1605 = vpack.c.bf16 %v1586, %v1585
    %v1606 = vpack.c.bf16 %v1588, %v1587
    %v1607 = vpack.c.bf16 %v1590, %v1589
    %v1608 = vpack.c.bf16 %v1592, %v1591
    %v1609 = vpack.c.bf16 %v1594, %v1593
    %v1610 = vpack.c.bf16 %v1596, %v1595
    %v1611 = vpack.c.bf16 %v1598, %v1597
    %v1612 = vpack.c.bf16 %v1600, %v1599
    %v1613 = vpack.c.bf16 %v1602, %v1601
    %v1614 = vpack.c.bf16 %v1604, %v1603
    %1615 = vmatprep.subr.bf16.mxu0 0
    %1616 = vmatpush1.bf16.msra.mxu0 %v1614
    %1617 = vmatprep.subr.bf16.mxu0 0
    %1618 = vmatpush1.bf16.msra.mxu0 %v1613
    %1619 = vmatprep.subr.bf16.mxu0 0
    %1620 = vmatpush1.bf16.msra.mxu0 %v1612
    %1621 = vmatprep.subr.bf16.mxu0 0
    %1622 = vmatpush1.bf16.msra.mxu0 %v1611
    %1623 = vmatprep.subr.bf16.mxu0 0
    %1624 = vmatpush1.bf16.msra.mxu0 %v1610
    %1625 = vmatprep.subr.bf16.mxu0 0
    %1626 = vmatpush1.bf16.msra.mxu0 %v1609
    %1627 = vmatprep.subr.bf16.mxu0 0
    %1628 = vmatpush1.bf16.msra.mxu0 %v1608
    %1629 = vmatprep.subr.bf16.mxu0 0
    %1630 = vmatpush1.bf16.msra.mxu0 %v1607
    %1631 = vmatprep.subr.bf16.mxu0 0
    %1632 = vmatpush2.bf16.msra.mxu0 0
    %1633 = vmatprep.subr.bf16.mxu0 0
    %1634 = vmatpush2.bf16.msra.mxu0 0
    %1635 = vmatprep.subr.bf16.mxu0 0
    %1636 = vmatpush2.bf16.msra.mxu0 0
    %1637 = vmatprep.subr.bf16.mxu0 0
    %1638 = vmatpush2.bf16.msra.mxu0 0
    %1639 = vmatprep.subr.bf16.mxu0 0
    %1640 = vmatpush2.bf16.msra.mxu0 0
    %1641 = vmatprep.subr.bf16.mxu0 0
    %1642 = vmatpush2.bf16.msra.mxu0 0
    %1643 = vmatprep.subr.bf16.mxu0 0
    %1644 = vmatpush2.bf16.msra.mxu0 0
    %1645 = vmatprep.subr.bf16.mxu0 0
    %1646 = vmatpush2.bf16.msra.mxu0 0
    %1647 = vmatprep.mubr.bf16.mxu0 0
    %1648 = vmatmul.mubr.bf16.gmra.mxu0 %v1605
    %v1649 = vpop.f32.mrf.mxu0
    %v1650 = vadd.f32 0.0, %v1649
    %v1651 = vpop.f32.mrf.mxu0
    %v1652 = vpop.f32.mrf.mxu0
    %v1653 = vadd.f32 0.0, %v1652
    %v1654 = vpop.f32.mrf.mxu0
    %1655 = vmatprep.mubr.bf16.mxu0 0
    %1656 = vmatmul.mubr.bf16.gmra.mxu0 %v1606
    %v1657 = vpop.f32.mrf.mxu0
    %v1658 = vadd.f32 0.0, %v1657
    %v1659 = vpop.f32.mrf.mxu0
    %v1660 = vpop.f32.mrf.mxu0
    %v1661 = vadd.f32 0.0, %v1660
    %v1662 = vpop.f32.mrf.mxu0
    %1663 = vdwg.mxu0
    %v1664 = vadd.f32 %v1327, %v1650
    %v1665 = vadd.f32 %v1328, %v1653
    %v1666 = vadd.f32 %v1329, %v1658
    %v1667 = vadd.f32 %v1330, %v1661
    %v1668 = vld [vmem:[%s31] sm:$0x1]
    %v1670 = vlaneseq
    %v1671 = vshrl.u32 %v1670, 7
    %v1672 = vsub.s32 0, %v1671
    %v1673 = vrot.slane %v1668, %v1672
    %v1675 = vadd.f32 %v1664, %v1673
    %v1676 = vadd.f32 %v1665, %v1673
    %v1677 = vadd.f32 %v1666, %v1673
    %v1678 = vadd.f32 %v1667, %v1673
    %v1679 = vld [vmem:[%s33] sm:$0x1]
    %v1680 = vld [vmem:[%s35] sm:$0x1]
    %v1681 = vsel %vm240, %v1675, 0.0
    %1682 = vadd.xlane.f32.xlu0 %v1681
    %v1683 = vpop.xlane.xlu0 %1682
    %v1684 = vsel %vm240, %v1676, 0.0
    %1685 = vadd.xlane.f32.xlu0 %v1684
    %v1686 = vpop.xlane.xlu0 %1685
    %v1687 = vsel %vm240, %v1677, 0.0
    %1688 = vadd.xlane.f32.xlu0 %v1687
    %v1689 = vpop.xlane.xlu0 %1688
    %v1690 = vsel %vm240, %v1678, 0.0
    %1691 = vadd.xlane.f32.xlu0 %v1690
    %v1692 = vpop.xlane.xlu0 %1691
    %v1693 = vmul.f32 %v1683, %v316
    %v1694 = vmul.f32 %v1686, %v316
    %v1695 = vmul.f32 %v1689, %v316
    %v1696 = vmul.f32 %v1692, %v316
    %v1697 = vsub.f32 %v1675, %v1693
    %v1698 = vsub.f32 %v1676, %v1694
    %v1699 = vsub.f32 %v1677, %v1695
    %v1700 = vsub.f32 %v1678, %v1696
    %v1701 = vmul.f32 %v1697, %v1697
    %v1702 = vmul.f32 %v1698, %v1698
    %v1703 = vmul.f32 %v1699, %v1699
    %v1704 = vmul.f32 %v1700, %v1700
    %v1705 = vsel %vm240, %v1701, 0.0
    %1706 = vadd.xlane.f32.xlu0 %v1705
    %v1707 = vpop.xlane.xlu0 %1706
    %v1708 = vsel %vm240, %v1702, 0.0
    %1709 = vadd.xlane.f32.xlu0 %v1708
    %v1710 = vpop.xlane.xlu0 %1709
    %v1711 = vsel %vm240, %v1703, 0.0
    %1712 = vadd.xlane.f32.xlu0 %v1711
    %v1713 = vpop.xlane.xlu0 %1712
    %v1714 = vsel %vm240, %v1704, 0.0
    %1715 = vadd.xlane.f32.xlu0 %v1714
    %v1716 = vpop.xlane.xlu0 %1715
    %v1717 = vmul.f32 %v1707, %v316
    %v1718 = vmul.f32 %v1710, %v316
    %v1719 = vmul.f32 %v1713, %v316
    %v1720 = vmul.f32 %v1716, %v316
    %v1721 = vadd.f32 %v1717, 1e-05
    %v1722 = vadd.f32 %v1718, 1e-05
    %v1723 = vadd.f32 %v1719, 1e-05
    %v1724 = vadd.f32 %v1720, 1e-05
    %v1725 = vrsqrt.pop %v1721
    %v1726 = vrsqrt.pop %v1722
    %v1727 = vrsqrt.pop %v1723
    %v1728 = vrsqrt.pop %v1724
    %v1729 = vmul.f32 %v1697, %v1725
    %v1730 = vmul.f32 %v1698, %v1726
    %v1731 = vmul.f32 %v1699, %v1727
    %v1732 = vmul.f32 %v1700, %v1728
    %v1734 = vlaneseq
    %v1735 = vshrl.u32 %v1734, 7
    %v1736 = vsub.s32 0, %v1735
    %v1737 = vrot.slane %v1679, %v1736
    %v1739 = vmul.f32 %v1729, %v1737
    %v1740 = vmul.f32 %v1730, %v1737
    %v1741 = vmul.f32 %v1731, %v1737
    %v1742 = vmul.f32 %v1732, %v1737
    %v1744 = vlaneseq
    %v1745 = vshrl.u32 %v1744, 7
    %v1746 = vsub.s32 0, %v1745
    %v1747 = vrot.slane %v1680, %v1746
    %v1749 = vadd.f32 %v1739, %v1747
    %v1750 = vadd.f32 %v1740, %v1747
    %v1751 = vadd.f32 %v1741, %v1747
    %v1752 = vadd.f32 %v1742, %v1747
    %v1753 = vld [vmem:[%s37] sm:$0xff]
    %v1754 = vld [vmem:[%s37 + $0x8] sm:$0xff]
    %v1755 = vld [vmem:[%s37 + $0x10] sm:$0xff]
    %v1756 = vld [vmem:[%s37 + $0x18] sm:$0xff]
    %v1757 = vld [vmem:[%s37 + $0x20] sm:$0xff]
    %v1758 = vld [vmem:[%s37 + $0x28] sm:$0xff]
    %v1759 = vld [vmem:[%s37 + $0x30] sm:$0xff]
    %v1760 = vld [vmem:[%s37 + $0x38] sm:$0xff]
    %v1761 = vld [vmem:[%s37 + $0x40] sm:$0xff]
    %v1762 = vld [vmem:[%s37 + $0x48] sm:$0xff]
    %v1763 = vld [vmem:[%s37 + $0x50] sm:$0xff]
    %v1764 = vld [vmem:[%s37 + $0x58] sm:$0xff]
    %v1765 = vld [vmem:[%s37 + $0x60] sm:$0xff]
    %v1766 = vld [vmem:[%s37 + $0x68] sm:$0xff]
    %v1767 = vld [vmem:[%s37 + $0x70] sm:$0xff]
    %v1768 = vld [vmem:[%s37 + $0x78] sm:$0xff]
    %v1769 = vpack.c.bf16 %v1750, %v1749
    %v1770 = vpack.c.bf16 %v1752, %v1751
    %v1771 = vpack.c.bf16 %v1755, %v1753
    %v1772 = vpack.c.bf16 %v1756, %v1754
    %v1773 = vpack.c.bf16 %v1759, %v1757
    %v1774 = vpack.c.bf16 %v1760, %v1758
    %v1775 = vpack.c.bf16 %v1763, %v1761
    %v1776 = vpack.c.bf16 %v1764, %v1762
    %v1777 = vpack.c.bf16 %v1767, %v1765
    %v1778 = vpack.c.bf16 %v1768, %v1766
    %v1779 = vld [vmem:[%s39] sm:$0x3]
    %v1781 = vlaneseq
    %v1782 = vshrl.u32 %v1781, 7
    %v1783 = vsub.s32 0, %v1782
    %v1784 = vrot.slane %v1779, %v1783
    %v1785 = vlaneseq
    %v1786 = vshrl.u32 %v1785, 7
    %v1787 = vsub.s32 1, %v1786
    %v1788 = vrot.slane %v1779, %v1787
    %v1792 = vsel %vm240, %v1769, 0
    %v1795 = vsel %vm240, %v1770, 0
    %1797 = vmatprep.subr.bf16.mxu0 0
    %1798 = vmatpush1.bf16.msra.mxu0 0
    %1799 = vmatprep.subr.bf16.mxu0 0
    %1800 = vmatpush1.bf16.msra.mxu0 0
    %1801 = vmatprep.subr.bf16.mxu0 0
    %1802 = vmatpush1.bf16.msra.mxu0 0
    %1803 = vmatprep.subr.bf16.mxu0 0
    %1804 = vmatpush1.bf16.msra.mxu0 0
    %1805 = vmatprep.subr.bf16.mxu0 %v1778
    %1806 = vmatpush1.bf16.msra.mxu0 %v1777
    %1807 = vmatprep.subr.bf16.mxu0 %v1776
    %1808 = vmatpush1.bf16.msra.mxu0 %v1775
    %1809 = vmatprep.subr.bf16.mxu0 %v1774
    %1810 = vmatpush1.bf16.msra.mxu0 %v1773
    %1811 = vmatprep.subr.bf16.mxu0 %v1772
    %1812 = vmatpush1.bf16.msra.mxu0 %v1771
    %1813 = vmatprep.subr.bf16.mxu0 0
    %1814 = vmatpush2.bf16.msra.mxu0 0
    %1815 = vmatprep.subr.bf16.mxu0 0
    %1816 = vmatpush2.bf16.msra.mxu0 0
    %1817 = vmatprep.subr.bf16.mxu0 0
    %1818 = vmatpush2.bf16.msra.mxu0 0
    %1819 = vmatprep.subr.bf16.mxu0 0
    %1820 = vmatpush2.bf16.msra.mxu0 0
    %1821 = vmatprep.subr.bf16.mxu0 0
    %1822 = vmatpush2.bf16.msra.mxu0 0
    %1823 = vmatprep.subr.bf16.mxu0 0
    %1824 = vmatpush2.bf16.msra.mxu0 0
    %1825 = vmatprep.subr.bf16.mxu0 0
    %1826 = vmatpush2.bf16.msra.mxu0 0
    %1827 = vmatprep.subr.bf16.mxu0 0
    %1828 = vmatpush2.bf16.msra.mxu0 0
    %1829 = vmatprep.mubr.bf16.mxu0 0
    %1830 = vmatmul.mubr.bf16.gmra.mxu0 %v1792
    %v1831 = vpop.f32.mrf.mxu0
    %v1832 = vadd.f32 %v1784, %v1831
    %v1833 = vpop.f32.mrf.mxu0
    %v1834 = vadd.f32 %v1788, %v1833
    %v1835 = vpop.f32.mrf.mxu0
    %v1836 = vadd.f32 %v1784, %v1835
    %v1837 = vpop.f32.mrf.mxu0
    %v1838 = vadd.f32 %v1788, %v1837
    %1839 = vmatprep.mubr.bf16.mxu0 0
    %1840 = vmatmul.mubr.bf16.gmra.mxu0 %v1795
    %v1841 = vpop.f32.mrf.mxu0
    %v1842 = vadd.f32 %v1784, %v1841
    %v1843 = vpop.f32.mrf.mxu0
    %v1844 = vadd.f32 %v1788, %v1843
    %v1845 = vpop.f32.mrf.mxu0
    %v1846 = vadd.f32 %v1784, %v1845
    %v1847 = vpop.f32.mrf.mxu0
    %v1848 = vadd.f32 %v1788, %v1847
    %1849 = vdwg.mxu0
    %v1850 = vmul.f32 %v1832, 0.25
    %v1851 = vmul.f32 %v1836, 0.25
    %v1852 = vmul.f32 %v1842, 0.25
    %v1853 = vmul.f32 %v1846, 0.25
    %v1854 = vpack.c.bf16 %v1851, %v1850
    %v1855 = vpack.c.bf16 %v1853, %v1852
    %v1856 = vpack.c.bf16 %v1836, %v1832
    %v1857 = vpack.c.bf16 %v1846, %v1842
    %1860 = vrot.lane.b32.xlu0 %v1856, 64
    %v1861 = vpop.permute.xlu0 %1860
    %1862 = vrot.lane.b32.xlu0 %v1857, 64
    %v1863 = vpop.permute.xlu0 %1862
    %v1865 = vsel %vm488, %v1854, 0
    %v1868 = vsel %vm488, %v1855, 0
    %v1871 = vsel %vm488, %v1861, 0
    %v1874 = vsel %vm488, %v1863, 0
    %1876 = vmatprep.subr.bf16.mxu0 0
    %1877 = vmatpush1.bf16.xpose.msra.mxu0 0
    %1878 = vmatprep.subr.bf16.mxu0 0
    %1879 = vmatpush1.bf16.xpose.msra.mxu0 0
    %1880 = vmatprep.subr.bf16.mxu0 0
    %1881 = vmatpush1.bf16.xpose.msra.mxu0 0
    %1882 = vmatprep.subr.bf16.mxu0 0
    %1883 = vmatpush1.bf16.xpose.msra.mxu0 0
    %1884 = vmatprep.subr.bf16.mxu0 0
    %1885 = vmatpush1.bf16.xpose.msra.mxu0 0
    %1886 = vmatprep.subr.bf16.mxu0 0
    %1887 = vmatpush1.bf16.xpose.msra.mxu0 0
    %1888 = vmatprep.subr.bf16.mxu0 0
    %1889 = vmatpush1.bf16.xpose.msra.mxu0 %v1874
    %1890 = vmatprep.subr.bf16.mxu0 0
    %1891 = vmatpush1.bf16.xpose.msra.mxu0 %v1871
    %1892 = vmatprep.subr.bf16.mxu0 0
    %1893 = vmatpush2.bf16.xpose.msra.mxu0 0
    %1894 = vmatprep.subr.bf16.mxu0 0
    %1895 = vmatpush2.bf16.xpose.msra.mxu0 0
    %1896 = vmatprep.subr.bf16.mxu0 0
    %1897 = vmatpush2.bf16.xpose.msra.mxu0 0
    %1898 = vmatprep.subr.bf16.mxu0 0
    %1899 = vmatpush2.bf16.xpose.msra.mxu0 0
    %1900 = vmatprep.subr.bf16.mxu0 0
    %1901 = vmatpush2.bf16.xpose.msra.mxu0 0
    %1902 = vmatprep.subr.bf16.mxu0 0
    %1903 = vmatpush2.bf16.xpose.msra.mxu0 0
    %1904 = vmatprep.subr.bf16.mxu0 0
    %1905 = vmatpush2.bf16.xpose.msra.mxu0 0
    %1906 = vmatprep.subr.bf16.mxu0 0
    %1907 = vmatpush2.bf16.xpose.msra.mxu0 0
    %1908 = vmatprep.mubr.bf16.mxu0 0
    %1909 = vmatmul.mubr.bf16.gmra.mxu0 %v1865
    %v1910 = vpop.f32.mrf.mxu0
    %v1911 = vadd.f32 %v177, %v1910
    %v1912 = vpop.f32.mrf.mxu0
    %v1913 = vpop.f32.mrf.mxu0
    %v1914 = vadd.f32 %v178, %v1913
    %v1915 = vpop.f32.mrf.mxu0
    %1916 = vmatprep.mubr.bf16.mxu0 0
    %1917 = vmatmul.mubr.bf16.gmra.mxu0 %v1868
    %v1918 = vpop.f32.mrf.mxu0
    %v1919 = vadd.f32 %v179, %v1918
    %v1920 = vpop.f32.mrf.mxu0
    %v1921 = vpop.f32.mrf.mxu0
    %v1922 = vadd.f32 %v180, %v1921
    %v1923 = vpop.f32.mrf.mxu0
    %1924 = vdwg.mxu0
    %v1925 = vsel %vm550, %v1911, -inf
    %1926 = vmax.xlane.f32.xlu0 %v1925
    %v1927 = vpop.xlane.xlu0 %1926
    %v1928 = vsel %vm550, %v1914, -inf
    %1929 = vmax.xlane.f32.xlu0 %v1928
    %v1930 = vpop.xlane.xlu0 %1929
    %v1931 = vsel %vm550, %v1919, -inf
    %1932 = vmax.xlane.f32.xlu0 %v1931
    %v1933 = vpop.xlane.xlu0 %1932
    %v1934 = vsel %vm550, %v1922, -inf
    %1935 = vmax.xlane.f32.xlu0 %v1934
    %v1936 = vpop.xlane.xlu0 %1935
    %v1937 = vsub.f32 %v1911, %v1927
    %v1938 = vsub.f32 %v1914, %v1930
    %v1939 = vsub.f32 %v1919, %v1933
    %v1940 = vsub.f32 %v1922, %v1936
    %v1941 = vmul.f32 %v1937, 1.442695
    %v1942 = vpow.pop %v1941
    %v1943 = vmul.f32 %v1938, 1.442695
    %v1944 = vpow.pop %v1943
    %v1945 = vmul.f32 %v1939, 1.442695
    %v1946 = vpow.pop %v1945
    %v1947 = vmul.f32 %v1940, 1.442695
    %v1948 = vpow.pop %v1947
    %v1949 = vsel %vm550, %v1942, 0.0
    %1950 = vadd.xlane.f32.xlu0 %v1949
    %v1951 = vpop.xlane.xlu0 %1950
    %v1952 = vsel %vm550, %v1944, 0.0
    %1953 = vadd.xlane.f32.xlu0 %v1952
    %v1954 = vpop.xlane.xlu0 %1953
    %v1955 = vsel %vm550, %v1946, 0.0
    %1956 = vadd.xlane.f32.xlu0 %v1955
    %v1957 = vpop.xlane.xlu0 %1956
    %v1958 = vsel %vm550, %v1948, 0.0
    %1959 = vadd.xlane.f32.xlu0 %v1958
    %v1960 = vpop.xlane.xlu0 %1959
    %v1961 = vrcp.pop %v1951
    %v1962 = vrcp.pop %v1954
    %v1963 = vrcp.pop %v1957
    %v1964 = vrcp.pop %v1960
    %v1965 = vmul.f32 %v1942, %v1961
    %v1966 = vmul.f32 %v1944, %v1962
    %v1967 = vmul.f32 %v1946, %v1963
    %v1968 = vmul.f32 %v1948, %v1964
    %v1969 = vpack.c.bf16 %v1966, %v1965
    %v1970 = vpack.c.bf16 %v1968, %v1967
    %v1971 = vpack.c.bf16 %v1838, %v1834
    %v1972 = vpack.c.bf16 %v1848, %v1844
    %v1974 = vsel %vm550, %v1969, 0
    %v1977 = vsel %vm550, %v1970, 0
    %1979 = vmatprep.subr.bf16.mxu0 0
    %1980 = vmatpush1.bf16.msra.mxu0 0
    %1981 = vmatprep.subr.bf16.mxu0 0
    %1982 = vmatpush1.bf16.msra.mxu0 0
    %1983 = vmatprep.subr.bf16.mxu0 0
    %1984 = vmatpush1.bf16.msra.mxu0 0
    %1985 = vmatprep.subr.bf16.mxu0 0
    %1986 = vmatpush1.bf16.msra.mxu0 0
    %1987 = vmatprep.subr.bf16.mxu0 0
    %1988 = vmatpush1.bf16.msra.mxu0 0
    %1989 = vmatprep.subr.bf16.mxu0 0
    %1990 = vmatpush1.bf16.msra.mxu0 0
    %1991 = vmatprep.subr.bf16.mxu0 0
    %1992 = vmatpush1.bf16.msra.mxu0 %v1972
    %1993 = vmatprep.subr.bf16.mxu0 0
    %1994 = vmatpush1.bf16.msra.mxu0 %v1971
    %1995 = vmatprep.subr.bf16.mxu0 0
    %1996 = vmatpush2.bf16.msra.mxu0 0
    %1997 = vmatprep.subr.bf16.mxu0 0
    %1998 = vmatpush2.bf16.msra.mxu0 0
    %1999 = vmatprep.subr.bf16.mxu0 0
    %2000 = vmatpush2.bf16.msra.mxu0 0
    %2001 = vmatprep.subr.bf16.mxu0 0
    %2002 = vmatpush2.bf16.msra.mxu0 0
    %2003 = vmatprep.subr.bf16.mxu0 0
    %2004 = vmatpush2.bf16.msra.mxu0 0
    %2005 = vmatprep.subr.bf16.mxu0 0
    %2006 = vmatpush2.bf16.msra.mxu0 0
    %2007 = vmatprep.subr.bf16.mxu0 0
    %2008 = vmatpush2.bf16.msra.mxu0 0
    %2009 = vmatprep.subr.bf16.mxu0 0
    %2010 = vmatpush2.bf16.msra.mxu0 0
    %2011 = vmatprep.mubr.bf16.mxu0 0
    %2012 = vmatmul.mubr.bf16.gmra.mxu0 %v1974
    %v2013 = vpop.f32.mrf.mxu0
    %v2014 = vadd.f32 0.0, %v2013
    %v2015 = vpop.f32.mrf.mxu0
    %v2016 = vpop.f32.mrf.mxu0
    %v2017 = vadd.f32 0.0, %v2016
    %v2018 = vpop.f32.mrf.mxu0
    %2019 = vmatprep.mubr.bf16.mxu0 0
    %2020 = vmatmul.mubr.bf16.gmra.mxu0 %v1977
    %v2021 = vpop.f32.mrf.mxu0
    %v2022 = vadd.f32 0.0, %v2021
    %v2023 = vpop.f32.mrf.mxu0
    %v2024 = vpop.f32.mrf.mxu0
    %v2025 = vadd.f32 0.0, %v2024
    %v2026 = vpop.f32.mrf.mxu0
    %2027 = vdwg.mxu0
    %2030 = vrot.lane.b32.xlu0 %v1854, 112
    %v2031 = vpop.permute.xlu0 %2030
    %2032 = vrot.lane.b32.xlu0 %v1855, 112
    %v2033 = vpop.permute.xlu0 %2032
    %2034 = vrot.lane.b32.xlu0 %v1856, 48
    %v2035 = vpop.permute.xlu0 %2034
    %2036 = vrot.lane.b32.xlu0 %v1857, 48
    %v2037 = vpop.permute.xlu0 %2036
    %v2039 = vsel %vm488, %v2031, 0
    %v2042 = vsel %vm488, %v2033, 0
    %v2045 = vsel %vm488, %v2035, 0
    %v2048 = vsel %vm488, %v2037, 0
    %2050 = vmatprep.subr.bf16.mxu0 0
    %2051 = vmatpush1.bf16.xpose.msra.mxu0 0
    %2052 = vmatprep.subr.bf16.mxu0 0
    %2053 = vmatpush1.bf16.xpose.msra.mxu0 0
    %2054 = vmatprep.subr.bf16.mxu0 0
    %2055 = vmatpush1.bf16.xpose.msra.mxu0 0
    %2056 = vmatprep.subr.bf16.mxu0 0
    %2057 = vmatpush1.bf16.xpose.msra.mxu0 0
    %2058 = vmatprep.subr.bf16.mxu0 0
    %2059 = vmatpush1.bf16.xpose.msra.mxu0 0
    %2060 = vmatprep.subr.bf16.mxu0 0
    %2061 = vmatpush1.bf16.xpose.msra.mxu0 0
    %2062 = vmatprep.subr.bf16.mxu0 0
    %2063 = vmatpush1.bf16.xpose.msra.mxu0 %v2048
    %2064 = vmatprep.subr.bf16.mxu0 0
    %2065 = vmatpush1.bf16.xpose.msra.mxu0 %v2045
    %2066 = vmatprep.subr.bf16.mxu0 0
    %2067 = vmatpush2.bf16.xpose.msra.mxu0 0
    %2068 = vmatprep.subr.bf16.mxu0 0
    %2069 = vmatpush2.bf16.xpose.msra.mxu0 0
    %2070 = vmatprep.subr.bf16.mxu0 0
    %2071 = vmatpush2.bf16.xpose.msra.mxu0 0
    %2072 = vmatprep.subr.bf16.mxu0 0
    %2073 = vmatpush2.bf16.xpose.msra.mxu0 0
    %2074 = vmatprep.subr.bf16.mxu0 0
    %2075 = vmatpush2.bf16.xpose.msra.mxu0 0
    %2076 = vmatprep.subr.bf16.mxu0 0
    %2077 = vmatpush2.bf16.xpose.msra.mxu0 0
    %2078 = vmatprep.subr.bf16.mxu0 0
    %2079 = vmatpush2.bf16.xpose.msra.mxu0 0
    %2080 = vmatprep.subr.bf16.mxu0 0
    %2081 = vmatpush2.bf16.xpose.msra.mxu0 0
    %2082 = vmatprep.mubr.bf16.mxu0 0
    %2083 = vmatmul.mubr.bf16.gmra.mxu0 %v2039
    %v2084 = vpop.f32.mrf.mxu0
    %v2085 = vadd.f32 %v177, %v2084
    %v2086 = vpop.f32.mrf.mxu0
    %v2087 = vpop.f32.mrf.mxu0
    %v2088 = vadd.f32 %v178, %v2087
    %v2089 = vpop.f32.mrf.mxu0
    %2090 = vmatprep.mubr.bf16.mxu0 0
    %2091 = vmatmul.mubr.bf16.gmra.mxu0 %v2042
    %v2092 = vpop.f32.mrf.mxu0
    %v2093 = vadd.f32 %v179, %v2092
    %v2094 = vpop.f32.mrf.mxu0
    %v2095 = vpop.f32.mrf.mxu0
    %v2096 = vadd.f32 %v180, %v2095
    %v2097 = vpop.f32.mrf.mxu0
    %2098 = vdwg.mxu0
    %v2099 = vsel %vm550, %v2085, -inf
    %2100 = vmax.xlane.f32.xlu0 %v2099
    %v2101 = vpop.xlane.xlu0 %2100
    %v2102 = vsel %vm550, %v2088, -inf
    %2103 = vmax.xlane.f32.xlu0 %v2102
    %v2104 = vpop.xlane.xlu0 %2103
    %v2105 = vsel %vm550, %v2093, -inf
    %2106 = vmax.xlane.f32.xlu0 %v2105
    %v2107 = vpop.xlane.xlu0 %2106
    %v2108 = vsel %vm550, %v2096, -inf
    %2109 = vmax.xlane.f32.xlu0 %v2108
    %v2110 = vpop.xlane.xlu0 %2109
    %v2111 = vsub.f32 %v2085, %v2101
    %v2112 = vsub.f32 %v2088, %v2104
    %v2113 = vsub.f32 %v2093, %v2107
    %v2114 = vsub.f32 %v2096, %v2110
    %v2115 = vmul.f32 %v2111, 1.442695
    %v2116 = vpow.pop %v2115
    %v2117 = vmul.f32 %v2112, 1.442695
    %v2118 = vpow.pop %v2117
    %v2119 = vmul.f32 %v2113, 1.442695
    %v2120 = vpow.pop %v2119
    %v2121 = vmul.f32 %v2114, 1.442695
    %v2122 = vpow.pop %v2121
    %v2123 = vsel %vm550, %v2116, 0.0
    %2124 = vadd.xlane.f32.xlu0 %v2123
    %v2125 = vpop.xlane.xlu0 %2124
    %v2126 = vsel %vm550, %v2118, 0.0
    %2127 = vadd.xlane.f32.xlu0 %v2126
    %v2128 = vpop.xlane.xlu0 %2127
    %v2129 = vsel %vm550, %v2120, 0.0
    %2130 = vadd.xlane.f32.xlu0 %v2129
    %v2131 = vpop.xlane.xlu0 %2130
    %v2132 = vsel %vm550, %v2122, 0.0
    %2133 = vadd.xlane.f32.xlu0 %v2132
    %v2134 = vpop.xlane.xlu0 %2133
    %v2135 = vrcp.pop %v2125
    %v2136 = vrcp.pop %v2128
    %v2137 = vrcp.pop %v2131
    %v2138 = vrcp.pop %v2134
    %v2139 = vmul.f32 %v2116, %v2135
    %v2140 = vmul.f32 %v2118, %v2136
    %v2141 = vmul.f32 %v2120, %v2137
    %v2142 = vmul.f32 %v2122, %v2138
    %v2143 = vpack.c.bf16 %v2140, %v2139
    %v2144 = vpack.c.bf16 %v2142, %v2141
    %2147 = vrot.lane.b32.xlu0 %v1971, 112
    %v2148 = vpop.permute.xlu0 %2147
    %2149 = vrot.lane.b32.xlu0 %v1972, 112
    %v2150 = vpop.permute.xlu0 %2149
    %v2154 = vsel %vm550, %v2143, 0
    %v2157 = vsel %vm550, %v2144, 0
    %2159 = vmatprep.subr.bf16.mxu0 0
    %2160 = vmatpush1.bf16.msra.mxu0 0
    %2161 = vmatprep.subr.bf16.mxu0 0
    %2162 = vmatpush1.bf16.msra.mxu0 0
    %2163 = vmatprep.subr.bf16.mxu0 0
    %2164 = vmatpush1.bf16.msra.mxu0 0
    %2165 = vmatprep.subr.bf16.mxu0 0
    %2166 = vmatpush1.bf16.msra.mxu0 0
    %2167 = vmatprep.subr.bf16.mxu0 0
    %2168 = vmatpush1.bf16.msra.mxu0 0
    %2169 = vmatprep.subr.bf16.mxu0 0
    %2170 = vmatpush1.bf16.msra.mxu0 0
    %2171 = vmatprep.subr.bf16.mxu0 0
    %2172 = vmatpush1.bf16.msra.mxu0 %v2150
    %2173 = vmatprep.subr.bf16.mxu0 0
    %2174 = vmatpush1.bf16.msra.mxu0 %v2148
    %2175 = vmatprep.subr.bf16.mxu0 0
    %2176 = vmatpush2.bf16.msra.mxu0 0
    %2177 = vmatprep.subr.bf16.mxu0 0
    %2178 = vmatpush2.bf16.msra.mxu0 0
    %2179 = vmatprep.subr.bf16.mxu0 0
    %2180 = vmatpush2.bf16.msra.mxu0 0
    %2181 = vmatprep.subr.bf16.mxu0 0
    %2182 = vmatpush2.bf16.msra.mxu0 0
    %2183 = vmatprep.subr.bf16.mxu0 0
    %2184 = vmatpush2.bf16.msra.mxu0 0
    %2185 = vmatprep.subr.bf16.mxu0 0
    %2186 = vmatpush2.bf16.msra.mxu0 0
    %2187 = vmatprep.subr.bf16.mxu0 0
    %2188 = vmatpush2.bf16.msra.mxu0 0
    %2189 = vmatprep.subr.bf16.mxu0 0
    %2190 = vmatpush2.bf16.msra.mxu0 0
    %2191 = vmatprep.mubr.bf16.mxu0 0
    %2192 = vmatmul.mubr.bf16.gmra.mxu0 %v2154
    %v2193 = vpop.f32.mrf.mxu0
    %v2194 = vadd.f32 0.0, %v2193
    %v2195 = vpop.f32.mrf.mxu0
    %v2196 = vpop.f32.mrf.mxu0
    %v2197 = vadd.f32 0.0, %v2196
    %v2198 = vpop.f32.mrf.mxu0
    %2199 = vmatprep.mubr.bf16.mxu0 0
    %2200 = vmatmul.mubr.bf16.gmra.mxu0 %v2157
    %v2201 = vpop.f32.mrf.mxu0
    %v2202 = vadd.f32 0.0, %v2201
    %v2203 = vpop.f32.mrf.mxu0
    %v2204 = vpop.f32.mrf.mxu0
    %v2205 = vadd.f32 0.0, %v2204
    %v2206 = vpop.f32.mrf.mxu0
    %2207 = vdwg.mxu0
    %2208 = vrot.lane.b32.xlu0 %v1854, 96
    %v2209 = vpop.permute.xlu0 %2208
    %2210 = vrot.lane.b32.xlu0 %v1855, 96
    %v2211 = vpop.permute.xlu0 %2210
    %2212 = vrot.lane.b32.xlu0 %v1856, 32
    %v2213 = vpop.permute.xlu0 %2212
    %2214 = vrot.lane.b32.xlu0 %v1857, 32
    %v2215 = vpop.permute.xlu0 %2214
    %v2217 = vsel %vm488, %v2209, 0
    %v2220 = vsel %vm488, %v2211, 0
    %v2223 = vsel %vm488, %v2213, 0
    %v2226 = vsel %vm488, %v2215, 0
    %2228 = vmatprep.subr.bf16.mxu0 0
    %2229 = vmatpush1.bf16.xpose.msra.mxu0 0
    %2230 = vmatprep.subr.bf16.mxu0 0
    %2231 = vmatpush1.bf16.xpose.msra.mxu0 0
    %2232 = vmatprep.subr.bf16.mxu0 0
    %2233 = vmatpush1.bf16.xpose.msra.mxu0 0
    %2234 = vmatprep.subr.bf16.mxu0 0
    %2235 = vmatpush1.bf16.xpose.msra.mxu0 0
    %2236 = vmatprep.subr.bf16.mxu0 0
    %2237 = vmatpush1.bf16.xpose.msra.mxu0 0
    %2238 = vmatprep.subr.bf16.mxu0 0
    %2239 = vmatpush1.bf16.xpose.msra.mxu0 0
    %2240 = vmatprep.subr.bf16.mxu0 0
    %2241 = vmatpush1.bf16.xpose.msra.mxu0 %v2226
    %2242 = vmatprep.subr.bf16.mxu0 0
    %2243 = vmatpush1.bf16.xpose.msra.mxu0 %v2223
    %2244 = vmatprep.subr.bf16.mxu0 0
    %2245 = vmatpush2.bf16.xpose.msra.mxu0 0
    %2246 = vmatprep.subr.bf16.mxu0 0
    %2247 = vmatpush2.bf16.xpose.msra.mxu0 0
    %2248 = vmatprep.subr.bf16.mxu0 0
    %2249 = vmatpush2.bf16.xpose.msra.mxu0 0
    %2250 = vmatprep.subr.bf16.mxu0 0
    %2251 = vmatpush2.bf16.xpose.msra.mxu0 0
    %2252 = vmatprep.subr.bf16.mxu0 0
    %2253 = vmatpush2.bf16.xpose.msra.mxu0 0
    %2254 = vmatprep.subr.bf16.mxu0 0
    %2255 = vmatpush2.bf16.xpose.msra.mxu0 0
    %2256 = vmatprep.subr.bf16.mxu0 0
    %2257 = vmatpush2.bf16.xpose.msra.mxu0 0
    %2258 = vmatprep.subr.bf16.mxu0 0
    %2259 = vmatpush2.bf16.xpose.msra.mxu0 0
    %2260 = vmatprep.mubr.bf16.mxu0 0
    %2261 = vmatmul.mubr.bf16.gmra.mxu0 %v2217
    %v2262 = vpop.f32.mrf.mxu0
    %v2263 = vadd.f32 %v177, %v2262
    %v2264 = vpop.f32.mrf.mxu0
    %v2265 = vpop.f32.mrf.mxu0
    %v2266 = vadd.f32 %v178, %v2265
    %v2267 = vpop.f32.mrf.mxu0
    %2268 = vmatprep.mubr.bf16.mxu0 0
    %2269 = vmatmul.mubr.bf16.gmra.mxu0 %v2220
    %v2270 = vpop.f32.mrf.mxu0
    %v2271 = vadd.f32 %v179, %v2270
    %v2272 = vpop.f32.mrf.mxu0
    %v2273 = vpop.f32.mrf.mxu0
    %v2274 = vadd.f32 %v180, %v2273
    %v2275 = vpop.f32.mrf.mxu0
    %2276 = vdwg.mxu0
    %v2277 = vsel %vm550, %v2263, -inf
    %2278 = vmax.xlane.f32.xlu0 %v2277
    %v2279 = vpop.xlane.xlu0 %2278
    %v2280 = vsel %vm550, %v2266, -inf
    %2281 = vmax.xlane.f32.xlu0 %v2280
    %v2282 = vpop.xlane.xlu0 %2281
    %v2283 = vsel %vm550, %v2271, -inf
    %2284 = vmax.xlane.f32.xlu0 %v2283
    %v2285 = vpop.xlane.xlu0 %2284
    %v2286 = vsel %vm550, %v2274, -inf
    %2287 = vmax.xlane.f32.xlu0 %v2286
    %v2288 = vpop.xlane.xlu0 %2287
    %v2289 = vsub.f32 %v2263, %v2279
    %v2290 = vsub.f32 %v2266, %v2282
    %v2291 = vsub.f32 %v2271, %v2285
    %v2292 = vsub.f32 %v2274, %v2288
    %v2293 = vmul.f32 %v2289, 1.442695
    %v2294 = vpow.pop %v2293
    %v2295 = vmul.f32 %v2290, 1.442695
    %v2296 = vpow.pop %v2295
    %v2297 = vmul.f32 %v2291, 1.442695
    %v2298 = vpow.pop %v2297
    %v2299 = vmul.f32 %v2292, 1.442695
    %v2300 = vpow.pop %v2299
    %v2301 = vsel %vm550, %v2294, 0.0
    %2302 = vadd.xlane.f32.xlu0 %v2301
    %v2303 = vpop.xlane.xlu0 %2302
    %v2304 = vsel %vm550, %v2296, 0.0
    %2305 = vadd.xlane.f32.xlu0 %v2304
    %v2306 = vpop.xlane.xlu0 %2305
    %v2307 = vsel %vm550, %v2298, 0.0
    %2308 = vadd.xlane.f32.xlu0 %v2307
    %v2309 = vpop.xlane.xlu0 %2308
    %v2310 = vsel %vm550, %v2300, 0.0
    %2311 = vadd.xlane.f32.xlu0 %v2310
    %v2312 = vpop.xlane.xlu0 %2311
    %v2313 = vrcp.pop %v2303
    %v2314 = vrcp.pop %v2306
    %v2315 = vrcp.pop %v2309
    %v2316 = vrcp.pop %v2312
    %v2317 = vmul.f32 %v2294, %v2313
    %v2318 = vmul.f32 %v2296, %v2314
    %v2319 = vmul.f32 %v2298, %v2315
    %v2320 = vmul.f32 %v2300, %v2316
    %v2321 = vpack.c.bf16 %v2318, %v2317
    %v2322 = vpack.c.bf16 %v2320, %v2319
    %2323 = vrot.lane.b32.xlu0 %v1971, 96
    %v2324 = vpop.permute.xlu0 %2323
    %2325 = vrot.lane.b32.xlu0 %v1972, 96
    %v2326 = vpop.permute.xlu0 %2325
    %v2330 = vsel %vm550, %v2321, 0
    %v2333 = vsel %vm550, %v2322, 0
    %2335 = vmatprep.subr.bf16.mxu0 0
    %2336 = vmatpush1.bf16.msra.mxu0 0
    %2337 = vmatprep.subr.bf16.mxu0 0
    %2338 = vmatpush1.bf16.msra.mxu0 0
    %2339 = vmatprep.subr.bf16.mxu0 0
    %2340 = vmatpush1.bf16.msra.mxu0 0
    %2341 = vmatprep.subr.bf16.mxu0 0
    %2342 = vmatpush1.bf16.msra.mxu0 0
    %2343 = vmatprep.subr.bf16.mxu0 0
    %2344 = vmatpush1.bf16.msra.mxu0 0
    %2345 = vmatprep.subr.bf16.mxu0 0
    %2346 = vmatpush1.bf16.msra.mxu0 0
    %2347 = vmatprep.subr.bf16.mxu0 0
    %2348 = vmatpush1.bf16.msra.mxu0 %v2326
    %2349 = vmatprep.subr.bf16.mxu0 0
    %2350 = vmatpush1.bf16.msra.mxu0 %v2324
    %2351 = vmatprep.subr.bf16.mxu0 0
    %2352 = vmatpush2.bf16.msra.mxu0 0
    %2353 = vmatprep.subr.bf16.mxu0 0
    %2354 = vmatpush2.bf16.msra.mxu0 0
    %2355 = vmatprep.subr.bf16.mxu0 0
    %2356 = vmatpush2.bf16.msra.mxu0 0
    %2357 = vmatprep.subr.bf16.mxu0 0
    %2358 = vmatpush2.bf16.msra.mxu0 0
    %2359 = vmatprep.subr.bf16.mxu0 0
    %2360 = vmatpush2.bf16.msra.mxu0 0
    %2361 = vmatprep.subr.bf16.mxu0 0
    %2362 = vmatpush2.bf16.msra.mxu0 0
    %2363 = vmatprep.subr.bf16.mxu0 0
    %2364 = vmatpush2.bf16.msra.mxu0 0
    %2365 = vmatprep.subr.bf16.mxu0 0
    %2366 = vmatpush2.bf16.msra.mxu0 0
    %2367 = vmatprep.mubr.bf16.mxu0 0
    %2368 = vmatmul.mubr.bf16.gmra.mxu0 %v2330
    %v2369 = vpop.f32.mrf.mxu0
    %v2370 = vadd.f32 0.0, %v2369
    %v2371 = vpop.f32.mrf.mxu0
    %v2372 = vpop.f32.mrf.mxu0
    %v2373 = vadd.f32 0.0, %v2372
    %v2374 = vpop.f32.mrf.mxu0
    %2375 = vmatprep.mubr.bf16.mxu0 0
    %2376 = vmatmul.mubr.bf16.gmra.mxu0 %v2333
    %v2377 = vpop.f32.mrf.mxu0
    %v2378 = vadd.f32 0.0, %v2377
    %v2379 = vpop.f32.mrf.mxu0
    %v2380 = vpop.f32.mrf.mxu0
    %v2381 = vadd.f32 0.0, %v2380
    %v2382 = vpop.f32.mrf.mxu0
    %2383 = vdwg.mxu0
    %2384 = vrot.lane.b32.xlu0 %v1854, 80
    %v2385 = vpop.permute.xlu0 %2384
    %2386 = vrot.lane.b32.xlu0 %v1855, 80
    %v2387 = vpop.permute.xlu0 %2386
    %2388 = vrot.lane.b32.xlu0 %v1856, 16
    %v2389 = vpop.permute.xlu0 %2388
    %2390 = vrot.lane.b32.xlu0 %v1857, 16
    %v2391 = vpop.permute.xlu0 %2390
    %v2393 = vsel %vm488, %v2385, 0
    %v2396 = vsel %vm488, %v2387, 0
    %v2399 = vsel %vm488, %v2389, 0
    %v2402 = vsel %vm488, %v2391, 0
    %2404 = vmatprep.subr.bf16.mxu0 0
    %2405 = vmatpush1.bf16.xpose.msra.mxu0 0
    %2406 = vmatprep.subr.bf16.mxu0 0
    %2407 = vmatpush1.bf16.xpose.msra.mxu0 0
    %2408 = vmatprep.subr.bf16.mxu0 0
    %2409 = vmatpush1.bf16.xpose.msra.mxu0 0
    %2410 = vmatprep.subr.bf16.mxu0 0
    %2411 = vmatpush1.bf16.xpose.msra.mxu0 0
    %2412 = vmatprep.subr.bf16.mxu0 0
    %2413 = vmatpush1.bf16.xpose.msra.mxu0 0
    %2414 = vmatprep.subr.bf16.mxu0 0
    %2415 = vmatpush1.bf16.xpose.msra.mxu0 0
    %2416 = vmatprep.subr.bf16.mxu0 0
    %2417 = vmatpush1.bf16.xpose.msra.mxu0 %v2402
    %2418 = vmatprep.subr.bf16.mxu0 0
    %2419 = vmatpush1.bf16.xpose.msra.mxu0 %v2399
    %2420 = vmatprep.subr.bf16.mxu0 0
    %2421 = vmatpush2.bf16.xpose.msra.mxu0 0
    %2422 = vmatprep.subr.bf16.mxu0 0
    %2423 = vmatpush2.bf16.xpose.msra.mxu0 0
    %2424 = vmatprep.subr.bf16.mxu0 0
    %2425 = vmatpush2.bf16.xpose.msra.mxu0 0
    %2426 = vmatprep.subr.bf16.mxu0 0
    %2427 = vmatpush2.bf16.xpose.msra.mxu0 0
    %2428 = vmatprep.subr.bf16.mxu0 0
    %2429 = vmatpush2.bf16.xpose.msra.mxu0 0
    %2430 = vmatprep.subr.bf16.mxu0 0
    %2431 = vmatpush2.bf16.xpose.msra.mxu0 0
    %2432 = vmatprep.subr.bf16.mxu0 0
    %2433 = vmatpush2.bf16.xpose.msra.mxu0 0
    %2434 = vmatprep.subr.bf16.mxu0 0
    %2435 = vmatpush2.bf16.xpose.msra.mxu0 0
    %2436 = vmatprep.mubr.bf16.mxu0 0
    %2437 = vmatmul.mubr.bf16.gmra.mxu0 %v2393
    %v2438 = vpop.f32.mrf.mxu0
    %v2439 = vadd.f32 %v177, %v2438
    %v2440 = vpop.f32.mrf.mxu0
    %v2441 = vpop.f32.mrf.mxu0
    %v2442 = vadd.f32 %v178, %v2441
    %v2443 = vpop.f32.mrf.mxu0
    %2444 = vmatprep.mubr.bf16.mxu0 0
    %2445 = vmatmul.mubr.bf16.gmra.mxu0 %v2396
    %v2446 = vpop.f32.mrf.mxu0
    %v2447 = vadd.f32 %v179, %v2446
    %v2448 = vpop.f32.mrf.mxu0
    %v2449 = vpop.f32.mrf.mxu0
    %v2450 = vadd.f32 %v180, %v2449
    %v2451 = vpop.f32.mrf.mxu0
    %2452 = vdwg.mxu0
    %v2453 = vsel %vm550, %v2439, -inf
    %2454 = vmax.xlane.f32.xlu0 %v2453
    %v2455 = vpop.xlane.xlu0 %2454
    %v2456 = vsel %vm550, %v2442, -inf
    %2457 = vmax.xlane.f32.xlu0 %v2456
    %v2458 = vpop.xlane.xlu0 %2457
    %v2459 = vsel %vm550, %v2447, -inf
    %2460 = vmax.xlane.f32.xlu0 %v2459
    %v2461 = vpop.xlane.xlu0 %2460
    %v2462 = vsel %vm550, %v2450, -inf
    %2463 = vmax.xlane.f32.xlu0 %v2462
    %v2464 = vpop.xlane.xlu0 %2463
    %v2465 = vsub.f32 %v2439, %v2455
    %v2466 = vsub.f32 %v2442, %v2458
    %v2467 = vsub.f32 %v2447, %v2461
    %v2468 = vsub.f32 %v2450, %v2464
    %v2469 = vmul.f32 %v2465, 1.442695
    %v2470 = vpow.pop %v2469
    %v2471 = vmul.f32 %v2466, 1.442695
    %v2472 = vpow.pop %v2471
    %v2473 = vmul.f32 %v2467, 1.442695
    %v2474 = vpow.pop %v2473
    %v2475 = vmul.f32 %v2468, 1.442695
    %v2476 = vpow.pop %v2475
    %v2477 = vsel %vm550, %v2470, 0.0
    %2478 = vadd.xlane.f32.xlu0 %v2477
    %v2479 = vpop.xlane.xlu0 %2478
    %v2480 = vsel %vm550, %v2472, 0.0
    %2481 = vadd.xlane.f32.xlu0 %v2480
    %v2482 = vpop.xlane.xlu0 %2481
    %v2483 = vsel %vm550, %v2474, 0.0
    %2484 = vadd.xlane.f32.xlu0 %v2483
    %v2485 = vpop.xlane.xlu0 %2484
    %v2486 = vsel %vm550, %v2476, 0.0
    %2487 = vadd.xlane.f32.xlu0 %v2486
    %v2488 = vpop.xlane.xlu0 %2487
    %v2489 = vrcp.pop %v2479
    %v2490 = vrcp.pop %v2482
    %v2491 = vrcp.pop %v2485
    %v2492 = vrcp.pop %v2488
    %v2493 = vmul.f32 %v2470, %v2489
    %v2494 = vmul.f32 %v2472, %v2490
    %v2495 = vmul.f32 %v2474, %v2491
    %v2496 = vmul.f32 %v2476, %v2492
    %v2497 = vpack.c.bf16 %v2494, %v2493
    %v2498 = vpack.c.bf16 %v2496, %v2495
    %2499 = vrot.lane.b32.xlu0 %v1971, 80
    %v2500 = vpop.permute.xlu0 %2499
    %2501 = vrot.lane.b32.xlu0 %v1972, 80
    %v2502 = vpop.permute.xlu0 %2501
    %v2506 = vsel %vm550, %v2497, 0
    %v2509 = vsel %vm550, %v2498, 0
    %2511 = vmatprep.subr.bf16.mxu0 0
    %2512 = vmatpush1.bf16.msra.mxu0 0
    %2513 = vmatprep.subr.bf16.mxu0 0
    %2514 = vmatpush1.bf16.msra.mxu0 0
    %2515 = vmatprep.subr.bf16.mxu0 0
    %2516 = vmatpush1.bf16.msra.mxu0 0
    %2517 = vmatprep.subr.bf16.mxu0 0
    %2518 = vmatpush1.bf16.msra.mxu0 0
    %2519 = vmatprep.subr.bf16.mxu0 0
    %2520 = vmatpush1.bf16.msra.mxu0 0
    %2521 = vmatprep.subr.bf16.mxu0 0
    %2522 = vmatpush1.bf16.msra.mxu0 0
    %2523 = vmatprep.subr.bf16.mxu0 0
    %2524 = vmatpush1.bf16.msra.mxu0 %v2502
    %2525 = vmatprep.subr.bf16.mxu0 0
    %2526 = vmatpush1.bf16.msra.mxu0 %v2500
    %2527 = vmatprep.subr.bf16.mxu0 0
    %2528 = vmatpush2.bf16.msra.mxu0 0
    %2529 = vmatprep.subr.bf16.mxu0 0
    %2530 = vmatpush2.bf16.msra.mxu0 0
    %2531 = vmatprep.subr.bf16.mxu0 0
    %2532 = vmatpush2.bf16.msra.mxu0 0
    %2533 = vmatprep.subr.bf16.mxu0 0
    %2534 = vmatpush2.bf16.msra.mxu0 0
    %2535 = vmatprep.subr.bf16.mxu0 0
    %2536 = vmatpush2.bf16.msra.mxu0 0
    %2537 = vmatprep.subr.bf16.mxu0 0
    %2538 = vmatpush2.bf16.msra.mxu0 0
    %2539 = vmatprep.subr.bf16.mxu0 0
    %2540 = vmatpush2.bf16.msra.mxu0 0
    %2541 = vmatprep.subr.bf16.mxu0 0
    %2542 = vmatpush2.bf16.msra.mxu0 0
    %2543 = vmatprep.mubr.bf16.mxu0 0
    %2544 = vmatmul.mubr.bf16.gmra.mxu0 %v2506
    %v2545 = vpop.f32.mrf.mxu0
    %v2546 = vadd.f32 0.0, %v2545
    %v2547 = vpop.f32.mrf.mxu0
    %v2548 = vpop.f32.mrf.mxu0
    %v2549 = vadd.f32 0.0, %v2548
    %v2550 = vpop.f32.mrf.mxu0
    %2551 = vmatprep.mubr.bf16.mxu0 0
    %2552 = vmatmul.mubr.bf16.gmra.mxu0 %v2509
    %v2553 = vpop.f32.mrf.mxu0
    %v2554 = vadd.f32 0.0, %v2553
    %v2555 = vpop.f32.mrf.mxu0
    %v2556 = vpop.f32.mrf.mxu0
    %v2557 = vadd.f32 0.0, %v2556
    %v2558 = vpop.f32.mrf.mxu0
    %2559 = vdwg.mxu0
    %2564 = vrot.lane.b32.xlu0 %v2194, 16
    %v2565 = vpop.permute.xlu0 %2564
    %2566 = vrot.lane.b32.xlu0 %v2197, 16
    %v2567 = vpop.permute.xlu0 %2566
    %2568 = vrot.lane.b32.xlu0 %v2202, 16
    %v2569 = vpop.permute.xlu0 %2568
    %2570 = vrot.lane.b32.xlu0 %v2205, 16
    %v2571 = vpop.permute.xlu0 %2570
    %2580 = vrot.lane.b32.xlu0 %v2370, 32
    %v2581 = vpop.permute.xlu0 %2580
    %2582 = vrot.lane.b32.xlu0 %v2373, 32
    %v2583 = vpop.permute.xlu0 %2582
    %2584 = vrot.lane.b32.xlu0 %v2378, 32
    %v2585 = vpop.permute.xlu0 %2584
    %2586 = vrot.lane.b32.xlu0 %v2381, 32
    %v2587 = vpop.permute.xlu0 %2586
    %2596 = vrot.lane.b32.xlu0 %v2546, 48
    %v2597 = vpop.permute.xlu0 %2596
    %2598 = vrot.lane.b32.xlu0 %v2549, 48
    %v2599 = vpop.permute.xlu0 %2598
    %2600 = vrot.lane.b32.xlu0 %v2554, 48
    %v2601 = vpop.permute.xlu0 %2600
    %2602 = vrot.lane.b32.xlu0 %v2557, 48
    %v2603 = vpop.permute.xlu0 %2602
    %v2608 = vsel %vm488, %v2014, %v2565
    %v2609 = vsel %vm488, %v2017, %v2567
    %v2610 = vsel %vm488, %v2022, %v2569
    %v2611 = vsel %vm488, %v2025, %v2571
    %v2612 = vsel %vm550, %v2608, %v2581
    %v2613 = vsel %vm550, %v2609, %v2583
    %v2614 = vsel %vm550, %v2610, %v2585
    %v2615 = vsel %vm550, %v2611, %v2587
    %v2616 = vsel %vm1242, %v2612, %v2597
    %v2617 = vsel %vm1242, %v2613, %v2599
    %v2618 = vsel %vm1242, %v2614, %v2601
    %v2619 = vsel %vm1242, %v2615, %v2603
    %v2620 = vld [vmem:[%s41] sm:$0xff]
    %v2621 = vld [vmem:[%s41 + $0x8] sm:$0xff]
    %v2622 = vld [vmem:[%s41 + $0x10] sm:$0xff]
    %v2623 = vld [vmem:[%s41 + $0x18] sm:$0xff]
    %v2624 = vld [vmem:[%s41 + $0x20] sm:$0xff]
    %v2625 = vld [vmem:[%s41 + $0x28] sm:$0xff]
    %v2626 = vld [vmem:[%s41 + $0x30] sm:$0xff]
    %v2627 = vld [vmem:[%s41 + $0x38] sm:$0xff]
    %v2628 = vpack.c.bf16 %v2617, %v2616
    %v2629 = vpack.c.bf16 %v2619, %v2618
    %v2630 = vpack.c.bf16 %v2621, %v2620
    %v2631 = vpack.c.bf16 %v2623, %v2622
    %v2632 = vpack.c.bf16 %v2625, %v2624
    %v2633 = vpack.c.bf16 %v2627, %v2626
    %v2635 = vsel %vm240, %v2628, 0
    %v2638 = vsel %vm240, %v2629, 0
    %2640 = vmatprep.subr.bf16.mxu0 0
    %2641 = vmatpush1.bf16.msra.mxu0 0
    %2642 = vmatprep.subr.bf16.mxu0 0
    %2643 = vmatpush1.bf16.msra.mxu0 0
    %2644 = vmatprep.subr.bf16.mxu0 0
    %2645 = vmatpush1.bf16.msra.mxu0 0
    %2646 = vmatprep.subr.bf16.mxu0 0
    %2647 = vmatpush1.bf16.msra.mxu0 0
    %2648 = vmatprep.subr.bf16.mxu0 0
    %2649 = vmatpush1.bf16.msra.mxu0 %v2633
    %2650 = vmatprep.subr.bf16.mxu0 0
    %2651 = vmatpush1.bf16.msra.mxu0 %v2632
    %2652 = vmatprep.subr.bf16.mxu0 0
    %2653 = vmatpush1.bf16.msra.mxu0 %v2631
    %2654 = vmatprep.subr.bf16.mxu0 0
    %2655 = vmatpush1.bf16.msra.mxu0 %v2630
    %2656 = vmatprep.subr.bf16.mxu0 0
    %2657 = vmatpush2.bf16.msra.mxu0 0
    %2658 = vmatprep.subr.bf16.mxu0 0
    %2659 = vmatpush2.bf16.msra.mxu0 0
    %2660 = vmatprep.subr.bf16.mxu0 0
    %2661 = vmatpush2.bf16.msra.mxu0 0
    %2662 = vmatprep.subr.bf16.mxu0 0
    %2663 = vmatpush2.bf16.msra.mxu0 0
    %2664 = vmatprep.subr.bf16.mxu0 0
    %2665 = vmatpush2.bf16.msra.mxu0 0
    %2666 = vmatprep.subr.bf16.mxu0 0
    %2667 = vmatpush2.bf16.msra.mxu0 0
    %2668 = vmatprep.subr.bf16.mxu0 0
    %2669 = vmatpush2.bf16.msra.mxu0 0
    %2670 = vmatprep.subr.bf16.mxu0 0
    %2671 = vmatpush2.bf16.msra.mxu0 0
    %2672 = vmatprep.mubr.bf16.mxu0 0
    %2673 = vmatmul.mubr.bf16.gmra.mxu0 %v2635
    %v2674 = vpop.f32.mrf.mxu0
    %v2675 = vadd.f32 0.0, %v2674
    %v2676 = vpop.f32.mrf.mxu0
    %v2677 = vpop.f32.mrf.mxu0
    %v2678 = vadd.f32 0.0, %v2677
    %v2679 = vpop.f32.mrf.mxu0
    %2680 = vmatprep.mubr.bf16.mxu0 0
    %2681 = vmatmul.mubr.bf16.gmra.mxu0 %v2638
    %v2682 = vpop.f32.mrf.mxu0
    %v2683 = vadd.f32 0.0, %v2682
    %v2684 = vpop.f32.mrf.mxu0
    %v2685 = vpop.f32.mrf.mxu0
    %v2686 = vadd.f32 0.0, %v2685
    %v2687 = vpop.f32.mrf.mxu0
    %2688 = vdwg.mxu0
    %v2689 = vadd.f32 %v1675, %v2675
    %v2690 = vadd.f32 %v1676, %v2678
    %v2691 = vadd.f32 %v1677, %v2683
    %v2692 = vadd.f32 %v1678, %v2686
    %v2693 = vld [vmem:[%s43] sm:$0x1]
    %v2695 = vlaneseq
    %v2696 = vshrl.u32 %v2695, 7
    %v2697 = vsub.s32 0, %v2696
    %v2698 = vrot.slane %v2693, %v2697
    %v2700 = vadd.f32 %v2689, %v2698
    %v2701 = vadd.f32 %v2690, %v2698
    %v2702 = vadd.f32 %v2691, %v2698
    %v2703 = vadd.f32 %v2692, %v2698
    %v2704 = vld [vmem:[%s45] sm:$0x1]
    %v2705 = vld [vmem:[%s47] sm:$0x1]
    %v2706 = vsel %vm240, %v2700, 0.0
    %2707 = vadd.xlane.f32.xlu0 %v2706
    %v2708 = vpop.xlane.xlu0 %2707
    %v2709 = vsel %vm240, %v2701, 0.0
    %2710 = vadd.xlane.f32.xlu0 %v2709
    %v2711 = vpop.xlane.xlu0 %2710
    %v2712 = vsel %vm240, %v2702, 0.0
    %2713 = vadd.xlane.f32.xlu0 %v2712
    %v2714 = vpop.xlane.xlu0 %2713
    %v2715 = vsel %vm240, %v2703, 0.0
    %2716 = vadd.xlane.f32.xlu0 %v2715
    %v2717 = vpop.xlane.xlu0 %2716
    %v2718 = vmul.f32 %v2708, %v316
    %v2719 = vmul.f32 %v2711, %v316
    %v2720 = vmul.f32 %v2714, %v316
    %v2721 = vmul.f32 %v2717, %v316
    %v2722 = vsub.f32 %v2700, %v2718
    %v2723 = vsub.f32 %v2701, %v2719
    %v2724 = vsub.f32 %v2702, %v2720
    %v2725 = vsub.f32 %v2703, %v2721
    %v2726 = vmul.f32 %v2722, %v2722
    %v2727 = vmul.f32 %v2723, %v2723
    %v2728 = vmul.f32 %v2724, %v2724
    %v2729 = vmul.f32 %v2725, %v2725
    %v2730 = vsel %vm240, %v2726, 0.0
    %2731 = vadd.xlane.f32.xlu0 %v2730
    %v2732 = vpop.xlane.xlu0 %2731
    %v2733 = vsel %vm240, %v2727, 0.0
    %2734 = vadd.xlane.f32.xlu0 %v2733
    %v2735 = vpop.xlane.xlu0 %2734
    %v2736 = vsel %vm240, %v2728, 0.0
    %2737 = vadd.xlane.f32.xlu0 %v2736
    %v2738 = vpop.xlane.xlu0 %2737
    %v2739 = vsel %vm240, %v2729, 0.0
    %2740 = vadd.xlane.f32.xlu0 %v2739
    %v2741 = vpop.xlane.xlu0 %2740
    %v2742 = vmul.f32 %v2732, %v316
    %v2743 = vmul.f32 %v2735, %v316
    %v2744 = vmul.f32 %v2738, %v316
    %v2745 = vmul.f32 %v2741, %v316
    %v2746 = vadd.f32 %v2742, 1e-05
    %v2747 = vadd.f32 %v2743, 1e-05
    %v2748 = vadd.f32 %v2744, 1e-05
    %v2749 = vadd.f32 %v2745, 1e-05
    %v2750 = vrsqrt.pop %v2746
    %v2751 = vrsqrt.pop %v2747
    %v2752 = vrsqrt.pop %v2748
    %v2753 = vrsqrt.pop %v2749
    %v2754 = vmul.f32 %v2722, %v2750
    %v2755 = vmul.f32 %v2723, %v2751
    %v2756 = vmul.f32 %v2724, %v2752
    %v2757 = vmul.f32 %v2725, %v2753
    %v2759 = vlaneseq
    %v2760 = vshrl.u32 %v2759, 7
    %v2761 = vsub.s32 0, %v2760
    %v2762 = vrot.slane %v2704, %v2761
    %v2764 = vmul.f32 %v2754, %v2762
    %v2765 = vmul.f32 %v2755, %v2762
    %v2766 = vmul.f32 %v2756, %v2762
    %v2767 = vmul.f32 %v2757, %v2762
    %v2769 = vlaneseq
    %v2770 = vshrl.u32 %v2769, 7
    %v2771 = vsub.s32 0, %v2770
    %v2772 = vrot.slane %v2705, %v2771
    %v2774 = vadd.f32 %v2764, %v2772
    %v2775 = vadd.f32 %v2765, %v2772
    %v2776 = vadd.f32 %v2766, %v2772
    %v2777 = vadd.f32 %v2767, %v2772
    %v2778 = vld [vmem:[%s49] sm:$0xff]
    %v2779 = vld [vmem:[%s49 + $0x8] sm:$0xff]
    %v2780 = vld [vmem:[%s49 + $0x10] sm:$0xff]
    %v2781 = vld [vmem:[%s49 + $0x18] sm:$0xff]
    %v2782 = vld [vmem:[%s49 + $0x20] sm:$0xff]
    %v2783 = vld [vmem:[%s49 + $0x28] sm:$0xff]
    %v2784 = vld [vmem:[%s49 + $0x30] sm:$0xff]
    %v2785 = vld [vmem:[%s49 + $0x38] sm:$0xff]
    %v2786 = vpack.c.bf16 %v2775, %v2774
    %v2787 = vpack.c.bf16 %v2777, %v2776
    %v2788 = vpack.c.bf16 %v2779, %v2778
    %v2789 = vpack.c.bf16 %v2781, %v2780
    %v2790 = vpack.c.bf16 %v2783, %v2782
    %v2791 = vpack.c.bf16 %v2785, %v2784
    %v2792 = vld [vmem:[%s51] sm:$0x1]
    %v2794 = vlaneseq
    %v2795 = vshrl.u32 %v2794, 7
    %v2796 = vsub.s32 0, %v2795
    %v2797 = vrot.slane %v2792, %v2796
    %v2800 = vsel %vm240, %v2786, 0
    %v2803 = vsel %vm240, %v2787, 0
    %2805 = vmatprep.subr.bf16.mxu0 0
    %2806 = vmatpush1.bf16.msra.mxu0 0
    %2807 = vmatprep.subr.bf16.mxu0 0
    %2808 = vmatpush1.bf16.msra.mxu0 0
    %2809 = vmatprep.subr.bf16.mxu0 0
    %2810 = vmatpush1.bf16.msra.mxu0 0
    %2811 = vmatprep.subr.bf16.mxu0 0
    %2812 = vmatpush1.bf16.msra.mxu0 0
    %2813 = vmatprep.subr.bf16.mxu0 0
    %2814 = vmatpush1.bf16.msra.mxu0 %v2791
    %2815 = vmatprep.subr.bf16.mxu0 0
    %2816 = vmatpush1.bf16.msra.mxu0 %v2790
    %2817 = vmatprep.subr.bf16.mxu0 0
    %2818 = vmatpush1.bf16.msra.mxu0 %v2789
    %2819 = vmatprep.subr.bf16.mxu0 0
    %2820 = vmatpush1.bf16.msra.mxu0 %v2788
    %2821 = vmatprep.subr.bf16.mxu0 0
    %2822 = vmatpush2.bf16.msra.mxu0 0
    %2823 = vmatprep.subr.bf16.mxu0 0
    %2824 = vmatpush2.bf16.msra.mxu0 0
    %2825 = vmatprep.subr.bf16.mxu0 0
    %2826 = vmatpush2.bf16.msra.mxu0 0
    %2827 = vmatprep.subr.bf16.mxu0 0
    %2828 = vmatpush2.bf16.msra.mxu0 0
    %2829 = vmatprep.subr.bf16.mxu0 0
    %2830 = vmatpush2.bf16.msra.mxu0 0
    %2831 = vmatprep.subr.bf16.mxu0 0
    %2832 = vmatpush2.bf16.msra.mxu0 0
    %2833 = vmatprep.subr.bf16.mxu0 0
    %2834 = vmatpush2.bf16.msra.mxu0 0
    %2835 = vmatprep.subr.bf16.mxu0 0
    %2836 = vmatpush2.bf16.msra.mxu0 0
    %2837 = vmatprep.mubr.bf16.mxu0 0
    %2838 = vmatmul.mubr.bf16.gmra.mxu0 %v2800
    %v2839 = vpop.f32.mrf.mxu0
    %v2840 = vadd.f32 %v2797, %v2839
    %v2841 = vpop.f32.mrf.mxu0
    %v2842 = vpop.f32.mrf.mxu0
    %v2843 = vadd.f32 %v2797, %v2842
    %v2844 = vpop.f32.mrf.mxu0
    %2845 = vmatprep.mubr.bf16.mxu0 0
    %2846 = vmatmul.mubr.bf16.gmra.mxu0 %v2803
    %v2847 = vpop.f32.mrf.mxu0
    %v2848 = vadd.f32 %v2797, %v2847
    %v2849 = vpop.f32.mrf.mxu0
    %v2850 = vpop.f32.mrf.mxu0
    %v2851 = vadd.f32 %v2797, %v2850
    %v2852 = vpop.f32.mrf.mxu0
    %2853 = vdwg.mxu0
    %v2854 = vmul.f32 %v2840, 0.5
    %v2855 = vmul.f32 %v2843, 0.5
    %v2856 = vmul.f32 %v2848, 0.5
    %v2857 = vmul.f32 %v2851, 0.5
    %v2858 = vmul.f32 %v2840, 0.70710677
    %v2859 = vmul.f32 %v2843, 0.70710677
    %v2860 = vmul.f32 %v2848, 0.70710677
    %v2861 = vmul.f32 %v2851, 0.70710677
    %vm2862 = vcmp.lt.f32.partialorder %v2858, 0.0
    %vm2863 = vcmp.lt.f32.partialorder %v2859, 0.0
    %vm2864 = vcmp.lt.f32.partialorder %v2860, 0.0
    %vm2865 = vcmp.lt.f32.partialorder %v2861, 0.0
    %v2866 = vsel %vm2862, -1.0, 1.0
    %v2867 = vsel %vm2863, -1.0, 1.0
    %v2868 = vsel %vm2864, -1.0, 1.0
    %v2869 = vsel %vm2865, -1.0, 1.0
    %v2870 = vand.u32 2147483647, %v2858
    %v2871 = vand.u32 2147483647, %v2859
    %v2872 = vand.u32 2147483647, %v2860
    %v2873 = vand.u32 2147483647, %v2861
    %v2874 = vmul.f32 %v2870, 0.3275911
    %v2875 = vmul.f32 %v2871, 0.3275911
    %v2876 = vmul.f32 %v2872, 0.3275911
    %v2877 = vmul.f32 %v2873, 0.3275911
    %v2878 = vadd.f32 %v2874, 1.0
    %v2879 = vadd.f32 %v2875, 1.0
    %v2880 = vadd.f32 %v2876, 1.0
    %v2881 = vadd.f32 %v2877, 1.0
    %v2882 = vrcp.pop %v2878
    %v2883 = vmul.f32 1.0, %v2882
    %v2884 = vrcp.pop %v2879
    %v2885 = vmul.f32 1.0, %v2884
    %v2886 = vrcp.pop %v2880
    %v2887 = vmul.f32 1.0, %v2886
    %v2888 = vrcp.pop %v2881
    %v2889 = vmul.f32 1.0, %v2888
    %v2890 = vmul.f32 %v2883, 1.0614054
    %v2891 = vmul.f32 %v2885, 1.0614054
    %v2892 = vmul.f32 %v2887, 1.0614054
    %v2893 = vmul.f32 %v2889, 1.0614054
    %v2894 = vadd.f32 %v2890, -1.4531521
    %v2895 = vadd.f32 %v2891, -1.4531521
    %v2896 = vadd.f32 %v2892, -1.4531521
    %v2897 = vadd.f32 %v2893, -1.4531521
    %v2898 = vmul.f32 %v2883, %v2894
    %v2899 = vmul.f32 %v2885, %v2895
    %v2900 = vmul.f32 %v2887, %v2896
    %v2901 = vmul.f32 %v2889, %v2897
    %v2902 = vadd.f32 %v2898, 1.4214138
    %v2903 = vadd.f32 %v2899, 1.4214138
    %v2904 = vadd.f32 %v2900, 1.4214138
    %v2905 = vadd.f32 %v2901, 1.4214138
    %v2906 = vmul.f32 %v2883, %v2902
    %v2907 = vmul.f32 %v2885, %v2903
    %v2908 = vmul.f32 %v2887, %v2904
    %v2909 = vmul.f32 %v2889, %v2905
    %v2910 = vadd.f32 %v2906, -0.28449672
    %v2911 = vadd.f32 %v2907, -0.28449672
    %v2912 = vadd.f32 %v2908, -0.28449672
    %v2913 = vadd.f32 %v2909, -0.28449672
    %v2914 = vmul.f32 %v2883, %v2910
    %v2915 = vmul.f32 %v2885, %v2911
    %v2916 = vmul.f32 %v2887, %v2912
    %v2917 = vmul.f32 %v2889, %v2913
    %v2918 = vadd.f32 %v2914, 0.2548296
    %v2919 = vadd.f32 %v2915, 0.2548296
    %v2920 = vadd.f32 %v2916, 0.2548296
    %v2921 = vadd.f32 %v2917, 0.2548296
    %v2922 = vmul.f32 %v2883, %v2918
    %v2923 = vmul.f32 %v2885, %v2919
    %v2924 = vmul.f32 %v2887, %v2920
    %v2925 = vmul.f32 %v2889, %v2921
    %v2926 = vsub.f32 0.0, %v2870
    %v2927 = vsub.f32 0.0, %v2871
    %v2928 = vsub.f32 0.0, %v2872
    %v2929 = vsub.f32 0.0, %v2873
    %v2930 = vmul.f32 %v2926, %v2870
    %v2931 = vmul.f32 %v2927, %v2871
    %v2932 = vmul.f32 %v2928, %v2872
    %v2933 = vmul.f32 %v2929, %v2873
    %v2934 = vmul.f32 %v2930, 1.442695
    %v2935 = vpow.pop %v2934
    %v2936 = vmul.f32 %v2931, 1.442695
    %v2937 = vpow.pop %v2936
    %v2938 = vmul.f32 %v2932, 1.442695
    %v2939 = vpow.pop %v2938
    %v2940 = vmul.f32 %v2933, 1.442695
    %v2941 = vpow.pop %v2940
    %v2942 = vmul.f32 %v2922, %v2935
    %v2943 = vmul.f32 %v2923, %v2937
    %v2944 = vmul.f32 %v2924, %v2939
    %v2945 = vmul.f32 %v2925, %v2941
    %v2946 = vsub.f32 1.0, %v2942
    %v2947 = vsub.f32 1.0, %v2943
    %v2948 = vsub.f32 1.0, %v2944
    %v2949 = vsub.f32 1.0, %v2945
    %v2950 = vmul.f32 %v2866, %v2946
    %v2951 = vmul.f32 %v2867, %v2947
    %v2952 = vmul.f32 %v2868, %v2948
    %v2953 = vmul.f32 %v2869, %v2949
    %v2954 = vadd.f32 %v2950, 1.0
    %v2955 = vadd.f32 %v2951, 1.0
    %v2956 = vadd.f32 %v2952, 1.0
    %v2957 = vadd.f32 %v2953, 1.0
    %v2958 = vmul.f32 %v2854, %v2954
    %v2959 = vmul.f32 %v2855, %v2955
    %v2960 = vmul.f32 %v2856, %v2956
    %v2961 = vmul.f32 %v2857, %v2957
    %v2962 = vld [vmem:[%s53] sm:$0xff]
    %v2963 = vld [vmem:[%s53 + $0x8] sm:$0xff]
    %v2964 = vld [vmem:[%s53 + $0x10] sm:$0xff]
    %v2965 = vld [vmem:[%s53 + $0x18] sm:$0xff]
    %v2966 = vld [vmem:[%s53 + $0x20] sm:$0xff]
    %v2967 = vld [vmem:[%s53 + $0x28] sm:$0xff]
    %v2968 = vld [vmem:[%s53 + $0x30] sm:$0xff]
    %v2969 = vld [vmem:[%s53 + $0x38] sm:$0xff]
    %v2970 = vld [vmem:[%s53 + $0x40] sm:$0xff]
    %v2971 = vld [vmem:[%s53 + $0x48] sm:$0xff]
    %v2972 = vld [vmem:[%s53 + $0x50] sm:$0xff]
    %v2973 = vld [vmem:[%s53 + $0x58] sm:$0xff]
    %v2974 = vld [vmem:[%s53 + $0x60] sm:$0xff]
    %v2975 = vld [vmem:[%s53 + $0x68] sm:$0xff]
    %v2976 = vld [vmem:[%s53 + $0x70] sm:$0xff]
    %v2977 = vld [vmem:[%s53 + $0x78] sm:$0xff]
    %v2978 = vpack.c.bf16 %v2959, %v2958
    %v2979 = vpack.c.bf16 %v2961, %v2960
    %v2980 = vpack.c.bf16 %v2963, %v2962
    %v2981 = vpack.c.bf16 %v2965, %v2964
    %v2982 = vpack.c.bf16 %v2967, %v2966
    %v2983 = vpack.c.bf16 %v2969, %v2968
    %v2984 = vpack.c.bf16 %v2971, %v2970
    %v2985 = vpack.c.bf16 %v2973, %v2972
    %v2986 = vpack.c.bf16 %v2975, %v2974
    %v2987 = vpack.c.bf16 %v2977, %v2976
    %2988 = vmatprep.subr.bf16.mxu0 0
    %2989 = vmatpush1.bf16.msra.mxu0 %v2987
    %2990 = vmatprep.subr.bf16.mxu0 0
    %2991 = vmatpush1.bf16.msra.mxu0 %v2986
    %2992 = vmatprep.subr.bf16.mxu0 0
    %2993 = vmatpush1.bf16.msra.mxu0 %v2985
    %2994 = vmatprep.subr.bf16.mxu0 0
    %2995 = vmatpush1.bf16.msra.mxu0 %v2984
    %2996 = vmatprep.subr.bf16.mxu0 0
    %2997 = vmatpush1.bf16.msra.mxu0 %v2983
    %2998 = vmatprep.subr.bf16.mxu0 0
    %2999 = vmatpush1.bf16.msra.mxu0 %v2982
    %3000 = vmatprep.subr.bf16.mxu0 0
    %3001 = vmatpush1.bf16.msra.mxu0 %v2981
    %3002 = vmatprep.subr.bf16.mxu0 0
    %3003 = vmatpush1.bf16.msra.mxu0 %v2980
    %3004 = vmatprep.subr.bf16.mxu0 0
    %3005 = vmatpush2.bf16.msra.mxu0 0
    %3006 = vmatprep.subr.bf16.mxu0 0
    %3007 = vmatpush2.bf16.msra.mxu0 0
    %3008 = vmatprep.subr.bf16.mxu0 0
    %3009 = vmatpush2.bf16.msra.mxu0 0
    %3010 = vmatprep.subr.bf16.mxu0 0
    %3011 = vmatpush2.bf16.msra.mxu0 0
    %3012 = vmatprep.subr.bf16.mxu0 0
    %3013 = vmatpush2.bf16.msra.mxu0 0
    %3014 = vmatprep.subr.bf16.mxu0 0
    %3015 = vmatpush2.bf16.msra.mxu0 0
    %3016 = vmatprep.subr.bf16.mxu0 0
    %3017 = vmatpush2.bf16.msra.mxu0 0
    %3018 = vmatprep.subr.bf16.mxu0 0
    %3019 = vmatpush2.bf16.msra.mxu0 0
    %3020 = vmatprep.mubr.bf16.mxu0 0
    %3021 = vmatmul.mubr.bf16.gmra.mxu0 %v2978
    %v3022 = vpop.f32.mrf.mxu0
    %v3023 = vadd.f32 0.0, %v3022
    %v3024 = vpop.f32.mrf.mxu0
    %v3025 = vpop.f32.mrf.mxu0
    %v3026 = vadd.f32 0.0, %v3025
    %v3027 = vpop.f32.mrf.mxu0
    %3028 = vmatprep.mubr.bf16.mxu0 0
    %3029 = vmatmul.mubr.bf16.gmra.mxu0 %v2979
    %v3030 = vpop.f32.mrf.mxu0
    %v3031 = vadd.f32 0.0, %v3030
    %v3032 = vpop.f32.mrf.mxu0
    %v3033 = vpop.f32.mrf.mxu0
    %v3034 = vadd.f32 0.0, %v3033
    %v3035 = vpop.f32.mrf.mxu0
    %3036 = vdwg.mxu0
    %v3037 = vadd.f32 %v2700, %v3023
    %v3038 = vadd.f32 %v2701, %v3026
    %v3039 = vadd.f32 %v2702, %v3031
    %v3040 = vadd.f32 %v2703, %v3034
    %v3041 = vld [vmem:[%s55] sm:$0x1]
    %v3043 = vlaneseq
    %v3044 = vshrl.u32 %v3043, 7
    %v3045 = vsub.s32 0, %v3044
    %v3046 = vrot.slane %v3041, %v3045
    %v3048 = vadd.f32 %v3037, %v3046
    %v3049 = vadd.f32 %v3038, %v3046
    %v3050 = vadd.f32 %v3039, %v3046
    %v3051 = vadd.f32 %v3040, %v3046
    %v3052 = vld [vmem:[%s57] sm:$0xff]
    %v3053 = vld [vmem:[%s57 + $0x8] sm:$0xff]
    %v3054 = vld [vmem:[%s57 + $0x10] sm:$0xff]
    %v3055 = vld [vmem:[%s57 + $0x18] sm:$0xff]
    %v3056 = vld [vmem:[%s57 + $0x20] sm:$0xff]
    %v3057 = vld [vmem:[%s57 + $0x28] sm:$0xff]
    %v3058 = vld [vmem:[%s57 + $0x30] sm:$0xff]
    %v3059 = vld [vmem:[%s57 + $0x38] sm:$0xff]
    %v3060 = vpack.c.bf16 %v3049, %v3048
    %v3061 = vpack.c.bf16 %v3051, %v3050
    %v3062 = vpack.c.bf16 %v3053, %v3052
    %v3063 = vpack.c.bf16 %v3055, %v3054
    %v3064 = vpack.c.bf16 %v3057, %v3056
    %v3065 = vpack.c.bf16 %v3059, %v3058
    %v3067 = vsel %vm240, %v3060, 0
    %v3070 = vsel %vm240, %v3061, 0
    %3072 = vmatprep.subr.bf16.mxu0 0
    %3073 = vmatpush1.bf16.msra.mxu0 0
    %3074 = vmatprep.subr.bf16.mxu0 0
    %3075 = vmatpush1.bf16.msra.mxu0 0
    %3076 = vmatprep.subr.bf16.mxu0 0
    %3077 = vmatpush1.bf16.msra.mxu0 0
    %3078 = vmatprep.subr.bf16.mxu0 0
    %3079 = vmatpush1.bf16.msra.mxu0 0
    %3080 = vmatprep.subr.bf16.mxu0 0
    %3081 = vmatpush1.bf16.msra.mxu0 %v3065
    %3082 = vmatprep.subr.bf16.mxu0 0
    %3083 = vmatpush1.bf16.msra.mxu0 %v3064
    %3084 = vmatprep.subr.bf16.mxu0 0
    %3085 = vmatpush1.bf16.msra.mxu0 %v3063
    %3086 = vmatprep.subr.bf16.mxu0 0
    %3087 = vmatpush1.bf16.msra.mxu0 %v3062
    %3088 = vmatprep.subr.bf16.mxu0 0
    %3089 = vmatpush2.bf16.msra.mxu0 0
    %3090 = vmatprep.subr.bf16.mxu0 0
    %3091 = vmatpush2.bf16.msra.mxu0 0
    %3092 = vmatprep.subr.bf16.mxu0 0
    %3093 = vmatpush2.bf16.msra.mxu0 0
    %3094 = vmatprep.subr.bf16.mxu0 0
    %3095 = vmatpush2.bf16.msra.mxu0 0
    %3096 = vmatprep.subr.bf16.mxu0 0
    %3097 = vmatpush2.bf16.msra.mxu0 0
    %3098 = vmatprep.subr.bf16.mxu0 0
    %3099 = vmatpush2.bf16.msra.mxu0 0
    %3100 = vmatprep.subr.bf16.mxu0 0
    %3101 = vmatpush2.bf16.msra.mxu0 0
    %3102 = vmatprep.subr.bf16.mxu0 0
    %3103 = vmatpush2.bf16.msra.mxu0 0
    %3104 = vmatprep.mubr.bf16.mxu0 0
    %3105 = vmatmul.mubr.bf16.gmra.mxu0 %v3067
    %v3106 = vpop.f32.mrf.mxu0
    %v3107 = vadd.f32 0.0, %v3106
    %v3108 = vpop.f32.mrf.mxu0
    %v3109 = vpop.f32.mrf.mxu0
    %v3110 = vadd.f32 0.0, %v3109
    %v3111 = vpop.f32.mrf.mxu0
    %3112 = vmatprep.mubr.bf16.mxu0 0
    %3113 = vmatmul.mubr.bf16.gmra.mxu0 %v3070
    %v3114 = vpop.f32.mrf.mxu0
    %v3115 = vadd.f32 0.0, %v3114
    %v3116 = vpop.f32.mrf.mxu0
    %v3117 = vpop.f32.mrf.mxu0
    %v3118 = vadd.f32 0.0, %v3117
    %v3119 = vpop.f32.mrf.mxu0
    %3120 = vdwg.mxu0
    %v3121 = vld [vmem:[%s59] sm:$0x1]
    %v3122 = vld [vmem:[%s61] sm:$0x1]
    %v3123 = vsel %vm550, %v3107, 0.0
    %3124 = vadd.xlane.f32.xlu0 %v3123
    %v3125 = vpop.xlane.xlu0 %3124
    %v3126 = vsel %vm550, %v3110, 0.0
    %3127 = vadd.xlane.f32.xlu0 %v3126
    %v3128 = vpop.xlane.xlu0 %3127
    %v3129 = vsel %vm550, %v3115, 0.0
    %3130 = vadd.xlane.f32.xlu0 %v3129
    %v3131 = vpop.xlane.xlu0 %3130
    %v3132 = vsel %vm550, %v3118, 0.0
    %3133 = vadd.xlane.f32.xlu0 %v3132
    %v3134 = vpop.xlane.xlu0 %3133
    %v3135 = vrcp.pop 32.0
    %v3136 = vmul.f32 %v3125, %v3135
    %v3137 = vmul.f32 %v3128, %v3135
    %v3138 = vmul.f32 %v3131, %v3135
    %v3139 = vmul.f32 %v3134, %v3135
    %v3140 = vsub.f32 %v3107, %v3136
    %v3141 = vsub.f32 %v3110, %v3137
    %v3142 = vsub.f32 %v3115, %v3138
    %v3143 = vsub.f32 %v3118, %v3139
    %v3144 = vmul.f32 %v3140, %v3140
    %v3145 = vmul.f32 %v3141, %v3141
    %v3146 = vmul.f32 %v3142, %v3142
    %v3147 = vmul.f32 %v3143, %v3143
    %v3148 = vsel %vm550, %v3144, 0.0
    %3149 = vadd.xlane.f32.xlu0 %v3148
    %v3150 = vpop.xlane.xlu0 %3149
    %v3151 = vsel %vm550, %v3145, 0.0
    %3152 = vadd.xlane.f32.xlu0 %v3151
    %v3153 = vpop.xlane.xlu0 %3152
    %v3154 = vsel %vm550, %v3146, 0.0
    %3155 = vadd.xlane.f32.xlu0 %v3154
    %v3156 = vpop.xlane.xlu0 %3155
    %v3157 = vsel %vm550, %v3147, 0.0
    %3158 = vadd.xlane.f32.xlu0 %v3157
    %v3159 = vpop.xlane.xlu0 %3158
    %v3160 = vmul.f32 %v3150, %v3135
    %v3161 = vmul.f32 %v3153, %v3135
    %v3162 = vmul.f32 %v3156, %v3135
    %v3163 = vmul.f32 %v3159, %v3135
    %v3164 = vadd.f32 %v3160, 1e-06
    %v3165 = vadd.f32 %v3161, 1e-06
    %v3166 = vadd.f32 %v3162, 1e-06
    %v3167 = vadd.f32 %v3163, 1e-06
    %v3168 = vrsqrt.pop %v3164
    %v3169 = vrsqrt.pop %v3165
    %v3170 = vrsqrt.pop %v3166
    %v3171 = vrsqrt.pop %v3167
    %v3172 = vmul.f32 %v3140, %v3168
    %v3173 = vmul.f32 %v3141, %v3169
    %v3174 = vmul.f32 %v3142, %v3170
    %v3175 = vmul.f32 %v3143, %v3171
    %v3177 = vlaneseq
    %v3178 = vshrl.u32 %v3177, 7
    %v3179 = vsub.s32 0, %v3178
    %v3180 = vrot.slane %v3121, %v3179
    %v3182 = vmul.f32 %v3172, %v3180
    %v3183 = vmul.f32 %v3173, %v3180
    %v3184 = vmul.f32 %v3174, %v3180
    %v3185 = vmul.f32 %v3175, %v3180
    %v3187 = vlaneseq
    %v3188 = vshrl.u32 %v3187, 7
    %v3189 = vsub.s32 0, %v3188
    %v3190 = vrot.slane %v3122, %v3189
    %v3192 = vadd.f32 %v3182, %v3190
    %v3193 = vadd.f32 %v3183, %v3190
    %v3194 = vadd.f32 %v3184, %v3190
    %v3195 = vadd.f32 %v3185, %v3190
    %v3196 = vshra.s32 %v153, 2
    %v3197 = vshra.s32 %v154, 2
    %v3198 = vshra.s32 %v155, 2
    %v3199 = vshra.s32 %v156, 2
    %v3200 = vand.u32 %v3196, 3
    %v3201 = vand.u32 %v3197, 3
    %v3202 = vand.u32 %v3198, 3
    %v3203 = vand.u32 %v3199, 3
    %v3204 = vand.u32 %v153, 3
    %v3205 = vand.u32 %v154, 3
    %v3206 = vand.u32 %v155, 3
    %v3207 = vand.u32 %v156, 3
    %v3208 = vrot.slane %v3192, 3
    %v3209 = vrot.slane %v3193, 3
    %v3210 = vrot.slane %v3194, 3
    %v3211 = vrot.slane %v3195, 3
    %vm3212 = vcmp.lt.s32.totalorder %v153, 5
    %v3213 = vsel %vm3212, %v3210, %v3211
    %v3214 = vsel %vm3212, %v3209, %v3210
    %v3215 = vsel %vm3212, %v3208, %v3209
    %v3216 = vsel %vm3212, %v3211, %v3208
    %v3217 = vadd.s32 %v3200, 4294967295
    %v3218 = vadd.s32 %v3201, 4294967295
    %v3219 = vadd.s32 %v3202, 4294967295
    %v3220 = vadd.s32 %v3203, 4294967295
    %vm3221 = vcmp.ge.s32.totalorder %v3217, 0
    %vm3222 = vcmp.ge.s32.totalorder %v3218, 0
    %vm3223 = vcmp.ge.s32.totalorder %v3219, 0
    %vm3224 = vcmp.ge.s32.totalorder %v3220, 0
    %vm3225 = vcmp.lt.s32.totalorder %v3217, 4
    %vm3226 = vcmp.lt.s32.totalorder %v3218, 4
    %vm3227 = vcmp.lt.s32.totalorder %v3219, 4
    %vm3228 = vcmp.lt.s32.totalorder %v3220, 4
    %vm3229 = vmand %vm3221, %vm3225
    %vm3230 = vmand %vm3222, %vm3226
    %vm3231 = vmand %vm3223, %vm3227
    %vm3232 = vmand %vm3224, %vm3228
    %v3233 = vadd.s32 %v3204, 4294967295
    %v3234 = vadd.s32 %v3205, 4294967295
    %v3235 = vadd.s32 %v3206, 4294967295
    %v3236 = vadd.s32 %v3207, 4294967295
    %vm3237 = vcmp.ge.s32.totalorder %v3233, 0
    %vm3238 = vcmp.ge.s32.totalorder %v3234, 0
    %vm3239 = vcmp.ge.s32.totalorder %v3235, 0
    %vm3240 = vcmp.ge.s32.totalorder %v3236, 0
    %vm3241 = vmand %vm3229, %vm3237
    %vm3242 = vmand %vm3230, %vm3238
    %vm3243 = vmand %vm3231, %vm3239
    %vm3244 = vmand %vm3232, %vm3240
    %vm3245 = vcmp.lt.s32.totalorder %v3233, 4
    %vm3246 = vcmp.lt.s32.totalorder %v3234, 4
    %vm3247 = vcmp.lt.s32.totalorder %v3235, 4
    %vm3248 = vcmp.lt.s32.totalorder %v3236, 4
    %vm3249 = vmand %vm3241, %vm3245
    %vm3250 = vmand %vm3242, %vm3246
    %vm3251 = vmand %vm3243, %vm3247
    %vm3252 = vmand %vm3244, %vm3248
    %v3253 = vsel %vm3249, %v3216, 0.0
    %v3254 = vsel %vm3250, %v3215, 0.0
    %v3255 = vsel %vm3251, %v3214, 0.0
    %v3256 = vsel %vm3252, %v3213, 0.0
    %v3257 = vrot.slane %v3192, 4
    %v3258 = vrot.slane %v3193, 4
    %v3259 = vrot.slane %v3194, 4
    %v3260 = vrot.slane %v3195, 4
    %vm3261 = vcmp.lt.s32.totalorder %v153, 4
    %v3262 = vsel %vm3261, %v3259, %v3260
    %v3263 = vsel %vm3261, %v3258, %v3259
    %v3264 = vsel %vm3261, %v3257, %v3258
    %v3265 = vsel %vm3261, %v3260, %v3257
    %vm3266 = vcmp.ge.s32.totalorder %v3204, 0
    %vm3267 = vcmp.ge.s32.totalorder %v3205, 0
    %vm3268 = vcmp.ge.s32.totalorder %v3206, 0
    %vm3269 = vcmp.ge.s32.totalorder %v3207, 0
    %vm3270 = vmand %vm3229, %vm3266
    %vm3271 = vmand %vm3230, %vm3267
    %vm3272 = vmand %vm3231, %vm3268
    %vm3273 = vmand %vm3232, %vm3269
    %vm3274 = vcmp.lt.s32.totalorder %v3204, 4
    %vm3275 = vcmp.lt.s32.totalorder %v3205, 4
    %vm3276 = vcmp.lt.s32.totalorder %v3206, 4
    %vm3277 = vcmp.lt.s32.totalorder %v3207, 4
    %vm3278 = vmand %vm3270, %vm3274
    %vm3279 = vmand %vm3271, %vm3275
    %vm3280 = vmand %vm3272, %vm3276
    %vm3281 = vmand %vm3273, %vm3277
    %v3282 = vsel %vm3278, %v3265, 0.0
    %v3283 = vsel %vm3279, %v3264, 0.0
    %v3284 = vsel %vm3280, %v3263, 0.0
    %v3285 = vsel %vm3281, %v3262, 0.0
    %v3286 = vrot.slane %v3192, 5
    %v3287 = vrot.slane %v3193, 5
    %v3288 = vrot.slane %v3194, 5
    %v3289 = vrot.slane %v3195, 5
    %vm3290 = vcmp.lt.s32.totalorder %v153, 3
    %v3291 = vsel %vm3290, %v3288, %v3289
    %v3292 = vsel %vm3290, %v3287, %v3288
    %v3293 = vsel %vm3290, %v3286, %v3287
    %v3294 = vsel %vm3290, %v3289, %v3286
    %v3295 = vadd.s32 %v3204, 1
    %v3296 = vadd.s32 %v3205, 1
    %v3297 = vadd.s32 %v3206, 1
    %v3298 = vadd.s32 %v3207, 1
    %vm3299 = vcmp.ge.s32.totalorder %v3295, 0
    %vm3300 = vcmp.ge.s32.totalorder %v3296, 0
    %vm3301 = vcmp.ge.s32.totalorder %v3297, 0
    %vm3302 = vcmp.ge.s32.totalorder %v3298, 0
    %vm3303 = vmand %vm3229, %vm3299
    %vm3304 = vmand %vm3230, %vm3300
    %vm3305 = vmand %vm3231, %vm3301
    %vm3306 = vmand %vm3232, %vm3302
    %vm3307 = vcmp.lt.s32.totalorder %v3295, 4
    %vm3308 = vcmp.lt.s32.totalorder %v3296, 4
    %vm3309 = vcmp.lt.s32.totalorder %v3297, 4
    %vm3310 = vcmp.lt.s32.totalorder %v3298, 4
    %vm3311 = vmand %vm3303, %vm3307
    %vm3312 = vmand %vm3304, %vm3308
    %vm3313 = vmand %vm3305, %vm3309
    %vm3314 = vmand %vm3306, %vm3310
    %v3315 = vsel %vm3311, %v3294, 0.0
    %v3316 = vsel %vm3312, %v3293, 0.0
    %v3317 = vsel %vm3313, %v3292, 0.0
    %v3318 = vsel %vm3314, %v3291, 0.0
    %v3319 = vrot.slane %v3192, 7
    %v3320 = vrot.slane %v3193, 7
    %v3321 = vrot.slane %v3194, 7
    %v3322 = vrot.slane %v3195, 7
    %vm3323 = vcmp.lt.s32.totalorder %v153, 1
    %v3324 = vsel %vm3323, %v3321, %v3322
    %v3325 = vsel %vm3323, %v3320, %v3321
    %v3326 = vsel %vm3323, %v3319, %v3320
    %v3327 = vsel %vm3323, %v3322, %v3319
    %vm3328 = vcmp.ge.s32.totalorder %v3200, 0
    %vm3329 = vcmp.ge.s32.totalorder %v3201, 0
    %vm3330 = vcmp.ge.s32.totalorder %v3202, 0
    %vm3331 = vcmp.ge.s32.totalorder %v3203, 0
    %vm3332 = vcmp.lt.s32.totalorder %v3200, 4
    %vm3333 = vcmp.lt.s32.totalorder %v3201, 4
    %vm3334 = vcmp.lt.s32.totalorder %v3202, 4
    %vm3335 = vcmp.lt.s32.totalorder %v3203, 4
    %vm3336 = vmand %vm3328, %vm3332
    %vm3337 = vmand %vm3329, %vm3333
    %vm3338 = vmand %vm3330, %vm3334
    %vm3339 = vmand %vm3331, %vm3335
    %vm3340 = vmand %vm3336, %vm3237
    %vm3341 = vmand %vm3337, %vm3238
    %vm3342 = vmand %vm3338, %vm3239
    %vm3343 = vmand %vm3339, %vm3240
    %vm3344 = vmand %vm3340, %vm3245
    %vm3345 = vmand %vm3341, %vm3246
    %vm3346 = vmand %vm3342, %vm3247
    %vm3347 = vmand %vm3343, %vm3248
    %v3348 = vsel %vm3344, %v3327, 0.0
    %v3349 = vsel %vm3345, %v3326, 0.0
    %v3350 = vsel %vm3346, %v3325, 0.0
    %v3351 = vsel %vm3347, %v3324, 0.0
    %vm3352 = vmand %vm3336, %vm3266
    %vm3353 = vmand %vm3337, %vm3267
    %vm3354 = vmand %vm3338, %vm3268
    %vm3355 = vmand %vm3339, %vm3269
    %vm3356 = vmand %vm3352, %vm3274
    %vm3357 = vmand %vm3353, %vm3275
    %vm3358 = vmand %vm3354, %vm3276
    %vm3359 = vmand %vm3355, %vm3277
    %v3360 = vsel %vm3356, %v3192, 0.0
    %v3361 = vsel %vm3357, %v3193, 0.0
    %v3362 = vsel %vm3358, %v3194, 0.0
    %v3363 = vsel %vm3359, %v3195, 0.0
    %v3364 = vrot.slane %v3192, 1
    %v3365 = vrot.slane %v3193, 1
    %v3366 = vrot.slane %v3194, 1
    %v3367 = vrot.slane %v3195, 1
    %vm3368 = vcmp.lt.s32.totalorder %v153, 7
    %v3369 = vsel %vm3368, %v3366, %v3367
    %v3370 = vsel %vm3368, %v3365, %v3366
    %v3371 = vsel %vm3368, %v3364, %v3365
    %v3372 = vsel %vm3368, %v3367, %v3364
    %vm3373 = vmand %vm3336, %vm3299
    %vm3374 = vmand %vm3337, %vm3300
    %vm3375 = vmand %vm3338, %vm3301
    %vm3376 = vmand %vm3339, %vm3302
    %vm3377 = vmand %vm3373, %vm3307
    %vm3378 = vmand %vm3374, %vm3308
    %vm3379 = vmand %vm3375, %vm3309
    %vm3380 = vmand %vm3376, %vm3310
    %v3381 = vsel %vm3377, %v3371, 0.0
    %v3382 = vsel %vm3378, %v3370, 0.0
    %v3383 = vsel %vm3379, %v3369, 0.0
    %v3384 = vsel %vm3380, %v3372, 0.0
    %v3385 = vadd.s32 %v3200, 1
    %v3386 = vadd.s32 %v3201, 1
    %v3387 = vadd.s32 %v3202, 1
    %v3388 = vadd.s32 %v3203, 1
    %vm3389 = vcmp.ge.s32.totalorder %v3385, 0
    %vm3390 = vcmp.ge.s32.totalorder %v3386, 0
    %vm3391 = vcmp.ge.s32.totalorder %v3387, 0
    %vm3392 = vcmp.ge.s32.totalorder %v3388, 0
    %vm3393 = vcmp.lt.s32.totalorder %v3385, 4
    %vm3394 = vcmp.lt.s32.totalorder %v3386, 4
    %vm3395 = vcmp.lt.s32.totalorder %v3387, 4
    %vm3396 = vcmp.lt.s32.totalorder %v3388, 4
    %vm3397 = vmand %vm3389, %vm3393
    %vm3398 = vmand %vm3390, %vm3394
    %vm3399 = vmand %vm3391, %vm3395
    %vm3400 = vmand %vm3392, %vm3396
    %vm3401 = vmand %vm3397, %vm3237
    %vm3402 = vmand %vm3398, %vm3238
    %vm3403 = vmand %vm3399, %vm3239
    %vm3404 = vmand %vm3400, %vm3240
    %vm3405 = vmand %vm3401, %vm3245
    %vm3406 = vmand %vm3402, %vm3246
    %vm3407 = vmand %vm3403, %vm3247
    %vm3408 = vmand %vm3404, %vm3248
    %v3409 = vsel %vm3405, %v3215, 0.0
    %v3410 = vsel %vm3406, %v3214, 0.0
    %v3411 = vsel %vm3407, %v3213, 0.0
    %v3412 = vsel %vm3408, %v3216, 0.0
    %vm3413 = vmand %vm3397, %vm3266
    %vm3414 = vmand %vm3398, %vm3267
    %vm3415 = vmand %vm3399, %vm3268
    %vm3416 = vmand %vm3400, %vm3269
    %vm3417 = vmand %vm3413, %vm3274
    %vm3418 = vmand %vm3414, %vm3275
    %vm3419 = vmand %vm3415, %vm3276
    %vm3420 = vmand %vm3416, %vm3277
    %v3421 = vsel %vm3417, %v3264, 0.0
    %v3422 = vsel %vm3418, %v3263, 0.0
    %v3423 = vsel %vm3419, %v3262, 0.0
    %v3424 = vsel %vm3420, %v3265, 0.0
    %vm3425 = vmand %vm3397, %vm3299
    %vm3426 = vmand %vm3398, %vm3300
    %vm3427 = vmand %vm3399, %vm3301
    %vm3428 = vmand %vm3400, %vm3302
    %vm3429 = vmand %vm3425, %vm3307
    %vm3430 = vmand %vm3426, %vm3308
    %vm3431 = vmand %vm3427, %vm3309
    %vm3432 = vmand %vm3428, %vm3310
    %v3433 = vsel %vm3429, %v3293, 0.0
    %v3434 = vsel %vm3430, %v3292, 0.0
    %v3435 = vsel %vm3431, %v3291, 0.0
    %v3436 = vsel %vm3432, %v3294, 0.0
    %3441 = vrot.lane.b32.xlu0 %v3282, 32
    %v3442 = vpop.permute.xlu0 %3441
    %3443 = vrot.lane.b32.xlu0 %v3283, 32
    %v3444 = vpop.permute.xlu0 %3443
    %3445 = vrot.lane.b32.xlu0 %v3284, 32
    %v3446 = vpop.permute.xlu0 %3445
    %3447 = vrot.lane.b32.xlu0 %v3285, 32
    %v3448 = vpop.permute.xlu0 %3447
    %3457 = vrot.lane.b32.xlu0 %v3315, 64
    %v3458 = vpop.permute.xlu0 %3457
    %3459 = vrot.lane.b32.xlu0 %v3316, 64
    %v3460 = vpop.permute.xlu0 %3459
    %3461 = vrot.lane.b32.xlu0 %v3317, 64
    %v3462 = vpop.permute.xlu0 %3461
    %3463 = vrot.lane.b32.xlu0 %v3318, 64
    %v3464 = vpop.permute.xlu0 %3463
    %3473 = vrot.lane.b32.xlu0 %v3348, 96
    %v3474 = vpop.permute.xlu0 %3473
    %3475 = vrot.lane.b32.xlu0 %v3349, 96
    %v3476 = vpop.permute.xlu0 %3475
    %3477 = vrot.lane.b32.xlu0 %v3350, 96
    %v3478 = vpop.permute.xlu0 %3477
    %3479 = vrot.lane.b32.xlu0 %v3351, 96
    %v3480 = vpop.permute.xlu0 %3479
    %3489 = vrot.lane.b32.xlu0 %v3381, 32
    %v3490 = vpop.permute.xlu0 %3489
    %3491 = vrot.lane.b32.xlu0 %v3382, 32
    %v3492 = vpop.permute.xlu0 %3491
    %3493 = vrot.lane.b32.xlu0 %v3383, 32
    %v3494 = vpop.permute.xlu0 %3493
    %3495 = vrot.lane.b32.xlu0 %v3384, 32
    %v3496 = vpop.permute.xlu0 %3495
    %3505 = vrot.lane.b32.xlu0 %v3409, 64
    %v3506 = vpop.permute.xlu0 %3505
    %3507 = vrot.lane.b32.xlu0 %v3410, 64
    %v3508 = vpop.permute.xlu0 %3507
    %3509 = vrot.lane.b32.xlu0 %v3411, 64
    %v3510 = vpop.permute.xlu0 %3509
    %3511 = vrot.lane.b32.xlu0 %v3412, 64
    %v3512 = vpop.permute.xlu0 %3511
    %3521 = vrot.lane.b32.xlu0 %v3421, 96
    %v3522 = vpop.permute.xlu0 %3521
    %3523 = vrot.lane.b32.xlu0 %v3422, 96
    %v3524 = vpop.permute.xlu0 %3523
    %3525 = vrot.lane.b32.xlu0 %v3423, 96
    %v3526 = vpop.permute.xlu0 %3525
    %3527 = vrot.lane.b32.xlu0 %v3424, 96
    %v3528 = vpop.permute.xlu0 %3527
    %v3533 = vsel %vm550, %v3253, %v3442
    %v3534 = vsel %vm550, %v3254, %v3444
    %v3535 = vsel %vm550, %v3255, %v3446
    %v3536 = vsel %vm550, %v3256, %v3448
    %v3537 = vsel %vm240, %v3533, %v3458
    %v3538 = vsel %vm240, %v3534, %v3460
    %v3539 = vsel %vm240, %v3535, %v3462
    %v3540 = vsel %vm240, %v3536, %v3464
    %vm3541 = vcmask 785408
    %v3542 = vsel %vm3541, %v3537, %v3474
    %v3543 = vsel %vm3541, %v3538, %v3476
    %v3544 = vsel %vm3541, %v3539, %v3478
    %v3545 = vsel %vm3541, %v3540, %v3480
    %v3546 = vsel %vm550, %v3360, %v3490
    %v3547 = vsel %vm550, %v3361, %v3492
    %v3548 = vsel %vm550, %v3362, %v3494
    %v3549 = vsel %vm550, %v3363, %v3496
    %v3550 = vsel %vm240, %v3546, %v3506
    %v3551 = vsel %vm240, %v3547, %v3508
    %v3552 = vsel %vm240, %v3548, %v3510
    %v3553 = vsel %vm240, %v3549, %v3512
    %v3554 = vsel %vm3541, %v3550, %v3522
    %v3555 = vsel %vm3541, %v3551, %v3524
    %v3556 = vsel %vm3541, %v3552, %v3526
    %v3557 = vsel %vm3541, %v3553, %v3528
    %v3558 = vld [vmem:[%s63] sm:$0xff]
    %v3559 = vld [vmem:[%s63 + $0x8] sm:$0xff]
    %v3560 = vld [vmem:[%s63 + $0x10] sm:$0xff]
    %v3561 = vld [vmem:[%s63 + $0x18] sm:$0xff]
    %v3562 = vld [vmem:[%s63 + $0x20] sm:$0xff]
    %v3563 = vld [vmem:[%s63 + $0x28] sm:$0xff]
    %v3564 = vld [vmem:[%s63 + $0x30] sm:$0xff]
    %v3565 = vld [vmem:[%s63 + $0x38] sm:$0xff]
    %v3566 = vld [vmem:[%s63 + $0x40] sm:$0xff]
    %v3567 = vld [vmem:[%s63 + $0x48] sm:$0xff]
    %v3568 = vld [vmem:[%s63 + $0x50] sm:$0xff]
    %v3569 = vld [vmem:[%s63 + $0x58] sm:$0xff]
    %v3570 = vld [vmem:[%s63 + $0x60] sm:$0xff]
    %v3571 = vld [vmem:[%s63 + $0x68] sm:$0xff]
    %v3572 = vld [vmem:[%s63 + $0x70] sm:$0xff]
    %v3573 = vld [vmem:[%s63 + $0x78] sm:$0xff]
    %v3574 = vld [vmem:[%s63 + $0x80] sm:$0xff]
    %v3575 = vld [vmem:[%s63 + $0x88] sm:$0xff]
    %v3576 = vld [vmem:[%s63 + $0x90] sm:$0xff]
    %v3577 = vld [vmem:[%s63 + $0x98] sm:$0xff]
    %v3578 = vld [vmem:[%s63 + $0xa0] sm:$0xff]
    %v3579 = vld [vmem:[%s63 + $0xa8] sm:$0xff]
    %v3580 = vld [vmem:[%s63 + $0xb0] sm:$0xff]
    %v3581 = vld [vmem:[%s63 + $0xb8] sm:$0xff]
    %v3582 = vld [vmem:[%s63 + $0xc0] sm:$0xff]
    %v3583 = vld [vmem:[%s63 + $0xc8] sm:$0xff]
    %v3584 = vld [vmem:[%s63 + $0xd0] sm:$0xff]
    %v3585 = vld [vmem:[%s63 + $0xd8] sm:$0xff]
    %v3586 = vld [vmem:[%s63 + $0xe0] sm:$0xff]
    %v3587 = vld [vmem:[%s63 + $0xe8] sm:$0xff]
    %v3588 = vld [vmem:[%s63 + $0xf0] sm:$0xff]
    %v3589 = vld [vmem:[%s63 + $0xf8] sm:$0xff]
    %v3590 = vld [vmem:[%s63 + $0x100] sm:$0xff]
    %v3591 = vld [vmem:[%s63 + $0x108] sm:$0xff]
    %v3592 = vld [vmem:[%s63 + $0x110] sm:$0xff]
    %v3593 = vld [vmem:[%s63 + $0x118] sm:$0xff]
    %v3594 = vpack.c.bf16 %v3543, %v3542
    %v3595 = vpack.c.bf16 %v3555, %v3554
    %v3596 = vpack.c.bf16 %v3434, %v3433
    %v3597 = vpack.c.bf16 %v3545, %v3544
    %v3598 = vpack.c.bf16 %v3557, %v3556
    %v3599 = vpack.c.bf16 %v3436, %v3435
    %v3600 = vpack.c.bf16 %v3559, %v3558
    %v3601 = vpack.c.bf16 %v3561, %v3560
    %v3602 = vpack.c.bf16 %v3563, %v3562
    %v3603 = vpack.c.bf16 %v3565, %v3564
    %v3604 = vpack.c.bf16 %v3567, %v3566
    %v3605 = vpack.c.bf16 %v3569, %v3568
    %v3606 = vpack.c.bf16 %v3571, %v3570
    %v3607 = vpack.c.bf16 %v3573, %v3572
    %v3608 = vpack.c.bf16 %v3575, %v3574
    %v3609 = vpack.c.bf16 %v3577, %v3576
    %v3610 = vpack.c.bf16 %v3579, %v3578
    %v3611 = vpack.c.bf16 %v3581, %v3580
    %v3612 = vpack.c.bf16 %v3583, %v3582
    %v3613 = vpack.c.bf16 %v3585, %v3584
    %v3614 = vpack.c.bf16 %v3587, %v3586
    %v3615 = vpack.c.bf16 %v3589, %v3588
    %v3616 = vpack.c.bf16 %v3591, %v3590
    %v3617 = vpack.c.bf16 %v3593, %v3592
    %v3619 = vsel %vm550, %v3596, 0
    %v3622 = vsel %vm550, %v3599, 0
    %3624 = vmatprep.subr.bf16.mxu0 0
    %3625 = vmatpush1.bf16.msra.mxu0 %v3607
    %3626 = vmatprep.subr.bf16.mxu0 0
    %3627 = vmatpush1.bf16.msra.mxu0 %v3606
    %3628 = vmatprep.subr.bf16.mxu0 0
    %3629 = vmatpush1.bf16.msra.mxu0 %v3605
    %3630 = vmatprep.subr.bf16.mxu0 0
    %3631 = vmatpush1.bf16.msra.mxu0 %v3604
    %3632 = vmatprep.subr.bf16.mxu0 0
    %3633 = vmatpush1.bf16.msra.mxu0 %v3603
    %3634 = vmatprep.subr.bf16.mxu0 0
    %3635 = vmatpush1.bf16.msra.mxu0 %v3602
    %3636 = vmatprep.subr.bf16.mxu0 0
    %3637 = vmatpush1.bf16.msra.mxu0 %v3601
    %3638 = vmatprep.subr.bf16.mxu0 0
    %3639 = vmatpush1.bf16.msra.mxu0 %v3600
    %3640 = vmatprep.subr.bf16.mxu0 0
    %3641 = vmatpush2.bf16.msra.mxu0 %v3615
    %3642 = vmatprep.subr.bf16.mxu0 0
    %3643 = vmatpush2.bf16.msra.mxu0 %v3614
    %3644 = vmatprep.subr.bf16.mxu0 0
    %3645 = vmatpush2.bf16.msra.mxu0 %v3613
    %3646 = vmatprep.subr.bf16.mxu0 0
    %3647 = vmatpush2.bf16.msra.mxu0 %v3612
    %3648 = vmatprep.subr.bf16.mxu0 0
    %3649 = vmatpush2.bf16.msra.mxu0 %v3611
    %3650 = vmatprep.subr.bf16.mxu0 0
    %3651 = vmatpush2.bf16.msra.mxu0 %v3610
    %3652 = vmatprep.subr.bf16.mxu0 0
    %3653 = vmatpush2.bf16.msra.mxu0 %v3609
    %3654 = vmatprep.subr.bf16.mxu0 0
    %3655 = vmatpush2.bf16.msra.mxu0 %v3608
    %3656 = vmatprep.mubr.bf16.mxu0 %v3595
    %3657 = vmatmul.mubr.bf16.gmra.mxu0 %v3594
    %v3658 = vpop.f32.mrf.mxu0
    %v3659 = vadd.f32 0.0, %v3658
    %v3660 = vpop.f32.mrf.mxu0
    %v3661 = vpop.f32.mrf.mxu0
    %v3662 = vadd.f32 0.0, %v3661
    %v3663 = vpop.f32.mrf.mxu0
    %3664 = vmatprep.mubr.bf16.mxu0 %v3598
    %3665 = vmatmul.mubr.bf16.gmra.mxu0 %v3597
    %v3666 = vpop.f32.mrf.mxu0
    %v3667 = vadd.f32 0.0, %v3666
    %v3668 = vpop.f32.mrf.mxu0
    %v3669 = vpop.f32.mrf.mxu0
    %v3670 = vadd.f32 0.0, %v3669
    %v3671 = vpop.f32.mrf.mxu0
    %3672 = vdwg.mxu0
    %3673 = vmatprep.subr.bf16.mxu0 0
    %3674 = vmatpush1.bf16.msra.mxu0 0
    %3675 = vmatprep.subr.bf16.mxu0 0
    %3676 = vmatpush1.bf16.msra.mxu0 0
    %3677 = vmatprep.subr.bf16.mxu0 0
    %3678 = vmatpush1.bf16.msra.mxu0 0
    %3679 = vmatprep.subr.bf16.mxu0 0
    %3680 = vmatpush1.bf16.msra.mxu0 0
    %3681 = vmatprep.subr.bf16.mxu0 0
    %3682 = vmatpush1.bf16.msra.mxu0 0
    %3683 = vmatprep.subr.bf16.mxu0 0
    %3684 = vmatpush1.bf16.msra.mxu0 0
    %3685 = vmatprep.subr.bf16.mxu0 0
    %3686 = vmatpush1.bf16.msra.mxu0 %v3617
    %3687 = vmatprep.subr.bf16.mxu0 0
    %3688 = vmatpush1.bf16.msra.mxu0 %v3616
    %3689 = vmatprep.subr.bf16.mxu0 0
    %3690 = vmatpush2.bf16.msra.mxu0 0
    %3691 = vmatprep.subr.bf16.mxu0 0
    %3692 = vmatpush2.bf16.msra.mxu0 0
    %3693 = vmatprep.subr.bf16.mxu0 0
    %3694 = vmatpush2.bf16.msra.mxu0 0
    %3695 = vmatprep.subr.bf16.mxu0 0
    %3696 = vmatpush2.bf16.msra.mxu0 0
    %3697 = vmatprep.subr.bf16.mxu0 0
    %3698 = vmatpush2.bf16.msra.mxu0 0
    %3699 = vmatprep.subr.bf16.mxu0 0
    %3700 = vmatpush2.bf16.msra.mxu0 0
    %3701 = vmatprep.subr.bf16.mxu0 0
    %3702 = vmatpush2.bf16.msra.mxu0 0
    %3703 = vmatprep.subr.bf16.mxu0 0
    %3704 = vmatpush2.bf16.msra.mxu0 0
    %3705 = vmatprep.mubr.bf16.mxu0 0
    %3706 = vmatmul.mubr.bf16.gmra.mxu0 %v3619
    %v3707 = vpop.f32.mrf.mxu0
    %v3708 = vadd.f32 %v3659, %v3707
    %v3709 = vpop.f32.mrf.mxu0
    %v3710 = vpop.f32.mrf.mxu0
    %v3711 = vadd.f32 %v3662, %v3710
    %v3712 = vpop.f32.mrf.mxu0
    %3713 = vmatprep.mubr.bf16.mxu0 0
    %3714 = vmatmul.mubr.bf16.gmra.mxu0 %v3622
    %v3715 = vpop.f32.mrf.mxu0
    %v3716 = vadd.f32 %v3667, %v3715
    %v3717 = vpop.f32.mrf.mxu0
    %v3718 = vpop.f32.mrf.mxu0
    %v3719 = vadd.f32 %v3670, %v3718
    %v3720 = vpop.f32.mrf.mxu0
    %3721 = vdwg.mxu0
    %v3722 = vld [vmem:[%s65] sm:$0x1]
    %v3723 = vld [vmem:[%s67] sm:$0x1]
    %v3724 = vsel %vm550, %v3708, 0.0
    %3725 = vadd.xlane.f32.xlu0 %v3724
    %v3726 = vpop.xlane.xlu0 %3725
    %v3727 = vsel %vm550, %v3711, 0.0
    %3728 = vadd.xlane.f32.xlu0 %v3727
    %v3729 = vpop.xlane.xlu0 %3728
    %v3730 = vsel %vm550, %v3716, 0.0
    %3731 = vadd.xlane.f32.xlu0 %v3730
    %v3732 = vpop.xlane.xlu0 %3731
    %v3733 = vsel %vm550, %v3719, 0.0
    %3734 = vadd.xlane.f32.xlu0 %v3733
    %v3735 = vpop.xlane.xlu0 %3734
    %v3736 = vmul.f32 %v3726, %v3135
    %v3737 = vmul.f32 %v3729, %v3135
    %v3738 = vmul.f32 %v3732, %v3135
    %v3739 = vmul.f32 %v3735, %v3135
    %v3740 = vsub.f32 %v3708, %v3736
    %v3741 = vsub.f32 %v3711, %v3737
    %v3742 = vsub.f32 %v3716, %v3738
    %v3743 = vsub.f32 %v3719, %v3739
    %v3744 = vmul.f32 %v3740, %v3740
    %v3745 = vmul.f32 %v3741, %v3741
    %v3746 = vmul.f32 %v3742, %v3742
    %v3747 = vmul.f32 %v3743, %v3743
    %v3748 = vsel %vm550, %v3744, 0.0
    %3749 = vadd.xlane.f32.xlu0 %v3748
    %v3750 = vpop.xlane.xlu0 %3749
    %v3751 = vsel %vm550, %v3745, 0.0
    %3752 = vadd.xlane.f32.xlu0 %v3751
    %v3753 = vpop.xlane.xlu0 %3752
    %v3754 = vsel %vm550, %v3746, 0.0
    %3755 = vadd.xlane.f32.xlu0 %v3754
    %v3756 = vpop.xlane.xlu0 %3755
    %v3757 = vsel %vm550, %v3747, 0.0
    %3758 = vadd.xlane.f32.xlu0 %v3757
    %v3759 = vpop.xlane.xlu0 %3758
    %v3760 = vmul.f32 %v3750, %v3135
    %v3761 = vmul.f32 %v3753, %v3135
    %v3762 = vmul.f32 %v3756, %v3135
    %v3763 = vmul.f32 %v3759, %v3135
    %v3764 = vadd.f32 %v3760, 1e-06
    %v3765 = vadd.f32 %v3761, 1e-06
    %v3766 = vadd.f32 %v3762, 1e-06
    %v3767 = vadd.f32 %v3763, 1e-06
    %v3768 = vrsqrt.pop %v3764
    %v3769 = vrsqrt.pop %v3765
    %v3770 = vrsqrt.pop %v3766
    %v3771 = vrsqrt.pop %v3767
    %v3772 = vmul.f32 %v3740, %v3768
    %v3773 = vmul.f32 %v3741, %v3769
    %v3774 = vmul.f32 %v3742, %v3770
    %v3775 = vmul.f32 %v3743, %v3771
    %v3777 = vlaneseq
    %v3778 = vshrl.u32 %v3777, 7
    %v3779 = vsub.s32 0, %v3778
    %v3780 = vrot.slane %v3722, %v3779
    %v3782 = vmul.f32 %v3772, %v3780
    %v3783 = vmul.f32 %v3773, %v3780
    %v3784 = vmul.f32 %v3774, %v3780
    %v3785 = vmul.f32 %v3775, %v3780
    %v3787 = vlaneseq
    %v3788 = vshrl.u32 %v3787, 7
    %v3789 = vsub.s32 0, %v3788
    %v3790 = vrot.slane %v3723, %v3789
    %v3792 = vadd.f32 %v3782, %v3790
    %v3793 = vadd.f32 %v3783, %v3790
    %v3794 = vadd.f32 %v3784, %v3790
    %v3795 = vadd.f32 %v3785, %v3790
    %v3796 = vshra.s32 %v158, 4
    %vm3797 = vcmp.eq.s32.totalorder %v3796, %v153
    %v3798 = vsel %vm3797, 0.0625, 0.0
    %v3800 = vsel %vm550, %v3798, 0
    %3802 = vmatprep.subr.mxu0 0.0
    %3803 = vmatpush1.msra.mxu0 0.0
    %3804 = vmatprep.subr.mxu0 0.0
    %3805 = vmatpush1.msra.mxu0 0.0
    %3806 = vmatprep.subr.mxu0 0.0
    %3807 = vmatpush1.msra.mxu0 0.0
    %3808 = vmatprep.subr.mxu0 0.0
    %3809 = vmatpush1.msra.mxu0 0.0
    %3810 = vmatprep.subr.mxu0 0.0
    %3811 = vmatpush1.msra.mxu0 0.0
    %3812 = vmatprep.subr.mxu0 0.0
    %3813 = vmatpush1.msra.mxu0 0.0
    %3814 = vmatprep.subr.mxu0 0.0
    %3815 = vmatpush1.msra.mxu0 0.0
    %3816 = vmatprep.subr.mxu0 0.0
    %3817 = vmatpush1.msra.mxu0 0.0
    %3818 = vmatprep.subr.mxu0 0.0
    %3819 = vmatpush1.msra.mxu0 0.0
    %3820 = vmatprep.subr.mxu0 0.0
    %3821 = vmatpush1.msra.mxu0 0.0
    %3822 = vmatprep.subr.mxu0 0.0
    %3823 = vmatpush1.msra.mxu0 0.0
    %3824 = vmatprep.subr.mxu0 0.0
    %3825 = vmatpush1.msra.mxu0 0.0
    %3826 = vmatprep.subr.mxu0 0.0
    %3827 = vmatpush1.msra.mxu0 %v3795
    %3828 = vmatprep.subr.mxu0 0.0
    %3829 = vmatpush1.msra.mxu0 %v3794
    %3830 = vmatprep.subr.mxu0 0.0
    %3831 = vmatpush1.msra.mxu0 %v3793
    %3832 = vmatprep.subr.mxu0 0.0
    %3833 = vmatpush1.msra.mxu0 %v3792
    %3834 = vmatprep.subr.mxu0 0.0
    %3835 = vmatpush2.msra.mxu0 0.0
    %3836 = vmatprep.subr.mxu0 0.0
    %3837 = vmatpush2.msra.mxu0 0.0
    %3838 = vmatprep.subr.mxu0 0.0
    %3839 = vmatpush2.msra.mxu0 0.0
    %3840 = vmatprep.subr.mxu0 0.0
    %3841 = vmatpush2.msra.mxu0 0.0
    %3842 = vmatprep.subr.mxu0 0.0
    %3843 = vmatpush2.msra.mxu0 0.0
    %3844 = vmatprep.subr.mxu0 0.0
    %3845 = vmatpush2.msra.mxu0 0.0
    %3846 = vmatprep.subr.mxu0 0.0
    %3847 = vmatpush2.msra.mxu0 0.0
    %3848 = vmatprep.subr.mxu0 0.0
    %3849 = vmatpush2.msra.mxu0 0.0
    %3850 = vmatprep.subr.mxu0 0.0
    %3851 = vmatpush2.msra.mxu0 0.0
    %3852 = vmatprep.subr.mxu0 0.0
    %3853 = vmatpush2.msra.mxu0 0.0
    %3854 = vmatprep.subr.mxu0 0.0
    %3855 = vmatpush2.msra.mxu0 0.0
    %3856 = vmatprep.subr.mxu0 0.0
    %3857 = vmatpush2.msra.mxu0 0.0
    %3858 = vmatprep.subr.mxu0 0.0
    %3859 = vmatpush2.msra.mxu0 0.0
    %3860 = vmatprep.subr.mxu0 0.0
    %3861 = vmatpush2.msra.mxu0 0.0
    %3862 = vmatprep.subr.mxu0 0.0
    %3863 = vmatpush2.msra.mxu0 0.0
    %3864 = vmatprep.subr.mxu0 0.0
    %3865 = vmatpush2.msra.mxu0 0.0
    %3866 = vmatprep.mubr.f32.mxu0 0.0
    %3867 = vmatmul.mubr.f32.gmra.mxu0 %v3800
    %v3868 = vpop.f32.mrf.mxu0
    %v3869 = vadd.f32 0.0, %v3868
    %v3870 = vpop.f32.mrf.mxu0
    %3871 = vdwg.mxu0
    %v3872 = vld [vmem:[%s69] sm:$0xff]
    %v3873 = vld [vmem:[%s69 + $0x8] sm:$0xff]
    %v3874 = vld [vmem:[%s69 + $0x10] sm:$0xff]
    %v3875 = vld [vmem:[%s69 + $0x18] sm:$0xff]
    %v3876 = vld [vmem:[%s71] sm:$0x1]
    %v3878 = vlaneseq
    %v3879 = vshrl.u32 %v3878, 7
    %v3880 = vsub.s32 0, %v3879
    %v3881 = vrot.slane %v3876, %v3880
    %v3884 = vsel %vm550, %v3869, 0
    %3886 = vmatprep.subr.mxu0 0.0
    %3887 = vmatpush1.msra.mxu0 0.0
    %3888 = vmatprep.subr.mxu0 0.0
    %3889 = vmatpush1.msra.mxu0 0.0
    %3890 = vmatprep.subr.mxu0 0.0
    %3891 = vmatpush1.msra.mxu0 0.0
    %3892 = vmatprep.subr.mxu0 0.0
    %3893 = vmatpush1.msra.mxu0 0.0
    %3894 = vmatprep.subr.mxu0 0.0
    %3895 = vmatpush1.msra.mxu0 0.0
    %3896 = vmatprep.subr.mxu0 0.0
    %3897 = vmatpush1.msra.mxu0 0.0
    %3898 = vmatprep.subr.mxu0 0.0
    %3899 = vmatpush1.msra.mxu0 0.0
    %3900 = vmatprep.subr.mxu0 0.0
    %3901 = vmatpush1.msra.mxu0 0.0
    %3902 = vmatprep.subr.mxu0 0.0
    %3903 = vmatpush1.msra.mxu0 0.0
    %3904 = vmatprep.subr.mxu0 0.0
    %3905 = vmatpush1.msra.mxu0 0.0
    %3906 = vmatprep.subr.mxu0 0.0
    %3907 = vmatpush1.msra.mxu0 0.0
    %3908 = vmatprep.subr.mxu0 0.0
    %3909 = vmatpush1.msra.mxu0 0.0
    %3910 = vmatprep.subr.mxu0 0.0
    %3911 = vmatpush1.msra.mxu0 %v3875
    %3912 = vmatprep.subr.mxu0 0.0
    %3913 = vmatpush1.msra.mxu0 %v3874
    %3914 = vmatprep.subr.mxu0 0.0
    %3915 = vmatpush1.msra.mxu0 %v3873
    %3916 = vmatprep.subr.mxu0 0.0
    %3917 = vmatpush1.msra.mxu0 %v3872
    %3918 = vmatprep.subr.mxu0 0.0
    %3919 = vmatpush2.msra.mxu0 0.0
    %3920 = vmatprep.subr.mxu0 0.0
    %3921 = vmatpush2.msra.mxu0 0.0
    %3922 = vmatprep.subr.mxu0 0.0
    %3923 = vmatpush2.msra.mxu0 0.0
    %3924 = vmatprep.subr.mxu0 0.0
    %3925 = vmatpush2.msra.mxu0 0.0
    %3926 = vmatprep.subr.mxu0 0.0
    %3927 = vmatpush2.msra.mxu0 0.0
    %3928 = vmatprep.subr.mxu0 0.0
    %3929 = vmatpush2.msra.mxu0 0.0
    %3930 = vmatprep.subr.mxu0 0.0
    %3931 = vmatpush2.msra.mxu0 0.0
    %3932 = vmatprep.subr.mxu0 0.0
    %3933 = vmatpush2.msra.mxu0 0.0
    %3934 = vmatprep.subr.mxu0 0.0
    %3935 = vmatpush2.msra.mxu0 0.0
    %3936 = vmatprep.subr.mxu0 0.0
    %3937 = vmatpush2.msra.mxu0 0.0
    %3938 = vmatprep.subr.mxu0 0.0
    %3939 = vmatpush2.msra.mxu0 0.0
    %3940 = vmatprep.subr.mxu0 0.0
    %3941 = vmatpush2.msra.mxu0 0.0
    %3942 = vmatprep.subr.mxu0 0.0
    %3943 = vmatpush2.msra.mxu0 0.0
    %3944 = vmatprep.subr.mxu0 0.0
    %3945 = vmatpush2.msra.mxu0 0.0
    %3946 = vmatprep.subr.mxu0 0.0
    %3947 = vmatpush2.msra.mxu0 0.0
    %3948 = vmatprep.subr.mxu0 0.0
    %3949 = vmatpush2.msra.mxu0 0.0
    %3950 = vmatprep.mubr.f32.mxu0 0.0
    %3951 = vmatmul.mubr.f32.gmra.mxu0 %v3884
    %v3952 = vpop.f32.mrf.mxu0
    %v3953 = vadd.f32 %v3881, %v3952
    %v3954 = vpop.f32.mrf.mxu0
    %3955 = vdwg.mxu0
    %vm3956 = vcmask 123904
    %3957 = vst.msk [vmem:[#allocation2] sm:$0x3] %vm3956, %v3953
    // Predicated region
    $region146: #{forward.1} parent=1 // pred_check
      _
    $region147: #{forward.1} parent=1 // pred_check_branch
      %3959 = sbr.rel (0) target = $region149
    $region148: #{forward.1} parent=1 // pred_region
      %s3961 = ssub.s32 32, 32
      %3962 = vsyncadd [#allocation3], %s3961
      %s3964 = sshll.u32 [#allocation2], 4
      %s3965 = int_to_ptr.vmem [resolvable:$true] %s3964
      %3967 = dma.vmem_to_hbm [thread:$0]  %s3965, 32, %s73, [#allocation3]
    $region149: #{forward.1} parent=1 // pred_fallthru
      _
    // Predicated region
    $region150: #{forward.1} parent=1 // pred_check
      _
    $region151: #{forward.1} parent=1 // pred_check_branch
      %3969 = sbr.rel (0) target = $region153
    $region152: #{forward.1} parent=1 // pred_region
      %3970 = dma.done [#allocation3], 32
    $region153: #{forward.1} parent=1 // pred_fallthru
      _
    %3971 = vsyncpa [#allocation3], 1

</llo_original>
